<compile_context>
chip_gen: v6e
topology: v6e:2x2x1
jax: 0.10.0
libtpu: 0.0.40
codegen_flags: <defaults>
</compile_context>

<pallas_src>
import jax
import jax.numpy as jnp
from jax import lax
from jax.experimental import pallas as pl
from jax.experimental.pallas import tpu as pltpu


# --------------------------------------------------------------------------
# Fused TPGM projection (l2 mode), column-tiled, two-phase grid.
# One row of the slab = one parameter tensor, so the per-row reduction is
# exactly torch.norm(t) of that tensor.
#   t         = new - anchor
#   norms     = ||t||_2 per parameter (row)
#   init:       constraint = norms / 2          (norms.min() of a scalar)
#   constraint = hardtanh(constraint, 1e-8, norms)  (norms.max() of a scalar)
#   ratio     = hardtanh(constraint / (norms + 1e-8), 0, 1)
#   projected = anchor + t * ratio
# Grid = (phase, col_block): phase 0 accumulates sum-of-squares, phase 1
# computes ratio (at col 0) and writes the projected column blocks.
# --------------------------------------------------------------------------
def _make_tpgm_l2_tiled_kernel(init: bool):
    def kernel(new_ref, anc_ref, c_ref, proj_ref, c_out_ref, sumsq_ref, ratio_ref):
        phase = pl.program_id(0)
        col = pl.program_id(1)
        t = new_ref[...] - anc_ref[...]                       # (RP, col_tile)

        @pl.when(phase == 0)
        def _():
            @pl.when(col == 0)
            def _():
                sumsq_ref[...] = jnp.zeros_like(sumsq_ref)
            sumsq_ref[...] += jnp.sum(t * t, axis=1, keepdims=True)
            proj_ref[...] = new_ref[...]      # deterministic placeholder write
            c_out_ref[...] = c_ref[...]

        @pl.when(phase == 1)
        def _():
            @pl.when(col == 0)
            def _():
                sumsq = sumsq_ref[...]                         # (RP, 1)
                inv = lax.rsqrt(sumsq + 1e-30)                 # ~1/||t||, one EUP op
                norms = sumsq * inv                            # ||t|| (no 2nd sqrt)
                c = c_ref[...]
                if init:
                    c = norms * 0.5                            # norms.min()/2 (scalar norm)
                # NOTE: when norms < 1e-8 (zero drift) clip's min>max case returns
                # norms, matching torch.nn.functional.hardtanh's clamp order.
                c = jnp.clip(c, 1e-8, norms)
                ratio_ref[...] = jnp.clip(c * inv, 0.0, 1.0)   # Hardtanh(0, 1)
                c_out_ref[...] = c
            proj_ref[...] = anc_ref[...] + t * ratio_ref[...]
    return kernel


def tpgm_project_all_l2(new_params, anchor_params, constraints, *,
                        init=True, col_block=512):
    """Project all parameter tensors toward their anchors in one pallas_call."""
    flats_new = [p.reshape(-1).astype(jnp.float32) for p in new_params]
    flats_anc = [p.reshape(-1).astype(jnp.float32) for p in anchor_params]
    sizes = [int(f.shape[0]) for f in flats_new]
    n = len(sizes)
    CP = 128 * pl.cdiv(max(sizes), 128)            # lane-dense, 128-padded columns
    RP = 8 * pl.cdiv(n, 8)                         # sublane-padded rows
    col_tile = 128 * pl.cdiv(min(int(col_block), CP), 128)
    CPAD = col_tile * pl.cdiv(CP, col_tile)
    n_col = CPAD // col_tile

    def pack(flats):
        rows = [jnp.pad(f, (0, CPAD - f.shape[0])) for f in flats]
        slab = jnp.stack(rows, axis=0)                         # (n, CPAD)
        return jnp.pad(slab, ((0, RP - n), (0, 0)))            # (RP, CPAD)

    new_slab = pack(flats_new)
    anc_slab = pack(flats_anc)
    c_col = jnp.pad(
        jnp.stack([c.reshape(()).astype(jnp.float32) for c in constraints])[:, None],
        ((0, RP - n), (0, 0)))                                 # (RP, 1)

    proj_slab, c_out = pl.pallas_call(
        _make_tpgm_l2_tiled_kernel(init),
        grid=(2, n_col),
        in_specs=[pl.BlockSpec((RP, col_tile), lambda ph, c: (0, c)),
                  pl.BlockSpec((RP, col_tile), lambda ph, c: (0, c)),
                  pl.BlockSpec((RP, 1), lambda ph, c: (0, 0))],
        out_specs=(pl.BlockSpec((RP, col_tile), lambda ph, c: (0, c)),
                   pl.BlockSpec((RP, 1), lambda ph, c: (0, 0))),
        out_shape=(jax.ShapeDtypeStruct((RP, CPAD), jnp.float32),
                   jax.ShapeDtypeStruct((RP, 1), jnp.float32)),
        scratch_shapes=[pltpu.VMEM((RP, 1), jnp.float32),      # sum-of-squares acc
                        pltpu.VMEM((RP, 1), jnp.float32)],     # per-row ratio
        compiler_params=pltpu.CompilerParams(
            dimension_semantics=("arbitrary", "arbitrary")),
    )(new_slab, anc_slab, c_col)

    projected = [proj_slab[r, :sizes[r]].reshape(new_params[r].shape)
                 .astype(new_params[r].dtype) for r in range(n)]
    new_constraints = [c_out[r].reshape(1) for r in range(n)]
    return projected, new_constraints


# --------------------------------------------------------------------------
# Per-parameter kernel for the non-l2 ("mars") mode, row-tiled, two-phase:
# phase 0 reduces the global min/max of the per-row L1 norms (padded rows
# masked out), phase 1 projects each row block.
# --------------------------------------------------------------------------
def _make_tpgm_mars_kernel(init: bool, n_valid_rows: int, row_tile: int):
    def kernel(new_ref, anc_ref, c_ref, proj_ref, c_out_ref, min_ref, max_ref):
        phase = pl.program_id(0)
        rb = pl.program_id(1)
        t = new_ref[...] - anc_ref[...]                        # (row_tile, C)
        norms = jnp.sum(jnp.abs(t), axis=1, keepdims=True)     # (row_tile, 1) L1
        row_ids = rb * row_tile + lax.broadcasted_iota(jnp.int32, (row_tile, 1), 0)
        valid = row_ids < n_valid_rows

        @pl.when(phase == 0)
        def _():
            @pl.when(rb == 0)
            def _():
                min_ref[...] = jnp.full(min_ref.shape, jnp.inf, min_ref.dtype)
                max_ref[...] = jnp.full(max_ref.shape, -jnp.inf, max_ref.dtype)
            min_ref[...] = jnp.minimum(
                min_ref[...], jnp.min(jnp.where(valid, norms, jnp.inf), keepdims=True))
            max_ref[...] = jnp.maximum(
                max_ref[...], jnp.max(jnp.where(valid, norms, -jnp.inf), keepdims=True))
            proj_ref[...] = new_ref[...]       # deterministic placeholder write
            c_out_ref[...] = c_ref[...]

        @pl.when(phase == 1)
        def _():
            c = c_ref[...]                                     # (1, 1)
            if init:
                c = min_ref[...] * 0.5
            c = jnp.clip(c, 1e-8, max_ref[...])
            ratio = jnp.clip(c / (norms + 1e-8), 0.0, 1.0)     # (row_tile, 1)
            proj_ref[...] = anc_ref[...] + t * ratio

            @pl.when(rb == 0)
            def _():
                c_out_ref[...] = c
    return kernel


def _tpgm_project_mars(new_p, anchor_p, constraint, *, init=True, row_block=256):
    orig_shape = new_p.shape
    n2 = (new_p.reshape(orig_shape[0], -1) if new_p.ndim > 1
          else new_p.reshape(1, -1)).astype(jnp.float32)
    a2 = anchor_p.astype(jnp.float32).reshape(n2.shape)
    R, C = n2.shape
    row_tile = max(8, 8 * pl.cdiv(min(int(row_block), R), 8))
    RPAD = row_tile * pl.cdiv(R, row_tile)
    n_rb = RPAD // row_tile
    n2p = jnp.pad(n2, ((0, RPAD - R), (0, 0)))
    a2p = jnp.pad(a2, ((0, RPAD - R), (0, 0)))
    c2 = constraint.astype(jnp.float32).reshape(1, 1)

    proj, c_new = pl.pallas_call(
        _make_tpgm_mars_kernel(init, R, row_tile),
        grid=(2, n_rb),
        in_specs=[pl.BlockSpec((row_tile, C), lambda ph, r: (r, 0)),
                  pl.BlockSpec((row_tile, C), lambda ph, r: (r, 0)),
                  pl.BlockSpec((1, 1), lambda ph, r: (0, 0))],
        out_specs=(pl.BlockSpec((row_tile, C), lambda ph, r: (r, 0)),
                   pl.BlockSpec((1, 1), lambda ph, r: (0, 0))),
        out_shape=(jax.ShapeDtypeStruct((RPAD, C), jnp.float32),
                   jax.ShapeDtypeStruct((1, 1), jnp.float32)),
        scratch_shapes=[pltpu.VMEM((1, 1), jnp.float32),       # global min(L1)
                        pltpu.VMEM((1, 1), jnp.float32)],      # global max(L1)
        compiler_params=pltpu.CompilerParams(
            dimension_semantics=("arbitrary", "arbitrary")),
    )(n2p, a2p, c2)
    return proj[:R].reshape(orig_shape).astype(new_p.dtype), c_new.reshape(1)


# --------------------------------------------------------------------------
# Tiny CNN forward (the "new" model TPGM.forward runs after projection):
#   Conv2d(Cin->Cout, k=3, pad=1) -> ReLU -> global avg pool -> Linear(Cout->ncls)
# Grid over batch chunks of 8 images; per step: one big bf16 conv GEMM on the
# MXU, bias+ReLU on the VPU, sublane-only reshape + mean for GAP, FC head on
# the (CHUNK, CP) pooled block, lane-dense (CHUNK, MP) output block per step.
# No carried state across steps => batch axis is "parallel" (2 TCs on v7x).
# --------------------------------------------------------------------------
_CHUNK = 8  # images per grid step (= sublane count for the pooled/logits rows)


def _make_model_fwd_kernel(chunk: int, hw: int):
    def kernel(patch_ref, wc_ref, bc_ref, wf_ref, bf_ref, o_ref):
        # conv-as-GEMM: (chunk*HW, K) bf16 x (K, CP) bf16 -> f32 on the MXU.
        # K (=Cin*9) is NOT zero-padded in HBM; Mosaic pads it in-register.
        conv = jnp.dot(patch_ref[...], wc_ref[...],
                       preferred_element_type=jnp.float32)       # (chunk*HW, CP)
        conv = jnp.maximum(conv + bc_ref[...], 0.0)               # bias + ReLU
        cp = conv.shape[1]
        # GAP: sublane-only regroup, then mean over HW (no lane crossing).
        pooled = jnp.mean(conv.reshape(chunk, hw, cp), axis=1)    # (chunk, CP)
        logits = jnp.dot(pooled.astype(jnp.bfloat16), wf_ref[...],
                         preferred_element_type=jnp.float32) + bf_ref[...]
        o_ref[...] = logits                                       # (chunk, MP)
    return kernel


def tiny_cnn_forward(x, params):
    wc, bc, wf, bf = params          # (Cout,Cin,3,3), (Cout,), (ncls,Cout), (ncls,)
    N, Cin, H, W = x.shape
    Cout = wc.shape[0]
    n_cls = wf.shape[0]
    K = Cin * 9
    HW = H * W
    CP = 128 * pl.cdiv(Cout, 128)    # 128-padded conv channels (lane-dense)
    MP = 128 * pl.cdiv(n_cls, 128)   # 128-padded classes (lane-dense output)
    NB = pl.cdiv(N, _CHUNK)          # grid steps (chunks of images)
    NPB = NB * _CHUNK                # batch padded to a whole number of chunks

    # --- XLA layout glue: pad batch + spatial, im2col; operands cast to bf16.
    xpad = jnp.pad(x, ((0, NPB - N), (0, 0), (1, 1), (1, 1)))
    cols = [xpad[:, ci, i:i + H, j:j + W]
            for ci in range(Cin) for i in range(3) for j in range(3)]
    patches = jnp.stack(cols, axis=-1).reshape(NPB * HW, K).astype(jnp.bfloat16)
    wcol = jnp.pad(wc.reshape(Cout, K).T,
                   ((0, 0), (0, CP - Cout))).astype(jnp.bfloat16)             # (K, CP)
    bcol = jnp.pad(bc.reshape(1, Cout), ((0, 0), (0, CP - Cout))).astype(jnp.float32)
    wfp = jnp.pad(wf.astype(jnp.float32).T,
                  ((0, CP - Cout), (0, MP - n_cls))).astype(jnp.bfloat16)     # (CP, MP)
    bfp = jnp.pad(bf.reshape(1, n_cls), ((0, 0), (0, MP - n_cls))).astype(jnp.float32)

    out_pad = pl.pallas_call(
        _make_model_fwd_kernel(_CHUNK, HW),
        grid=(NB,),
        # Constant-index weight/bias blocks are fetched once (block index never
        # changes between consecutive steps), not re-DMA'd per step.
        in_specs=[pl.BlockSpec((_CHUNK * HW, K), lambda n: (n, 0)),   # patch chunk
                  pl.BlockSpec((K, CP), lambda n: (0, 0)),            # conv weight
                  pl.BlockSpec((1, CP), lambda n: (0, 0)),            # conv bias
                  pl.BlockSpec((CP, MP), lambda n: (0, 0)),           # FC weight
                  pl.BlockSpec((1, MP), lambda n: (0, 0))],           # FC bias
        out_specs=pl.BlockSpec((_CHUNK, MP), lambda n: (n, 0)),
        out_shape=jax.ShapeDtypeStruct((NPB, MP), jnp.float32),
        compiler_params=pltpu.CompilerParams(
            dimension_semantics=("parallel",)),   # no carried state across chunks
    )(patches, wcol, bcol, wfp, bfp)
    return out_pad[:N, :n_cls]


# --------------------------------------------------------------------------
# TPGM.forward (apply=False): project every parameter, then run the model.
# --------------------------------------------------------------------------
def tpgm_forward(new_params, anchor_params, constraints, x, *,
                 norm_mode="l2", init=True):
    if "l2" in norm_mode:
        projected, new_constraints = tpgm_project_all_l2(
            new_params, anchor_params, constraints, init=init)
    else:
        projected, new_constraints = [], []
        for npar, apar, c in zip(new_params, anchor_params, constraints):
            p, c_new = _tpgm_project_mars(npar, apar, c, init=init)
            projected.append(p)
            new_constraints.append(c_new)
    out = tiny_cnn_forward(x, projected)
    return out, projected, new_constraints


if __name__ == "__main__":
    key = jax.random.PRNGKey(0)
    ks = jax.random.split(key, 9)
    N, Cin, H, W, Cout, n_cls = 2, 4, 16, 16, 8, 10

    x = jax.random.normal(ks[0], (N, Cin, H, W), jnp.float32)

    # deterministic "pre-trained" (anchor) parameters
    anchor = [
        0.1 * jax.random.normal(ks[1], (Cout, Cin, 3, 3), jnp.float32),
        0.1 * jax.random.normal(ks[2], (Cout,), jnp.float32),
        0.1 * jax.random.normal(ks[3], (n_cls, Cout), jnp.float32),
        0.1 * jax.random.normal(ks[4], (n_cls,), jnp.float32),
    ]
    # "new" (fine-tuned) parameters = anchor + drift
    new = [a + 0.05 * jax.random.normal(k, a.shape, jnp.float32)
           for a, k in zip(anchor, ks[5:9])]
    # constraints start at 0 (torch.Tensor([0]) per parameter)
    constraints = [jnp.zeros((1,), jnp.float32) for _ in new]

    run = jax.jit(tpgm_forward, static_argnames=("norm_mode", "init"))
    out, proj, cons = run(new, anchor, constraints, x, norm_mode="l2", init=True)
    out = jax.block_until_ready(out)

    # ---------------- pure-JAX reference (l2 mode, init=True) ----------------
    def ref_project(npar, apar):
        t = npar - apar
        norm = jnp.sqrt(jnp.sum(t * t))
        c = jnp.clip(norm * 0.5, 1e-8, norm)
        ratio = jnp.clip(c / (norm + 1e-8), 0.0, 1.0)
        return apar + t * ratio, c

    pp, cc = zip(*[ref_project(n_, a_) for n_, a_ in zip(new, anchor)])

    # emulate the kernel's bf16 MXU operands (f32 accumulation) in the reference
    def bf(v):
        return v.astype(jnp.bfloat16).astype(jnp.float32)

    conv_ref = jax.lax.conv_general_dilated(
        bf(x), bf(pp[0]), window_strides=(1, 1), padding="SAME",
        dimension_numbers=("NCHW", "OIHW", "NCHW"))
    act_ref = jnp.maximum(conv_ref + pp[1][None, :, None, None], 0.0)
    pooled_ref = act_ref.mean(axis=(2, 3))
    out_ref = bf(pooled_ref) @ bf(pp[2]).T + pp[3]

    assert out.shape == (N, n_cls)
    for p_k, p_r, c_k, c_r in zip(proj, pp, cons, cc):
        assert p_k.shape == p_r.shape
        assert jnp.allclose(p_k, p_r, atol=5e-3, rtol=5e-3)
        assert jnp.allclose(c_k[0], c_r, atol=1e-5, rtol=1e-3)
    assert jnp.allclose(out, out_ref, atol=3e-2, rtol=3e-2)

    # extra coverage: multi-column-block path of the tiled l2 projection
    proj2, _ = tpgm_project_all_l2(new, anchor, constraints, init=True, col_block=128)
    for p_k, p_r in zip(proj2, pp):
        assert jnp.allclose(p_k, p_r, atol=5e-3, rtol=5e-3)

    # extra coverage: row-tiled mars (per-row L1) projection, multi-row-block
    p_mars, c_mars = _tpgm_project_mars(new[2], anchor[2], constraints[2],
                                        init=True, row_block=8)
    t2 = (new[2] - anchor[2]).reshape(n_cls, -1)
    norms2 = jnp.sum(jnp.abs(t2), axis=1, keepdims=True)
    c_ref2 = jnp.clip(jnp.min(norms2) / 2, 1e-8, jnp.max(norms2))
    ratio2 = jnp.clip(c_ref2 / (norms2 + 1e-8), 0.0, 1.0)
    mars_ref = (anchor[2].reshape(n_cls, -1) + t2 * ratio2).reshape(anchor[2].shape)
    assert jnp.allclose(p_mars, mars_ref, atol=1e-4, rtol=1e-4)
    assert jnp.allclose(c_mars[0], c_ref2, atol=1e-6, rtol=1e-5)

    print("KERNEL_OK")
</pallas_src>

<mosaic_0001>
module attributes {stable_mosaic.version = 11 : i64} {
  func.func @kernel(%arg0: i32, %arg1: i32, %arg2: memref<8x384xf32, #tpu.memory_space<vmem>>, %arg3: memref<8x384xf32, #tpu.memory_space<vmem>>, %arg4: memref<8x1xf32, #tpu.memory_space<vmem>>, %arg5: memref<8x384xf32, #tpu.memory_space<vmem>>, %arg6: memref<8x1xf32, #tpu.memory_space<vmem>>, %arg7: memref<8x1xf32, #tpu.memory_space<vmem>>, %arg8: memref<8x1xf32, #tpu.memory_space<vmem>>) attributes {dimension_semantics = [#tpu.dimension_semantics<arbitrary>, #tpu.dimension_semantics<arbitrary>], iteration_bounds = array<i64: 2, 1>, scalar_prefetch = 0 : i64, scratch_operands = 2 : i64, tpu.core_type = #tpu.core_type<tc>, window_params = [{transform_indices = @transform_0, window_bounds = array<i64: 8, 384>}, {transform_indices = @transform_1, window_bounds = array<i64: 8, 384>}, {pipeline_mode = #tpu.pipeline_mode<synchronous>, transform_indices = @transform_2, window_bounds = array<i64: 8, 1>}, {transform_indices = @transform_3, window_bounds = array<i64: 8, 384>}, {pipeline_mode = #tpu.pipeline_mode<synchronous>, transform_indices = @transform_4, window_bounds = array<i64: 8, 1>}]} {
    %c0 = arith.constant 0 : index
    %c0_0 = arith.constant 0 : index
    %0 = vector.load %arg2[%c0, %c0_0] : memref<8x384xf32, #tpu.memory_space<vmem>>, vector<8x384xf32>
    %c0_1 = arith.constant 0 : index
    %c0_2 = arith.constant 0 : index
    %1 = vector.load %arg3[%c0_1, %c0_2] : memref<8x384xf32, #tpu.memory_space<vmem>>, vector<8x384xf32>
    %2 = arith.subf %0, %1 : vector<8x384xf32>
    %c0_i32 = arith.constant 0 : i32
    %3 = arith.cmpi eq, %arg0, %c0_i32 : i32
    %4 = arith.extui %3 : i1 to i32
    %c0_i32_3 = arith.constant 0 : i32
    %5 = arith.cmpi ne, %4, %c0_i32_3 : i32
    scf.if %5 {
      %c0_i32_5 = arith.constant 0 : i32
      %9 = arith.cmpi eq, %arg1, %c0_i32_5 : i32
      %10 = arith.extui %9 : i1 to i32
      %c0_i32_6 = arith.constant 0 : i32
      %11 = arith.cmpi ne, %10, %c0_i32_6 : i32
      scf.if %11 {
        %cst_19 = arith.constant 0.000000e+00 : f32
        %22 = vector.broadcast %cst_19 : f32 to vector<8x1xf32>
        %c0_20 = arith.constant 0 : index
        %c0_21 = arith.constant 0 : index
        %23 = vector.load %arg7[%c0_20, %c0_21] : memref<8x1xf32, #tpu.memory_space<vmem>>, vector<8x1xf32>
        tpu.vector_store %arg7[%c0_20, %c0_21], %22 {strides = array<i32>} : memref<8x1xf32, #tpu.memory_space<vmem>>, vector<8x1xf32>,
      } else {
      }
      %c0_7 = arith.constant 0 : index
      %c0_8 = arith.constant 0 : index
      %12 = vector.load %arg7[%c0_7, %c0_8] : memref<8x1xf32, #tpu.memory_space<vmem>>, vector<8x1xf32>
      %13 = arith.mulf %2, %2 : vector<8x384xf32>
      %cst = arith.constant dense<0.000000e+00> : vector<8xf32>
      %14 = vector.multi_reduction <add>, %13, %cst [1] : vector<8x384xf32> to vector<8xf32>
      %15 = vector.shape_cast %14 : vector<8xf32> to vector<8x1xf32>
      %16 = arith.addf %12, %15 : vector<8x1xf32>
      %c0_9 = arith.constant 0 : index
      %c0_10 = arith.constant 0 : index
      %17 = vector.load %arg7[%c0_9, %c0_10] : memref<8x1xf32, #tpu.memory_space<vmem>>, vector<8x1xf32>
      tpu.vector_store %arg7[%c0_9, %c0_10], %16 {strides = array<i32>} : memref<8x1xf32, #tpu.memory_space<vmem>>, vector<8x1xf32>,
      %c0_11 = arith.constant 0 : index
      %c0_12 = arith.constant 0 : index
      %18 = vector.load %arg2[%c0_11, %c0_12] : memref<8x384xf32, #tpu.memory_space<vmem>>, vector<8x384xf32>
      %c0_13 = arith.constant 0 : index
      %c0_14 = arith.constant 0 : index
      %19 = vector.load %arg5[%c0_13, %c0_14] : memref<8x384xf32, #tpu.memory_space<vmem>>, vector<8x384xf32>
      tpu.vector_store %arg5[%c0_13, %c0_14], %18 {strides = array<i32>} : memref<8x384xf32, #tpu.memory_space<vmem>>, vector<8x384xf32>,
      %c0_15 = arith.constant 0 : index
      %c0_16 = arith.constant 0 : index
      %20 = vector.load %arg4[%c0_15, %c0_16] : memref<8x1xf32, #tpu.memory_space<vmem>>, vector<8x1xf32>
      %c0_17 = arith.constant 0 : index
      %c0_18 = arith.constant 0 : index
      %21 = vector.load %arg6[%c0_17, %c0_18] : memref<8x1xf32, #tpu.memory_space<vmem>>, vector<8x1xf32>
      tpu.vector_store %arg6[%c0_17, %c0_18], %20 {strides = array<i32>} : memref<8x1xf32, #tpu.memory_space<vmem>>, vector<8x1xf32>,
    } else {
    }
    %c1_i32 = arith.constant 1 : i32
    %6 = arith.cmpi eq, %arg0, %c1_i32 : i32
    %7 = arith.extui %6 : i1 to i32
    %c0_i32_4 = arith.constant 0 : i32
    %8 = arith.cmpi ne, %7, %c0_i32_4 : i32
    scf.if %8 {
      %c0_i32_5 = arith.constant 0 : i32
      %9 = arith.cmpi eq, %arg1, %c0_i32_5 : i32
      %10 = arith.extui %9 : i1 to i32
      %c0_i32_6 = arith.constant 0 : i32
      %11 = arith.cmpi ne, %10, %c0_i32_6 : i32
      scf.if %11 {
        %c0_13 = arith.constant 0 : index
        %c0_14 = arith.constant 0 : index
        %18 = vector.load %arg7[%c0_13, %c0_14] : memref<8x1xf32, #tpu.memory_space<vmem>>, vector<8x1xf32>
        %cst = arith.constant 1.000000e-30 : f32
        %19 = vector.broadcast %cst : f32 to vector<8x1xf32>
        %20 = arith.addf %18, %19 : vector<8x1xf32>
        %21 = math.rsqrt %20 : vector<8x1xf32>
        %22 = arith.mulf %18, %21 : vector<8x1xf32>
        %cst_15 = arith.constant 5.000000e-01 : f32
        %23 = vector.broadcast %cst_15 : f32 to vector<8x1xf32>
        %24 = arith.mulf %22, %23 : vector<8x1xf32>
        %cst_16 = arith.constant 9.99999993E-9 : f32
        %25 = vector.broadcast %cst_16 : f32 to vector<8x1xf32>
        %26 = arith.maximumf %25, %24 : vector<8x1xf32>
        %27 = arith.minimumf %22, %26 : vector<8x1xf32>
        %28 = arith.mulf %27, %21 : vector<8x1xf32>
        %cst_17 = arith.constant 0.000000e+00 : f32
        %cst_18 = arith.constant 1.000000e+00 : f32
        %29 = vector.broadcast %cst_17 : f32 to vector<8x1xf32>
        %30 = arith.maximumf %29, %28 : vector<8x1xf32>
        %31 = vector.broadcast %cst_18 : f32 to vector<8x1xf32>
        %32 = arith.minimumf %31, %30 : vector<8x1xf32>
        %c0_19 = arith.constant 0 : index
        %c0_20 = arith.constant 0 : index
        %33 = vector.load %arg8[%c0_19, %c0_20] : memref<8x1xf32, #tpu.memory_space<vmem>>, vector<8x1xf32>
        tpu.vector_store %arg8[%c0_19, %c0_20], %32 {strides = array<i32>} : memref<8x1xf32, #tpu.memory_space<vmem>>, vector<8x1xf32>,
        %c0_21 = arith.constant 0 : index
        %c0_22 = arith.constant 0 : index
        %34 = vector.load %arg6[%c0_21, %c0_22] : memref<8x1xf32, #tpu.memory_space<vmem>>, vector<8x1xf32>
        tpu.vector_store %arg6[%c0_21, %c0_22], %27 {strides = array<i32>} : memref<8x1xf32, #tpu.memory_space<vmem>>, vector<8x1xf32>,
      } else {
      }
      %c0_7 = arith.constant 0 : index
      %c0_8 = arith.constant 0 : index
      %12 = vector.load %arg3[%c0_7, %c0_8] : memref<8x384xf32, #tpu.memory_space<vmem>>, vector<8x384xf32>
      %c0_9 = arith.constant 0 : index
      %c0_10 = arith.constant 0 : index
      %13 = vector.load %arg8[%c0_9, %c0_10] : memref<8x1xf32, #tpu.memory_space<vmem>>, vector<8x1xf32>
      %14 = vector.broadcast %13 : vector<8x1xf32> to vector<8x384xf32>
      %15 = arith.mulf %2, %14 : vector<8x384xf32>
      %16 = arith.addf %12, %15 : vector<8x384xf32>
      %c0_11 = arith.constant 0 : index
      %c0_12 = arith.constant 0 : index
      %17 = vector.load %arg5[%c0_11, %c0_12] : memref<8x384xf32, #tpu.memory_space<vmem>>, vector<8x384xf32>
      tpu.vector_store %arg5[%c0_11, %c0_12], %16 {strides = array<i32>} : memref<8x384xf32, #tpu.memory_space<vmem>>, vector<8x384xf32>,
    } else {
    }
    return
  }
  func.func @transform_0(%arg0: i32, %arg1: i32) -> (i32, i32) {
    %c0_i32 = arith.constant 0 : i32
    %c0_i32_0 = arith.constant 0 : i32
    return %c0_i32, %arg1 : i32, i32
  }
  func.func @transform_1(%arg0: i32, %arg1: i32) -> (i32, i32) {
    %c0_i32 = arith.constant 0 : i32
    %c0_i32_0 = arith.constant 0 : i32
    return %c0_i32, %arg1 : i32, i32
  }
  func.func @transform_2(%arg0: i32, %arg1: i32) -> (i32, i32) {
    %c0_i32 = arith.constant 0 : i32
    %c0_i32_0 = arith.constant 0 : i32
    %c0_i32_1 = arith.constant 0 : i32
    return %c0_i32, %c0_i32_0 : i32, i32
  }
  func.func @transform_3(%arg0: i32, %arg1: i32) -> (i32, i32) {
    %c0_i32 = arith.constant 0 : i32
    %c0_i32_0 = arith.constant 0 : i32
    return %c0_i32, %arg1 : i32, i32
  }
  func.func @transform_4(%arg0: i32, %arg1: i32) -> (i32, i32) {
    %c0_i32 = arith.constant 0 : i32
    %c0_i32_0 = arith.constant 0 : i32
    %c0_i32_1 = arith.constant 0 : i32
    return %c0_i32, %c0_i32_0 : i32, i32
  }
}

module attributes {stable_mosaic.version = 11 : i64} {
  func.func @kernel(%arg0: i32, %arg1: memref<2048x36xbf16, #tpu.memory_space<vmem>>, %arg2: memref<36x128xbf16, #tpu.memory_space<vmem>>, %arg3: memref<1x128xf32, #tpu.memory_space<vmem>>, %arg4: memref<128x128xbf16, #tpu.memory_space<vmem>>, %arg5: memref<1x128xf32, #tpu.memory_space<vmem>>, %arg6: memref<8x128xf32, #tpu.memory_space<vmem>>) attributes {dimension_semantics = [#tpu.dimension_semantics<parallel>], iteration_bounds = array<i64: 1>, scalar_prefetch = 0 : i64, scratch_operands = 0 : i64, tpu.core_type = #tpu.core_type<tc>, window_params = [{transform_indices = @transform_0, window_bounds = array<i64: 2048, 36>}, {pipeline_mode = #tpu.pipeline_mode<synchronous>, transform_indices = @transform_1, window_bounds = array<i64: 36, 128>}, {pipeline_mode = #tpu.pipeline_mode<synchronous>, transform_indices = @transform_2, window_bounds = array<i64: 1, 128>}, {pipeline_mode = #tpu.pipeline_mode<synchronous>, transform_indices = @transform_3, window_bounds = array<i64: 128, 128>}, {pipeline_mode = #tpu.pipeline_mode<synchronous>, transform_indices = @transform_4, window_bounds = array<i64: 1, 128>}, {transform_indices = @transform_5, window_bounds = array<i64: 8, 128>}]} {
    %c0 = arith.constant 0 : index
    %c0_0 = arith.constant 0 : index
    %0 = vector.load %arg1[%c0, %c0_0] : memref<2048x36xbf16, #tpu.memory_space<vmem>>, vector<2048x36xbf16>
    %c0_1 = arith.constant 0 : index
    %c0_2 = arith.constant 0 : index
    %1 = vector.load %arg2[%c0_1, %c0_2] : memref<36x128xbf16, #tpu.memory_space<vmem>>, vector<36x128xbf16>
    %cst = arith.constant dense<0.000000e+00> : vector<2048x128xf32>
    %2 = tpu.matmul %0, %1, %cst {dimension_numbers = #tpu.dot_dimension_numbers<[1], [0], [0], [1], [0, 0, 1, 1], [], []>} : vector<2048x36xbf16>, vector<36x128xbf16>, vector<2048x128xf32> -> vector<2048x128xf32>
    %c0_3 = arith.constant 0 : index
    %c0_4 = arith.constant 0 : index
    %3 = vector.load %arg3[%c0_3, %c0_4] : memref<1x128xf32, #tpu.memory_space<vmem>>, vector<1x128xf32>
    %4 = vector.broadcast %3 : vector<1x128xf32> to vector<2048x128xf32>
    %5 = arith.addf %2, %4 : vector<2048x128xf32>
    %cst_5 = arith.constant 0.000000e+00 : f32
    %6 = vector.broadcast %cst_5 : f32 to vector<2048x128xf32>
    %7 = arith.maximumf %5, %6 : vector<2048x128xf32>
    %8 = vector.shape_cast %7 : vector<2048x128xf32> to vector<8x256x128xf32>
    %cst_6 = arith.constant dense<0.000000e+00> : vector<8x128xf32>
    %9 = vector.multi_reduction <add>, %8, %cst_6 [1] : vector<8x256x128xf32> to vector<8x128xf32>
    %cst_7 = arith.constant 2.560000e+02 : f32
    %10 = vector.broadcast %cst_7 : f32 to vector<8x128xf32>
    %11 = arith.divf %9, %10 : vector<8x128xf32>
    %12 = arith.truncf %11 : vector<8x128xf32> to vector<8x128xbf16>
    %c0_8 = arith.constant 0 : index
    %c0_9 = arith.constant 0 : index
    %13 = vector.load %arg4[%c0_8, %c0_9] : memref<128x128xbf16, #tpu.memory_space<vmem>>, vector<128x128xbf16>
    %cst_10 = arith.constant dense<0.000000e+00> : vector<8x128xf32>
    %14 = tpu.matmul %12, %13, %cst_10 {dimension_numbers = #tpu.dot_dimension_numbers<[1], [0], [0], [1], [0, 0, 1, 1], [], []>} : vector<8x128xbf16>, vector<128x128xbf16>, vector<8x128xf32> -> vector<8x128xf32>
    %c0_11 = arith.constant 0 : index
    %c0_12 = arith.constant 0 : index
    %15 = vector.load %arg5[%c0_11, %c0_12] : memref<1x128xf32, #tpu.memory_space<vmem>>, vector<1x128xf32>
    %16 = vector.broadcast %15 : vector<1x128xf32> to vector<8x128xf32>
    %17 = arith.addf %14, %16 : vector<8x128xf32>
    %c0_13 = arith.constant 0 : index
    %c0_14 = arith.constant 0 : index
    %18 = vector.load %arg6[%c0_13, %c0_14] : memref<8x128xf32, #tpu.memory_space<vmem>>, vector<8x128xf32>
    tpu.vector_store %arg6[%c0_13, %c0_14], %17 {strides = array<i32>} : memref<8x128xf32, #tpu.memory_space<vmem>>, vector<8x128xf32>,
    return
  }
  func.func @transform_0(%arg0: i32) -> (i32, i32) {
    %c0_i32 = arith.constant 0 : i32
    %c0_i32_0 = arith.constant 0 : i32
    return %arg0, %c0_i32 : i32, i32
  }
  func.func @transform_1(%arg0: i32) -> (i32, i32) {
    %c0_i32 = arith.constant 0 : i32
    %c0_i32_0 = arith.constant 0 : i32
    %c0_i32_1 = arith.constant 0 : i32
    return %c0_i32, %c0_i32_0 : i32, i32
  }
  func.func @transform_2(%arg0: i32) -> (i32, i32) {
    %c0_i32 = arith.constant 0 : i32
    %c0_i32_0 = arith.constant 0 : i32
    %c0_i32_1 = arith.constant 0 : i32
    return %c0_i32, %c0_i32_0 : i32, i32
  }
  func.func @transform_3(%arg0: i32) -> (i32, i32) {
    %c0_i32 = arith.constant 0 : i32
    %c0_i32_0 = arith.constant 0 : i32
    %c0_i32_1 = arith.constant 0 : i32
    return %c0_i32, %c0_i32_0 : i32, i32
  }
  func.func @transform_4(%arg0: i32) -> (i32, i32) {
    %c0_i32 = arith.constant 0 : i32
    %c0_i32_0 = arith.constant 0 : i32
    %c0_i32_1 = arith.constant 0 : i32
    return %c0_i32, %c0_i32_0 : i32, i32
  }
  func.func @transform_5(%arg0: i32) -> (i32, i32) {
    %c0_i32 = arith.constant 0 : i32
    %c0_i32_0 = arith.constant 0 : i32
    return %arg0, %c0_i32 : i32, i32
  }
}

</mosaic_0001>

<llo_original>
// kernel: squeeze.47
$region0: #{squeeze.47}
  %s0 = inlined_call_operand.vmem [shape: f32[80], index: 0, kind: input, shape index: {}]
  %s1 = inlined_call_operand.vmem [shape: f32[10,8], index: 1, kind: output, shape index: {}]
  $region1: #{squeeze.47} parent=0
    #allocation0 [shape = 'u8[4096]{0}', space=vmem, size = 0x1000, scoped, tag = 'scoped mem for input reshape']
    %s3 = sshll.u32 1, 1
    %s4 = ssub.s32 %s3, 1
    %v5 = vld [vmem:[%s0] sm:%s4]
    %6 = vst [vmem:[#allocation0] sm:%s4] %v5
    %v7 = vld [vmem:[#allocation0] sm:$0x1]
    %vm8 = vcmask 64512
    %9 = vst.msk [vmem:[%s1] sm:$0x1] %vm8, %v7
    %v10 = vld [vmem:[#allocation0] sm:$0x1]
    %11 = vrot.lane.b32.xlu0 %v10, 120
    %v12 = vpop.permute.xlu0 %11
    %vm13 = vcmask 64512
    %s14 = scalar_lea.vmem %s1, 1
    %15 = vst.msk [vmem:[%s14] sm:$0x1] %vm13, %v12
    %v16 = vld [vmem:[#allocation0] sm:$0x1]
    %17 = vrot.lane.b32.xlu0 %v16, 112
    %v18 = vpop.permute.xlu0 %17
    %vm19 = vcmask 64512
    %s20 = scalar_lea.vmem %s1, 2
    %21 = vst.msk [vmem:[%s20] sm:$0x1] %vm19, %v18
    %v22 = vld [vmem:[#allocation0] sm:$0x1]
    %23 = vrot.lane.b32.xlu0 %v22, 104
    %v24 = vpop.permute.xlu0 %23
    %vm25 = vcmask 64512
    %s26 = scalar_lea.vmem %s1, 3
    %27 = vst.msk [vmem:[%s26] sm:$0x1] %vm25, %v24
    %v28 = vld [vmem:[#allocation0] sm:$0x1]
    %29 = vrot.lane.b32.xlu0 %v28, 96
    %v30 = vpop.permute.xlu0 %29
    %vm31 = vcmask 64512
    %s32 = scalar_lea.vmem %s1, 4
    %33 = vst.msk [vmem:[%s32] sm:$0x1] %vm31, %v30
    %v34 = vld [vmem:[#allocation0] sm:$0x1]
    %35 = vrot.lane.b32.xlu0 %v34, 88
    %v36 = vpop.permute.xlu0 %35
    %vm37 = vcmask 64512
    %s38 = scalar_lea.vmem %s1, 5
    %39 = vst.msk [vmem:[%s38] sm:$0x1] %vm37, %v36
    %v40 = vld [vmem:[#allocation0] sm:$0x1]
    %41 = vrot.lane.b32.xlu0 %v40, 80
    %v42 = vpop.permute.xlu0 %41
    %vm43 = vcmask 64512
    %s44 = scalar_lea.vmem %s1, 6
    %45 = vst.msk [vmem:[%s44] sm:$0x1] %vm43, %v42
    %v46 = vld [vmem:[#allocation0] sm:$0x1]
    %47 = vrot.lane.b32.xlu0 %v46, 72
    %v48 = vpop.permute.xlu0 %47
    %vm49 = vcmask 64512
    %s50 = scalar_lea.vmem %s1, 7
    %51 = vst.msk [vmem:[%s50] sm:$0x1] %vm49, %v48
    %v52 = vld [vmem:[#allocation0] sm:$0x1]
    %53 = vrot.lane.b32.xlu0 %v52, 64
    %v54 = vpop.permute.xlu0 %53
    %vm55 = vcmask 64512
    %s56 = scalar_lea.vmem %s1, 8
    %57 = vst.msk [vmem:[%s56] sm:$0x1] %vm55, %v54
    %v58 = vld [vmem:[#allocation0] sm:$0x1]
    %59 = vrot.lane.b32.xlu0 %v58, 56
    %v60 = vpop.permute.xlu0 %59
    %vm61 = vcmask 64512
    %s62 = scalar_lea.vmem %s1, 9
    %63 = vst.msk [vmem:[%s62] sm:$0x1] %vm61, %v60

// kernel: squeeze.0
$region0: #{squeeze.0}
  %s0 = inlined_call_operand.vmem [shape: bf16[288], index: 0, kind: input, shape index: {}]
  %s1 = inlined_call_operand.vmem [shape: bf16[8,36], index: 1, kind: output, shape index: {}]
  $region1: #{squeeze.0} parent=0
    #allocation0 [shape = 'u8[4096]{0}', space=vmem, size = 0x1000, scoped, tag = 'scoped mem for output reshape']
    #allocation1 [shape = 'u8[4096]{0}', space=vmem, size = 0x1000, scoped, tag = 'scoped mem for input reshape']
    %s3 = smul.u32 2, 2
    %s4 = sshll.u32 1, %s3
    %s5 = ssub.s32 %s4, 1
    %s6 = sshrl.u32 %s5, 1
    %s7 = sor.u32 %s5, %s6
    %s8 = sand.u32 %s7, 85
    %s9 = sshrl.u32 %s8, 1
    %s10 = sor.u32 %s8, %s9
    %s11 = sand.u32 51, %s10
    %s12 = sshrl.u32 %s11, 2
    %s13 = sor.u32 %s11, %s12
    %s14 = sand.u32 15, %s13
    %v15 = vld [vmem:[%s0] sm:%s14]
    %v16 = vunpack.c.l.bf16 %v15
    %v17 = vunpack.c.h.bf16 %v15
    %18 = vst [vmem:[#allocation1] sm:%s5] %v16
    %v19 = vld [vmem:[#allocation1] sm:$0x1]
    %vm20 = vcmask 293888
    %21 = vst.msk [vmem:[#allocation0] sm:$0x1] %vm20, %v19
    %s22 = scalar_lea.vmem [#allocation1], 1
    %v23 = vld [vmem:[%s22] sm:$0x1]
    %24 = vrot.lane.b32.xlu0 %v23, 112
    %v25 = vpop.permute.xlu0 %24
    %vm26 = vcmask 293888
    %s27 = scalar_lea.vmem [#allocation0], 4
    %28 = vst.msk [vmem:[%s27] sm:$0x1] %vm26, %v25
    %v29 = vld [vmem:[#allocation1] sm:$0x1]
    %30 = vrot.lane.b32.xlu0 %v29, 92
    %v31 = vpop.permute.xlu0 %30
    %vm32 = vcmask 293888
    %s33 = scalar_lea.vmem [#allocation0], 1
    %34 = vst.msk [vmem:[%s33] sm:$0x1] %vm32, %v31
    %s35 = scalar_lea.vmem [#allocation1], 1
    %v36 = vld [vmem:[%s35] sm:$0x1]
    %37 = vrot.lane.b32.xlu0 %v36, 76
    %v38 = vpop.permute.xlu0 %37
    %vm39 = vcmask 293888
    %s40 = scalar_lea.vmem [#allocation0], 5
    %41 = vst.msk [vmem:[%s40] sm:$0x1] %vm39, %v38
    %v42 = vld [vmem:[#allocation1] sm:$0x1]
    %43 = vrot.lane.b32.xlu0 %v42, 56
    %v44 = vpop.permute.xlu0 %43
    %vm45 = vcmask 293888
    %s46 = scalar_lea.vmem [#allocation0], 2
    %47 = vst.msk [vmem:[%s46] sm:$0x1] %vm45, %v44
    %s48 = scalar_lea.vmem [#allocation1], 1
    %v49 = vld [vmem:[%s48] sm:$0x1]
    %50 = vrot.lane.b32.xlu0 %v49, 40
    %v51 = vpop.permute.xlu0 %50
    %vm52 = vcmask 293888
    %s53 = scalar_lea.vmem [#allocation0], 6
    %54 = vst.msk [vmem:[%s53] sm:$0x1] %vm52, %v51
    %v55 = vld [vmem:[#allocation1] sm:$0x1]
    %s56 = scalar_lea.vmem [#allocation1], 1
    %v57 = vld [vmem:[%s56] sm:$0x1]
    %vm58 = vcmask 883712
    %v59 = vsel %vm58, %v57, %v55
    %60 = vrot.lane.b32.xlu0 %v59, 20
    %v61 = vpop.permute.xlu0 %60
    %vm62 = vcmask 162816
    %s63 = scalar_lea.vmem [#allocation0], 3
    %64 = vst.msk [vmem:[%s63] sm:$0x1] %vm62, %v61
    %vm65 = vcmask 294048
    %s66 = scalar_lea.vmem [#allocation0], 3
    %67 = vst.msk [vmem:[%s66] sm:$0x1] %vm65, %v61
    %s68 = scalar_lea.vmem [#allocation1], 1
    %v69 = vld [vmem:[%s68] sm:$0x1]
    %s70 = scalar_lea.vmem [#allocation1], 2
    %v71 = vld [vmem:[%s70] sm:$0x1]
    %vm72 = vcmask 1014784
    %v73 = vsel %vm72, %v71, %v69
    %74 = vrot.lane.b32.xlu0 %v73, 4
    %v75 = vpop.permute.xlu0 %74
    %vm76 = vcmask 31744
    %s77 = scalar_lea.vmem [#allocation0], 7
    %78 = vst.msk [vmem:[%s77] sm:$0x1] %vm76, %v75
    %vm79 = vcmask 293920
    %s80 = scalar_lea.vmem [#allocation0], 7
    %81 = vst.msk [vmem:[%s80] sm:$0x1] %vm79, %v75
    %s83 = smul.u32 4, 2
    %s84 = sshll.u32 1, %s83
    %s85 = ssub.s32 %s84, 1
    %s86 = sshrl.u32 %s83, 1
    %v87 = vld [vmem:[#allocation0] sm:%s85]
    %v88 = vpack.c.bf16 0.0, %v87
    %s89 = sshll.u32 1, %s86
    %s90 = ssub.s32 %s89, 1
    %91 = vst [vmem:[%s1] sm:%s90] %v88

// kernel: squeeze.45
$region0: #{squeeze.45}
  %s0 = inlined_call_operand.vmem [shape: f32[288], index: 0, kind: input, shape index: {}]
  %s1 = inlined_call_operand.vmem [shape: f32[8,4,3,3], index: 1, kind: output, shape index: {}]
  $region1: #{squeeze.45} parent=0
    #allocation0 [shape = 'u8[131072]{0}', space=vmem, size = 0x20000, scoped, tag = 'scoped mem for output reshape']
    #allocation1 [shape = 'u8[4096]{0}', space=vmem, size = 0x1000, scoped, tag = 'scoped mem for input reshape']
    %s3 = sshll.u32 1, 4
    %s4 = ssub.s32 %s3, 1
    %v5 = vld [vmem:[%s0] sm:%s4]
    %6 = vst [vmem:[#allocation1] sm:%s4] %v5
    %v7 = vld [vmem:[#allocation1] sm:$0x1]
    %vm8 = vcmask 23552
    %9 = vst.msk [vmem:[#allocation0] sm:$0x1] %vm8, %v7
    %s10 = scalar_lea.vmem [#allocation1], 1
    %v11 = vld [vmem:[%s10] sm:$0x1]
    %12 = vrot.lane.b32.xlu0 %v11, 127
    %v13 = vpop.permute.xlu0 %12
    %vm14 = vcmask 23552
    %s15 = scalar_lea.vmem [#allocation0], 113
    %16 = vst.msk [vmem:[%s15] sm:$0x1] %vm14, %v13
    %s17 = scalar_lea.vmem [#allocation1], 2
    %v18 = vld [vmem:[%s17] sm:$0x1]
    %19 = vrot.lane.b32.xlu0 %v18, 126
    %v20 = vpop.permute.xlu0 %19
    %vm21 = vcmask 23552
    %s22 = scalar_lea.vmem [#allocation0], 226
    %23 = vst.msk [vmem:[%s22] sm:$0x1] %vm21, %v20
    %v24 = vld [vmem:[#allocation1] sm:$0x1]
    %25 = vrot.lane.b32.xlu0 %v24, 125
    %v26 = vpop.permute.xlu0 %25
    %vm27 = vcmask 23552
    %s28 = scalar_lea.vmem [#allocation0], 1
    %29 = vst.msk [vmem:[%s28] sm:$0x1] %vm27, %v26
    %s30 = scalar_lea.vmem [#allocation1], 1
    %v31 = vld [vmem:[%s30] sm:$0x1]
    %32 = vrot.lane.b32.xlu0 %v31, 124
    %v33 = vpop.permute.xlu0 %32
    %vm34 = vcmask 23552
    %s35 = scalar_lea.vmem [#allocation0], 114
    %36 = vst.msk [vmem:[%s35] sm:$0x1] %vm34, %v33
    %s37 = scalar_lea.vmem [#allocation1], 2
    %v38 = vld [vmem:[%s37] sm:$0x1]
    %39 = vrot.lane.b32.xlu0 %v38, 123
    %v40 = vpop.permute.xlu0 %39
    %vm41 = vcmask 23552
    %s42 = scalar_lea.vmem [#allocation0], 232
    %43 = vst.msk [vmem:[%s42] sm:$0x1] %vm41, %v40
    %v44 = vld [vmem:[#allocation1] sm:$0x1]
    %45 = vrot.lane.b32.xlu0 %v44, 122
    %v46 = vpop.permute.xlu0 %45
    %vm47 = vcmask 23552
    %s48 = scalar_lea.vmem [#allocation0], 2
    %49 = vst.msk [vmem:[%s48] sm:$0x1] %vm47, %v46
    %s50 = scalar_lea.vmem [#allocation1], 1
    %v51 = vld [vmem:[%s50] sm:$0x1]
    %52 = vrot.lane.b32.xlu0 %v51, 121
    %v53 = vpop.permute.xlu0 %52
    %vm54 = vcmask 23552
    %s55 = scalar_lea.vmem [#allocation0], 120
    %56 = vst.msk [vmem:[%s55] sm:$0x1] %vm54, %v53
    %s57 = scalar_lea.vmem [#allocation1], 2
    %v58 = vld [vmem:[%s57] sm:$0x1]
    %59 = vrot.lane.b32.xlu0 %v58, 120
    %v60 = vpop.permute.xlu0 %59
    %vm61 = vcmask 23552
    %s62 = scalar_lea.vmem [#allocation0], 233
    %63 = vst.msk [vmem:[%s62] sm:$0x1] %vm61, %v60
    %v64 = vld [vmem:[#allocation1] sm:$0x1]
    %65 = vrot.lane.b32.xlu0 %v64, 119
    %v66 = vpop.permute.xlu0 %65
    %vm67 = vcmask 23552
    %s68 = scalar_lea.vmem [#allocation0], 8
    %69 = vst.msk [vmem:[%s68] sm:$0x1] %vm67, %v66
    %s70 = scalar_lea.vmem [#allocation1], 1
    %v71 = vld [vmem:[%s70] sm:$0x1]
    %72 = vrot.lane.b32.xlu0 %v71, 118
    %v73 = vpop.permute.xlu0 %72
    %vm74 = vcmask 23552
    %s75 = scalar_lea.vmem [#allocation0], 121
    %76 = vst.msk [vmem:[%s75] sm:$0x1] %vm74, %v73
    %s77 = scalar_lea.vmem [#allocation1], 2
    %v78 = vld [vmem:[%s77] sm:$0x1]
    %79 = vrot.lane.b32.xlu0 %v78, 117
    %v80 = vpop.permute.xlu0 %79
    %vm81 = vcmask 23552
    %s82 = scalar_lea.vmem [#allocation0], 234
    %83 = vst.msk [vmem:[%s82] sm:$0x1] %vm81, %v80
    %v84 = vld [vmem:[#allocation1] sm:$0x1]
    %85 = vrot.lane.b32.xlu0 %v84, 116
    %v86 = vpop.permute.xlu0 %85
    %vm87 = vcmask 23552
    %s88 = scalar_lea.vmem [#allocation0], 9
    %89 = vst.msk [vmem:[%s88] sm:$0x1] %vm87, %v86
    %s90 = scalar_lea.vmem [#allocation1], 1
    %v91 = vld [vmem:[%s90] sm:$0x1]
    %92 = vrot.lane.b32.xlu0 %v91, 115
    %v93 = vpop.permute.xlu0 %92
    %vm94 = vcmask 23552
    %s95 = scalar_lea.vmem [#allocation0], 122
    %96 = vst.msk [vmem:[%s95] sm:$0x1] %vm94, %v93
    %s97 = scalar_lea.vmem [#allocation1], 2
    %v98 = vld [vmem:[%s97] sm:$0x1]
    %99 = vrot.lane.b32.xlu0 %v98, 114
    %v100 = vpop.permute.xlu0 %99
    %vm101 = vcmask 23552
    %s102 = scalar_lea.vmem [#allocation0], 240
    %103 = vst.msk [vmem:[%s102] sm:$0x1] %vm101, %v100
    %v104 = vld [vmem:[#allocation1] sm:$0x1]
    %105 = vrot.lane.b32.xlu0 %v104, 113
    %v106 = vpop.permute.xlu0 %105
    %vm107 = vcmask 23552
    %s108 = scalar_lea.vmem [#allocation0], 10
    %109 = vst.msk [vmem:[%s108] sm:$0x1] %vm107, %v106
    %s110 = scalar_lea.vmem [#allocation1], 1
    %v111 = vld [vmem:[%s110] sm:$0x1]
    %112 = vrot.lane.b32.xlu0 %v111, 112
    %v113 = vpop.permute.xlu0 %112
    %vm114 = vcmask 23552
    %s115 = scalar_lea.vmem [#allocation0], 128
    %116 = vst.msk [vmem:[%s115] sm:$0x1] %vm114, %v113
    %s117 = scalar_lea.vmem [#allocation1], 2
    %v118 = vld [vmem:[%s117] sm:$0x1]
    %119 = vrot.lane.b32.xlu0 %v118, 111
    %v120 = vpop.permute.xlu0 %119
    %vm121 = vcmask 23552
    %s122 = scalar_lea.vmem [#allocation0], 241
    %123 = vst.msk [vmem:[%s122] sm:$0x1] %vm121, %v120
    %v124 = vld [vmem:[#allocation1] sm:$0x1]
    %125 = vrot.lane.b32.xlu0 %v124, 110
    %v126 = vpop.permute.xlu0 %125
    %vm127 = vcmask 23552
    %s128 = scalar_lea.vmem [#allocation0], 16
    %129 = vst.msk [vmem:[%s128] sm:$0x1] %vm127, %v126
    %s130 = scalar_lea.vmem [#allocation1], 1
    %v131 = vld [vmem:[%s130] sm:$0x1]
    %132 = vrot.lane.b32.xlu0 %v131, 109
    %v133 = vpop.permute.xlu0 %132
    %vm134 = vcmask 23552
    %s135 = scalar_lea.vmem [#allocation0], 129
    %136 = vst.msk [vmem:[%s135] sm:$0x1] %vm134, %v133
    %s137 = scalar_lea.vmem [#allocation1], 2
    %v138 = vld [vmem:[%s137] sm:$0x1]
    %139 = vrot.lane.b32.xlu0 %v138, 108
    %v140 = vpop.permute.xlu0 %139
    %vm141 = vcmask 23552
    %s142 = scalar_lea.vmem [#allocation0], 242
    %143 = vst.msk [vmem:[%s142] sm:$0x1] %vm141, %v140
    %v144 = vld [vmem:[#allocation1] sm:$0x1]
    %145 = vrot.lane.b32.xlu0 %v144, 107
    %v146 = vpop.permute.xlu0 %145
    %vm147 = vcmask 23552
    %s148 = scalar_lea.vmem [#allocation0], 17
    %149 = vst.msk [vmem:[%s148] sm:$0x1] %vm147, %v146
    %s150 = scalar_lea.vmem [#allocation1], 1
    %v151 = vld [vmem:[%s150] sm:$0x1]
    %152 = vrot.lane.b32.xlu0 %v151, 106
    %v153 = vpop.permute.xlu0 %152
    %vm154 = vcmask 23552
    %s155 = scalar_lea.vmem [#allocation0], 130
    %156 = vst.msk [vmem:[%s155] sm:$0x1] %vm154, %v153
    %s157 = scalar_lea.vmem [#allocation1], 2
    %v158 = vld [vmem:[%s157] sm:$0x1]
    %159 = vrot.lane.b32.xlu0 %v158, 105
    %v160 = vpop.permute.xlu0 %159
    %vm161 = vcmask 23552
    %s162 = scalar_lea.vmem [#allocation0], 248
    %163 = vst.msk [vmem:[%s162] sm:$0x1] %vm161, %v160
    %v164 = vld [vmem:[#allocation1] sm:$0x1]
    %165 = vrot.lane.b32.xlu0 %v164, 104
    %v166 = vpop.permute.xlu0 %165
    %vm167 = vcmask 23552
    %s168 = scalar_lea.vmem [#allocation0], 18
    %169 = vst.msk [vmem:[%s168] sm:$0x1] %vm167, %v166
    %s170 = scalar_lea.vmem [#allocation1], 1
    %v171 = vld [vmem:[%s170] sm:$0x1]
    %172 = vrot.lane.b32.xlu0 %v171, 103
    %v173 = vpop.permute.xlu0 %172
    %vm174 = vcmask 23552
    %s175 = scalar_lea.vmem [#allocation0], 136
    %176 = vst.msk [vmem:[%s175] sm:$0x1] %vm174, %v173
    %s177 = scalar_lea.vmem [#allocation1], 2
    %v178 = vld [vmem:[%s177] sm:$0x1]
    %179 = vrot.lane.b32.xlu0 %v178, 102
    %v180 = vpop.permute.xlu0 %179
    %vm181 = vcmask 23552
    %s182 = scalar_lea.vmem [#allocation0], 249
    %183 = vst.msk [vmem:[%s182] sm:$0x1] %vm181, %v180
    %v184 = vld [vmem:[#allocation1] sm:$0x1]
    %185 = vrot.lane.b32.xlu0 %v184, 101
    %v186 = vpop.permute.xlu0 %185
    %vm187 = vcmask 23552
    %s188 = scalar_lea.vmem [#allocation0], 24
    %189 = vst.msk [vmem:[%s188] sm:$0x1] %vm187, %v186
    %s190 = scalar_lea.vmem [#allocation1], 1
    %v191 = vld [vmem:[%s190] sm:$0x1]
    %192 = vrot.lane.b32.xlu0 %v191, 100
    %v193 = vpop.permute.xlu0 %192
    %vm194 = vcmask 23552
    %s195 = scalar_lea.vmem [#allocation0], 137
    %196 = vst.msk [vmem:[%s195] sm:$0x1] %vm194, %v193
    %s197 = scalar_lea.vmem [#allocation1], 2
    %v198 = vld [vmem:[%s197] sm:$0x1]
    %199 = vrot.lane.b32.xlu0 %v198, 99
    %v200 = vpop.permute.xlu0 %199
    %vm201 = vcmask 23552
    %s202 = scalar_lea.vmem [#allocation0], 250
    %203 = vst.msk [vmem:[%s202] sm:$0x1] %vm201, %v200
    %v204 = vld [vmem:[#allocation1] sm:$0x1]
    %205 = vrot.lane.b32.xlu0 %v204, 98
    %v206 = vpop.permute.xlu0 %205
    %vm207 = vcmask 23552
    %s208 = scalar_lea.vmem [#allocation0], 25
    %209 = vst.msk [vmem:[%s208] sm:$0x1] %vm207, %v206
    %s210 = scalar_lea.vmem [#allocation1], 1
    %v211 = vld [vmem:[%s210] sm:$0x1]
    %212 = vrot.lane.b32.xlu0 %v211, 97
    %v213 = vpop.permute.xlu0 %212
    %vm214 = vcmask 23552
    %s215 = scalar_lea.vmem [#allocation0], 138
    %216 = vst.msk [vmem:[%s215] sm:$0x1] %vm214, %v213
    %v217 = vld [vmem:[#allocation1] sm:$0x1]
    %218 = vrot.lane.b32.xlu0 %v217, 95
    %v219 = vpop.permute.xlu0 %218
    %vm220 = vcmask 23552
    %s221 = scalar_lea.vmem [#allocation0], 26
    %222 = vst.msk [vmem:[%s221] sm:$0x1] %vm220, %v219
    %s223 = scalar_lea.vmem [#allocation1], 1
    %v224 = vld [vmem:[%s223] sm:$0x1]
    %225 = vrot.lane.b32.xlu0 %v224, 94
    %v226 = vpop.permute.xlu0 %225
    %vm227 = vcmask 23552
    %s228 = scalar_lea.vmem [#allocation0], 144
    %229 = vst.msk [vmem:[%s228] sm:$0x1] %vm227, %v226
    %v230 = vld [vmem:[#allocation1] sm:$0x1]
    %231 = vrot.lane.b32.xlu0 %v230, 92
    %v232 = vpop.permute.xlu0 %231
    %vm233 = vcmask 23552
    %s234 = scalar_lea.vmem [#allocation0], 32
    %235 = vst.msk [vmem:[%s234] sm:$0x1] %vm233, %v232
    %s236 = scalar_lea.vmem [#allocation1], 1
    %v237 = vld [vmem:[%s236] sm:$0x1]
    %238 = vrot.lane.b32.xlu0 %v237, 91
    %v239 = vpop.permute.xlu0 %238
    %vm240 = vcmask 23552
    %s241 = scalar_lea.vmem [#allocation0], 145
    %242 = vst.msk [vmem:[%s241] sm:$0x1] %vm240, %v239
    %v243 = vld [vmem:[#allocation1] sm:$0x1]
    %244 = vrot.lane.b32.xlu0 %v243, 89
    %v245 = vpop.permute.xlu0 %244
    %vm246 = vcmask 23552
    %s247 = scalar_lea.vmem [#allocation0], 33
    %248 = vst.msk [vmem:[%s247] sm:$0x1] %vm246, %v245
    %s249 = scalar_lea.vmem [#allocation1], 1
    %v250 = vld [vmem:[%s249] sm:$0x1]
    %251 = vrot.lane.b32.xlu0 %v250, 88
    %v252 = vpop.permute.xlu0 %251
    %vm253 = vcmask 23552
    %s254 = scalar_lea.vmem [#allocation0], 146
    %255 = vst.msk [vmem:[%s254] sm:$0x1] %vm253, %v252
    %v256 = vld [vmem:[#allocation1] sm:$0x1]
    %257 = vrot.lane.b32.xlu0 %v256, 86
    %v258 = vpop.permute.xlu0 %257
    %vm259 = vcmask 23552
    %s260 = scalar_lea.vmem [#allocation0], 34
    %261 = vst.msk [vmem:[%s260] sm:$0x1] %vm259, %v258
    %s262 = scalar_lea.vmem [#allocation1], 1
    %v263 = vld [vmem:[%s262] sm:$0x1]
    %264 = vrot.lane.b32.xlu0 %v263, 85
    %v265 = vpop.permute.xlu0 %264
    %vm266 = vcmask 23552
    %s267 = scalar_lea.vmem [#allocation0], 152
    %268 = vst.msk [vmem:[%s267] sm:$0x1] %vm266, %v265
    %v269 = vld [vmem:[#allocation1] sm:$0x1]
    %270 = vrot.lane.b32.xlu0 %v269, 83
    %v271 = vpop.permute.xlu0 %270
    %vm272 = vcmask 23552
    %s273 = scalar_lea.vmem [#allocation0], 40
    %274 = vst.msk [vmem:[%s273] sm:$0x1] %vm272, %v271
    %s275 = scalar_lea.vmem [#allocation1], 1
    %v276 = vld [vmem:[%s275] sm:$0x1]
    %277 = vrot.lane.b32.xlu0 %v276, 82
    %v278 = vpop.permute.xlu0 %277
    %vm279 = vcmask 23552
    %s280 = scalar_lea.vmem [#allocation0], 153
    %281 = vst.msk [vmem:[%s280] sm:$0x1] %vm279, %v278
    %v282 = vld [vmem:[#allocation1] sm:$0x1]
    %283 = vrot.lane.b32.xlu0 %v282, 80
    %v284 = vpop.permute.xlu0 %283
    %vm285 = vcmask 23552
    %s286 = scalar_lea.vmem [#allocation0], 41
    %287 = vst.msk [vmem:[%s286] sm:$0x1] %vm285, %v284
    %s288 = scalar_lea.vmem [#allocation1], 1
    %v289 = vld [vmem:[%s288] sm:$0x1]
    %290 = vrot.lane.b32.xlu0 %v289, 79
    %v291 = vpop.permute.xlu0 %290
    %vm292 = vcmask 23552
    %s293 = scalar_lea.vmem [#allocation0], 154
    %294 = vst.msk [vmem:[%s293] sm:$0x1] %vm292, %v291
    %v295 = vld [vmem:[#allocation1] sm:$0x1]
    %296 = vrot.lane.b32.xlu0 %v295, 77
    %v297 = vpop.permute.xlu0 %296
    %vm298 = vcmask 23552
    %s299 = scalar_lea.vmem [#allocation0], 42
    %300 = vst.msk [vmem:[%s299] sm:$0x1] %vm298, %v297
    %s301 = scalar_lea.vmem [#allocation1], 1
    %v302 = vld [vmem:[%s301] sm:$0x1]
    %303 = vrot.lane.b32.xlu0 %v302, 76
    %v304 = vpop.permute.xlu0 %303
    %vm305 = vcmask 23552
    %s306 = scalar_lea.vmem [#allocation0], 160
    %307 = vst.msk [vmem:[%s306] sm:$0x1] %vm305, %v304
    %v308 = vld [vmem:[#allocation1] sm:$0x1]
    %309 = vrot.lane.b32.xlu0 %v308, 74
    %v310 = vpop.permute.xlu0 %309
    %vm311 = vcmask 23552
    %s312 = scalar_lea.vmem [#allocation0], 48
    %313 = vst.msk [vmem:[%s312] sm:$0x1] %vm311, %v310
    %s314 = scalar_lea.vmem [#allocation1], 1
    %v315 = vld [vmem:[%s314] sm:$0x1]
    %316 = vrot.lane.b32.xlu0 %v315, 73
    %v317 = vpop.permute.xlu0 %316
    %vm318 = vcmask 23552
    %s319 = scalar_lea.vmem [#allocation0], 161
    %320 = vst.msk [vmem:[%s319] sm:$0x1] %vm318, %v317
    %v321 = vld [vmem:[#allocation1] sm:$0x1]
    %322 = vrot.lane.b32.xlu0 %v321, 71
    %v323 = vpop.permute.xlu0 %322
    %vm324 = vcmask 23552
    %s325 = scalar_lea.vmem [#allocation0], 49
    %326 = vst.msk [vmem:[%s325] sm:$0x1] %vm324, %v323
    %s327 = scalar_lea.vmem [#allocation1], 1
    %v328 = vld [vmem:[%s327] sm:$0x1]
    %329 = vrot.lane.b32.xlu0 %v328, 70
    %v330 = vpop.permute.xlu0 %329
    %vm331 = vcmask 23552
    %s332 = scalar_lea.vmem [#allocation0], 162
    %333 = vst.msk [vmem:[%s332] sm:$0x1] %vm331, %v330
    %v334 = vld [vmem:[#allocation1] sm:$0x1]
    %335 = vrot.lane.b32.xlu0 %v334, 68
    %v336 = vpop.permute.xlu0 %335
    %vm337 = vcmask 23552
    %s338 = scalar_lea.vmem [#allocation0], 50
    %339 = vst.msk [vmem:[%s338] sm:$0x1] %vm337, %v336
    %s340 = scalar_lea.vmem [#allocation1], 1
    %v341 = vld [vmem:[%s340] sm:$0x1]
    %342 = vrot.lane.b32.xlu0 %v341, 67
    %v343 = vpop.permute.xlu0 %342
    %vm344 = vcmask 23552
    %s345 = scalar_lea.vmem [#allocation0], 168
    %346 = vst.msk [vmem:[%s345] sm:$0x1] %vm344, %v343
    %v347 = vld [vmem:[#allocation1] sm:$0x1]
    %348 = vrot.lane.b32.xlu0 %v347, 65
    %v349 = vpop.permute.xlu0 %348
    %vm350 = vcmask 23552
    %s351 = scalar_lea.vmem [#allocation0], 56
    %352 = vst.msk [vmem:[%s351] sm:$0x1] %vm350, %v349
    %s353 = scalar_lea.vmem [#allocation1], 1
    %v354 = vld [vmem:[%s353] sm:$0x1]
    %355 = vrot.lane.b32.xlu0 %v354, 64
    %v356 = vpop.permute.xlu0 %355
    %vm357 = vcmask 23552
    %s358 = scalar_lea.vmem [#allocation0], 169
    %359 = vst.msk [vmem:[%s358] sm:$0x1] %vm357, %v356
    %v360 = vld [vmem:[#allocation1] sm:$0x1]
    %361 = vrot.lane.b32.xlu0 %v360, 62
    %v362 = vpop.permute.xlu0 %361
    %vm363 = vcmask 23552
    %s364 = scalar_lea.vmem [#allocation0], 57
    %365 = vst.msk [vmem:[%s364] sm:$0x1] %vm363, %v362
    %s366 = scalar_lea.vmem [#allocation1], 1
    %v367 = vld [vmem:[%s366] sm:$0x1]
    %368 = vrot.lane.b32.xlu0 %v367, 61
    %v369 = vpop.permute.xlu0 %368
    %vm370 = vcmask 23552
    %s371 = scalar_lea.vmem [#allocation0], 170
    %372 = vst.msk [vmem:[%s371] sm:$0x1] %vm370, %v369
    %v373 = vld [vmem:[#allocation1] sm:$0x1]
    %374 = vrot.lane.b32.xlu0 %v373, 59
    %v375 = vpop.permute.xlu0 %374
    %vm376 = vcmask 23552
    %s377 = scalar_lea.vmem [#allocation0], 58
    %378 = vst.msk [vmem:[%s377] sm:$0x1] %vm376, %v375
    %s379 = scalar_lea.vmem [#allocation1], 1
    %v380 = vld [vmem:[%s379] sm:$0x1]
    %381 = vrot.lane.b32.xlu0 %v380, 58
    %v382 = vpop.permute.xlu0 %381
    %vm383 = vcmask 23552
    %s384 = scalar_lea.vmem [#allocation0], 176
    %385 = vst.msk [vmem:[%s384] sm:$0x1] %vm383, %v382
    %v386 = vld [vmem:[#allocation1] sm:$0x1]
    %387 = vrot.lane.b32.xlu0 %v386, 56
    %v388 = vpop.permute.xlu0 %387
    %vm389 = vcmask 23552
    %s390 = scalar_lea.vmem [#allocation0], 64
    %391 = vst.msk [vmem:[%s390] sm:$0x1] %vm389, %v388
    %s392 = scalar_lea.vmem [#allocation1], 1
    %v393 = vld [vmem:[%s392] sm:$0x1]
    %394 = vrot.lane.b32.xlu0 %v393, 55
    %v395 = vpop.permute.xlu0 %394
    %vm396 = vcmask 23552
    %s397 = scalar_lea.vmem [#allocation0], 177
    %398 = vst.msk [vmem:[%s397] sm:$0x1] %vm396, %v395
    %v399 = vld [vmem:[#allocation1] sm:$0x1]
    %400 = vrot.lane.b32.xlu0 %v399, 53
    %v401 = vpop.permute.xlu0 %400
    %vm402 = vcmask 23552
    %s403 = scalar_lea.vmem [#allocation0], 65
    %404 = vst.msk [vmem:[%s403] sm:$0x1] %vm402, %v401
    %s405 = scalar_lea.vmem [#allocation1], 1
    %v406 = vld [vmem:[%s405] sm:$0x1]
    %407 = vrot.lane.b32.xlu0 %v406, 52
    %v408 = vpop.permute.xlu0 %407
    %vm409 = vcmask 23552
    %s410 = scalar_lea.vmem [#allocation0], 178
    %411 = vst.msk [vmem:[%s410] sm:$0x1] %vm409, %v408
    %v412 = vld [vmem:[#allocation1] sm:$0x1]
    %413 = vrot.lane.b32.xlu0 %v412, 50
    %v414 = vpop.permute.xlu0 %413
    %vm415 = vcmask 23552
    %s416 = scalar_lea.vmem [#allocation0], 66
    %417 = vst.msk [vmem:[%s416] sm:$0x1] %vm415, %v414
    %s418 = scalar_lea.vmem [#allocation1], 1
    %v419 = vld [vmem:[%s418] sm:$0x1]
    %420 = vrot.lane.b32.xlu0 %v419, 49
    %v421 = vpop.permute.xlu0 %420
    %vm422 = vcmask 23552
    %s423 = scalar_lea.vmem [#allocation0], 184
    %424 = vst.msk [vmem:[%s423] sm:$0x1] %vm422, %v421
    %v425 = vld [vmem:[#allocation1] sm:$0x1]
    %426 = vrot.lane.b32.xlu0 %v425, 47
    %v427 = vpop.permute.xlu0 %426
    %vm428 = vcmask 23552
    %s429 = scalar_lea.vmem [#allocation0], 72
    %430 = vst.msk [vmem:[%s429] sm:$0x1] %vm428, %v427
    %s431 = scalar_lea.vmem [#allocation1], 1
    %v432 = vld [vmem:[%s431] sm:$0x1]
    %433 = vrot.lane.b32.xlu0 %v432, 46
    %v434 = vpop.permute.xlu0 %433
    %vm435 = vcmask 23552
    %s436 = scalar_lea.vmem [#allocation0], 185
    %437 = vst.msk [vmem:[%s436] sm:$0x1] %vm435, %v434
    %v438 = vld [vmem:[#allocation1] sm:$0x1]
    %439 = vrot.lane.b32.xlu0 %v438, 44
    %v440 = vpop.permute.xlu0 %439
    %vm441 = vcmask 23552
    %s442 = scalar_lea.vmem [#allocation0], 73
    %443 = vst.msk [vmem:[%s442] sm:$0x1] %vm441, %v440
    %s444 = scalar_lea.vmem [#allocation1], 1
    %v445 = vld [vmem:[%s444] sm:$0x1]
    %446 = vrot.lane.b32.xlu0 %v445, 43
    %v447 = vpop.permute.xlu0 %446
    %vm448 = vcmask 23552
    %s449 = scalar_lea.vmem [#allocation0], 186
    %450 = vst.msk [vmem:[%s449] sm:$0x1] %vm448, %v447
    %v451 = vld [vmem:[#allocation1] sm:$0x1]
    %452 = vrot.lane.b32.xlu0 %v451, 41
    %v453 = vpop.permute.xlu0 %452
    %vm454 = vcmask 23552
    %s455 = scalar_lea.vmem [#allocation0], 74
    %456 = vst.msk [vmem:[%s455] sm:$0x1] %vm454, %v453
    %s457 = scalar_lea.vmem [#allocation1], 1
    %v458 = vld [vmem:[%s457] sm:$0x1]
    %459 = vrot.lane.b32.xlu0 %v458, 40
    %v460 = vpop.permute.xlu0 %459
    %vm461 = vcmask 23552
    %s462 = scalar_lea.vmem [#allocation0], 192
    %463 = vst.msk [vmem:[%s462] sm:$0x1] %vm461, %v460
    %v464 = vld [vmem:[#allocation1] sm:$0x1]
    %465 = vrot.lane.b32.xlu0 %v464, 38
    %v466 = vpop.permute.xlu0 %465
    %vm467 = vcmask 23552
    %s468 = scalar_lea.vmem [#allocation0], 80
    %469 = vst.msk [vmem:[%s468] sm:$0x1] %vm467, %v466
    %s470 = scalar_lea.vmem [#allocation1], 1
    %v471 = vld [vmem:[%s470] sm:$0x1]
    %472 = vrot.lane.b32.xlu0 %v471, 37
    %v473 = vpop.permute.xlu0 %472
    %vm474 = vcmask 23552
    %s475 = scalar_lea.vmem [#allocation0], 193
    %476 = vst.msk [vmem:[%s475] sm:$0x1] %vm474, %v473
    %v477 = vld [vmem:[#allocation1] sm:$0x1]
    %478 = vrot.lane.b32.xlu0 %v477, 35
    %v479 = vpop.permute.xlu0 %478
    %vm480 = vcmask 23552
    %s481 = scalar_lea.vmem [#allocation0], 81
    %482 = vst.msk [vmem:[%s481] sm:$0x1] %vm480, %v479
    %s483 = scalar_lea.vmem [#allocation1], 1
    %v484 = vld [vmem:[%s483] sm:$0x1]
    %485 = vrot.lane.b32.xlu0 %v484, 34
    %v486 = vpop.permute.xlu0 %485
    %vm487 = vcmask 23552
    %s488 = scalar_lea.vmem [#allocation0], 194
    %489 = vst.msk [vmem:[%s488] sm:$0x1] %vm487, %v486
    %v490 = vld [vmem:[#allocation1] sm:$0x1]
    %491 = vrot.lane.b32.xlu0 %v490, 32
    %v492 = vpop.permute.xlu0 %491
    %vm493 = vcmask 23552
    %s494 = scalar_lea.vmem [#allocation0], 82
    %495 = vst.msk [vmem:[%s494] sm:$0x1] %vm493, %v492
    %s496 = scalar_lea.vmem [#allocation1], 1
    %v497 = vld [vmem:[%s496] sm:$0x1]
    %498 = vrot.lane.b32.xlu0 %v497, 31
    %v499 = vpop.permute.xlu0 %498
    %vm500 = vcmask 23552
    %s501 = scalar_lea.vmem [#allocation0], 200
    %502 = vst.msk [vmem:[%s501] sm:$0x1] %vm500, %v499
    %v503 = vld [vmem:[#allocation1] sm:$0x1]
    %504 = vrot.lane.b32.xlu0 %v503, 29
    %v505 = vpop.permute.xlu0 %504
    %vm506 = vcmask 23552
    %s507 = scalar_lea.vmem [#allocation0], 88
    %508 = vst.msk [vmem:[%s507] sm:$0x1] %vm506, %v505
    %s509 = scalar_lea.vmem [#allocation1], 1
    %v510 = vld [vmem:[%s509] sm:$0x1]
    %511 = vrot.lane.b32.xlu0 %v510, 28
    %v512 = vpop.permute.xlu0 %511
    %vm513 = vcmask 23552
    %s514 = scalar_lea.vmem [#allocation0], 201
    %515 = vst.msk [vmem:[%s514] sm:$0x1] %vm513, %v512
    %v516 = vld [vmem:[#allocation1] sm:$0x1]
    %517 = vrot.lane.b32.xlu0 %v516, 26
    %v518 = vpop.permute.xlu0 %517
    %vm519 = vcmask 23552
    %s520 = scalar_lea.vmem [#allocation0], 89
    %521 = vst.msk [vmem:[%s520] sm:$0x1] %vm519, %v518
    %s522 = scalar_lea.vmem [#allocation1], 1
    %v523 = vld [vmem:[%s522] sm:$0x1]
    %524 = vrot.lane.b32.xlu0 %v523, 25
    %v525 = vpop.permute.xlu0 %524
    %vm526 = vcmask 23552
    %s527 = scalar_lea.vmem [#allocation0], 202
    %528 = vst.msk [vmem:[%s527] sm:$0x1] %vm526, %v525
    %v529 = vld [vmem:[#allocation1] sm:$0x1]
    %530 = vrot.lane.b32.xlu0 %v529, 23
    %v531 = vpop.permute.xlu0 %530
    %vm532 = vcmask 23552
    %s533 = scalar_lea.vmem [#allocation0], 90
    %534 = vst.msk [vmem:[%s533] sm:$0x1] %vm532, %v531
    %s535 = scalar_lea.vmem [#allocation1], 1
    %v536 = vld [vmem:[%s535] sm:$0x1]
    %537 = vrot.lane.b32.xlu0 %v536, 22
    %v538 = vpop.permute.xlu0 %537
    %vm539 = vcmask 23552
    %s540 = scalar_lea.vmem [#allocation0], 208
    %541 = vst.msk [vmem:[%s540] sm:$0x1] %vm539, %v538
    %v542 = vld [vmem:[#allocation1] sm:$0x1]
    %543 = vrot.lane.b32.xlu0 %v542, 20
    %v544 = vpop.permute.xlu0 %543
    %vm545 = vcmask 23552
    %s546 = scalar_lea.vmem [#allocation0], 96
    %547 = vst.msk [vmem:[%s546] sm:$0x1] %vm545, %v544
    %s548 = scalar_lea.vmem [#allocation1], 1
    %v549 = vld [vmem:[%s548] sm:$0x1]
    %550 = vrot.lane.b32.xlu0 %v549, 19
    %v551 = vpop.permute.xlu0 %550
    %vm552 = vcmask 23552
    %s553 = scalar_lea.vmem [#allocation0], 209
    %554 = vst.msk [vmem:[%s553] sm:$0x1] %vm552, %v551
    %v555 = vld [vmem:[#allocation1] sm:$0x1]
    %556 = vrot.lane.b32.xlu0 %v555, 17
    %v557 = vpop.permute.xlu0 %556
    %vm558 = vcmask 23552
    %s559 = scalar_lea.vmem [#allocation0], 97
    %560 = vst.msk [vmem:[%s559] sm:$0x1] %vm558, %v557
    %s561 = scalar_lea.vmem [#allocation1], 1
    %v562 = vld [vmem:[%s561] sm:$0x1]
    %563 = vrot.lane.b32.xlu0 %v562, 16
    %v564 = vpop.permute.xlu0 %563
    %vm565 = vcmask 23552
    %s566 = scalar_lea.vmem [#allocation0], 210
    %567 = vst.msk [vmem:[%s566] sm:$0x1] %vm565, %v564
    %v568 = vld [vmem:[#allocation1] sm:$0x1]
    %569 = vrot.lane.b32.xlu0 %v568, 14
    %v570 = vpop.permute.xlu0 %569
    %vm571 = vcmask 23552
    %s572 = scalar_lea.vmem [#allocation0], 98
    %573 = vst.msk [vmem:[%s572] sm:$0x1] %vm571, %v570
    %s574 = scalar_lea.vmem [#allocation1], 1
    %v575 = vld [vmem:[%s574] sm:$0x1]
    %576 = vrot.lane.b32.xlu0 %v575, 13
    %v577 = vpop.permute.xlu0 %576
    %vm578 = vcmask 23552
    %s579 = scalar_lea.vmem [#allocation0], 216
    %580 = vst.msk [vmem:[%s579] sm:$0x1] %vm578, %v577
    %v581 = vld [vmem:[#allocation1] sm:$0x1]
    %582 = vrot.lane.b32.xlu0 %v581, 11
    %v583 = vpop.permute.xlu0 %582
    %vm584 = vcmask 23552
    %s585 = scalar_lea.vmem [#allocation0], 104
    %586 = vst.msk [vmem:[%s585] sm:$0x1] %vm584, %v583
    %s587 = scalar_lea.vmem [#allocation1], 1
    %v588 = vld [vmem:[%s587] sm:$0x1]
    %589 = vrot.lane.b32.xlu0 %v588, 10
    %v590 = vpop.permute.xlu0 %589
    %vm591 = vcmask 23552
    %s592 = scalar_lea.vmem [#allocation0], 217
    %593 = vst.msk [vmem:[%s592] sm:$0x1] %vm591, %v590
    %v594 = vld [vmem:[#allocation1] sm:$0x1]
    %595 = vrot.lane.b32.xlu0 %v594, 8
    %v596 = vpop.permute.xlu0 %595
    %vm597 = vcmask 23552
    %s598 = scalar_lea.vmem [#allocation0], 105
    %599 = vst.msk [vmem:[%s598] sm:$0x1] %vm597, %v596
    %s600 = scalar_lea.vmem [#allocation1], 1
    %v601 = vld [vmem:[%s600] sm:$0x1]
    %602 = vrot.lane.b32.xlu0 %v601, 7
    %v603 = vpop.permute.xlu0 %602
    %vm604 = vcmask 23552
    %s605 = scalar_lea.vmem [#allocation0], 218
    %606 = vst.msk [vmem:[%s605] sm:$0x1] %vm604, %v603
    %v607 = vld [vmem:[#allocation1] sm:$0x1]
    %608 = vrot.lane.b32.xlu0 %v607, 5
    %v609 = vpop.permute.xlu0 %608
    %vm610 = vcmask 23552
    %s611 = scalar_lea.vmem [#allocation0], 106
    %612 = vst.msk [vmem:[%s611] sm:$0x1] %vm610, %v609
    %s613 = scalar_lea.vmem [#allocation1], 1
    %v614 = vld [vmem:[%s613] sm:$0x1]
    %615 = vrot.lane.b32.xlu0 %v614, 4
    %v616 = vpop.permute.xlu0 %615
    %vm617 = vcmask 23552
    %s618 = scalar_lea.vmem [#allocation0], 224
    %619 = vst.msk [vmem:[%s618] sm:$0x1] %vm617, %v616
    %v620 = vld [vmem:[#allocation1] sm:$0x1]
    %s621 = scalar_lea.vmem [#allocation1], 1
    %v622 = vld [vmem:[%s621] sm:$0x1]
    %vm623 = vcmask 1031168
    %v624 = vsel %vm623, %v622, %v620
    %625 = vrot.lane.b32.xlu0 %v624, 2
    %v626 = vpop.permute.xlu0 %625
    %vm627 = vcmask 15360
    %s628 = scalar_lea.vmem [#allocation0], 112
    %629 = vst.msk [vmem:[%s628] sm:$0x1] %vm627, %v626
    %vm630 = vcmask 23568
    %s631 = scalar_lea.vmem [#allocation0], 112
    %632 = vst.msk [vmem:[%s631] sm:$0x1] %vm630, %v626
    %s633 = scalar_lea.vmem [#allocation1], 1
    %v634 = vld [vmem:[%s633] sm:$0x1]
    %s635 = scalar_lea.vmem [#allocation1], 2
    %v636 = vld [vmem:[%s635] sm:$0x1]
    %vm637 = vcmask 1039360
    %v638 = vsel %vm637, %v636, %v634
    %639 = vrot.lane.b32.xlu0 %v638, 1
    %v640 = vpop.permute.xlu0 %639
    %vm641 = vcmask 7168
    %s642 = scalar_lea.vmem [#allocation0], 225
    %643 = vst.msk [vmem:[%s642] sm:$0x1] %vm641, %v640
    %vm644 = vcmask 23560
    %s645 = scalar_lea.vmem [#allocation0], 225
    %646 = vst.msk [vmem:[%s645] sm:$0x1] %vm644, %v640
    %s648 = sshll.u32 1, 4
    %s649 = ssub.s32 %s648, 1
    %v651 = vld [vmem:[#allocation0] sm:%s649]
    %s652 = sshll.u32 1, 4
    %s653 = ssub.s32 %s652, 1
    %654 = vst [vmem:[%s1] sm:%s653] %v651
    %s655 = scalar_lea.vmem [#allocation0], 8
    %v656 = vld [vmem:[%s655] sm:%s649]
    %s657 = sshll.u32 1, 4
    %s658 = ssub.s32 %s657, 1
    %s659 = scalar_lea.vmem %s1, 4
    %660 = vst [vmem:[%s659] sm:%s658] %v656
    %s661 = scalar_lea.vmem [#allocation0], 16
    %v662 = vld [vmem:[%s661] sm:%s649]
    %s663 = sshll.u32 1, 4
    %s664 = ssub.s32 %s663, 1
    %s665 = smul.addr 4, 2
    %s666 = scalar_lea.vmem %s1, %s665
    %667 = vst [vmem:[%s666] sm:%s664] %v662
    %s668 = scalar_lea.vmem [#allocation0], 24
    %v669 = vld [vmem:[%s668] sm:%s649]
    %s670 = sshll.u32 1, 4
    %s671 = ssub.s32 %s670, 1
    %s672 = smul.addr 4, 3
    %s673 = scalar_lea.vmem %s1, %s672
    %674 = vst [vmem:[%s673] sm:%s671] %v669
    %s675 = scalar_lea.vmem [#allocation0], 32
    %v676 = vld [vmem:[%s675] sm:%s649]
    %s677 = sshll.u32 1, 4
    %s678 = ssub.s32 %s677, 1
    %s679 = smul.addr 4, 4
    %s680 = scalar_lea.vmem %s1, %s679
    %681 = vst [vmem:[%s680] sm:%s678] %v676
    %s682 = scalar_lea.vmem [#allocation0], 40
    %v683 = vld [vmem:[%s682] sm:%s649]
    %s684 = sshll.u32 1, 4
    %s685 = ssub.s32 %s684, 1
    %s686 = smul.addr 4, 5
    %s687 = scalar_lea.vmem %s1, %s686
    %688 = vst [vmem:[%s687] sm:%s685] %v683
    %s689 = scalar_lea.vmem [#allocation0], 48
    %v690 = vld [vmem:[%s689] sm:%s649]
    %s691 = sshll.u32 1, 4
    %s692 = ssub.s32 %s691, 1
    %s693 = smul.addr 4, 6
    %s694 = scalar_lea.vmem %s1, %s693
    %695 = vst [vmem:[%s694] sm:%s692] %v690
    %s696 = scalar_lea.vmem [#allocation0], 56
    %v697 = vld [vmem:[%s696] sm:%s649]
    %s698 = sshll.u32 1, 4
    %s699 = ssub.s32 %s698, 1
    %s700 = smul.addr 4, 7
    %s701 = scalar_lea.vmem %s1, %s700
    %702 = vst [vmem:[%s701] sm:%s699] %v697
    %s703 = scalar_lea.vmem [#allocation0], 64
    %v704 = vld [vmem:[%s703] sm:%s649]
    %s705 = sshll.u32 1, 4
    %s706 = ssub.s32 %s705, 1
    %s707 = smul.addr 4, 8
    %s708 = scalar_lea.vmem %s1, %s707
    %709 = vst [vmem:[%s708] sm:%s706] %v704
    %s710 = scalar_lea.vmem [#allocation0], 72
    %v711 = vld [vmem:[%s710] sm:%s649]
    %s712 = sshll.u32 1, 4
    %s713 = ssub.s32 %s712, 1
    %s714 = smul.addr 4, 9
    %s715 = scalar_lea.vmem %s1, %s714
    %716 = vst [vmem:[%s715] sm:%s713] %v711
    %s717 = scalar_lea.vmem [#allocation0], 80
    %v718 = vld [vmem:[%s717] sm:%s649]
    %s719 = sshll.u32 1, 4
    %s720 = ssub.s32 %s719, 1
    %s721 = smul.addr 4, 10
    %s722 = scalar_lea.vmem %s1, %s721
    %723 = vst [vmem:[%s722] sm:%s720] %v718
    %s724 = scalar_lea.vmem [#allocation0], 88
    %v725 = vld [vmem:[%s724] sm:%s649]
    %s726 = sshll.u32 1, 4
    %s727 = ssub.s32 %s726, 1
    %s728 = smul.addr 4, 11
    %s729 = scalar_lea.vmem %s1, %s728
    %730 = vst [vmem:[%s729] sm:%s727] %v725
    %s731 = scalar_lea.vmem [#allocation0], 96
    %v732 = vld [vmem:[%s731] sm:%s649]
    %s733 = sshll.u32 1, 4
    %s734 = ssub.s32 %s733, 1
    %s735 = smul.addr 4, 12
    %s736 = scalar_lea.vmem %s1, %s735
    %737 = vst [vmem:[%s736] sm:%s734] %v732
    %s738 = scalar_lea.vmem [#allocation0], 104
    %v739 = vld [vmem:[%s738] sm:%s649]
    %s740 = sshll.u32 1, 4
    %s741 = ssub.s32 %s740, 1
    %s742 = smul.addr 4, 13
    %s743 = scalar_lea.vmem %s1, %s742
    %744 = vst [vmem:[%s743] sm:%s741] %v739
    %s745 = scalar_lea.vmem [#allocation0], 112
    %v746 = vld [vmem:[%s745] sm:%s649]
    %s747 = sshll.u32 1, 4
    %s748 = ssub.s32 %s747, 1
    %s749 = smul.addr 4, 14
    %s750 = scalar_lea.vmem %s1, %s749
    %751 = vst [vmem:[%s750] sm:%s748] %v746
    %s752 = scalar_lea.vmem [#allocation0], 120
    %v753 = vld [vmem:[%s752] sm:%s649]
    %s754 = sshll.u32 1, 4
    %s755 = ssub.s32 %s754, 1
    %s756 = smul.addr 4, 15
    %s757 = scalar_lea.vmem %s1, %s756
    %758 = vst [vmem:[%s757] sm:%s755] %v753
    %s759 = scalar_lea.vmem [#allocation0], 128
    %v760 = vld [vmem:[%s759] sm:%s649]
    %s761 = sshll.u32 1, 4
    %s762 = ssub.s32 %s761, 1
    %s763 = smul.addr 4, 16
    %s764 = scalar_lea.vmem %s1, %s763
    %765 = vst [vmem:[%s764] sm:%s762] %v760
    %s766 = scalar_lea.vmem [#allocation0], 136
    %v767 = vld [vmem:[%s766] sm:%s649]
    %s768 = sshll.u32 1, 4
    %s769 = ssub.s32 %s768, 1
    %s770 = smul.addr 4, 17
    %s771 = scalar_lea.vmem %s1, %s770
    %772 = vst [vmem:[%s771] sm:%s769] %v767
    %s773 = scalar_lea.vmem [#allocation0], 144
    %v774 = vld [vmem:[%s773] sm:%s649]
    %s775 = sshll.u32 1, 4
    %s776 = ssub.s32 %s775, 1
    %s777 = smul.addr 4, 18
    %s778 = scalar_lea.vmem %s1, %s777
    %779 = vst [vmem:[%s778] sm:%s776] %v774
    %s780 = scalar_lea.vmem [#allocation0], 152
    %v781 = vld [vmem:[%s780] sm:%s649]
    %s782 = sshll.u32 1, 4
    %s783 = ssub.s32 %s782, 1
    %s784 = smul.addr 4, 19
    %s785 = scalar_lea.vmem %s1, %s784
    %786 = vst [vmem:[%s785] sm:%s783] %v781
    %s787 = scalar_lea.vmem [#allocation0], 160
    %v788 = vld [vmem:[%s787] sm:%s649]
    %s789 = sshll.u32 1, 4
    %s790 = ssub.s32 %s789, 1
    %s791 = smul.addr 4, 20
    %s792 = scalar_lea.vmem %s1, %s791
    %793 = vst [vmem:[%s792] sm:%s790] %v788
    %s794 = scalar_lea.vmem [#allocation0], 168
    %v795 = vld [vmem:[%s794] sm:%s649]
    %s796 = sshll.u32 1, 4
    %s797 = ssub.s32 %s796, 1
    %s798 = smul.addr 4, 21
    %s799 = scalar_lea.vmem %s1, %s798
    %800 = vst [vmem:[%s799] sm:%s797] %v795
    %s801 = scalar_lea.vmem [#allocation0], 176
    %v802 = vld [vmem:[%s801] sm:%s649]
    %s803 = sshll.u32 1, 4
    %s804 = ssub.s32 %s803, 1
    %s805 = smul.addr 4, 22
    %s806 = scalar_lea.vmem %s1, %s805
    %807 = vst [vmem:[%s806] sm:%s804] %v802
    %s808 = scalar_lea.vmem [#allocation0], 184
    %v809 = vld [vmem:[%s808] sm:%s649]
    %s810 = sshll.u32 1, 4
    %s811 = ssub.s32 %s810, 1
    %s812 = smul.addr 4, 23
    %s813 = scalar_lea.vmem %s1, %s812
    %814 = vst [vmem:[%s813] sm:%s811] %v809
    %s815 = scalar_lea.vmem [#allocation0], 192
    %v816 = vld [vmem:[%s815] sm:%s649]
    %s817 = sshll.u32 1, 4
    %s818 = ssub.s32 %s817, 1
    %s819 = smul.addr 4, 24
    %s820 = scalar_lea.vmem %s1, %s819
    %821 = vst [vmem:[%s820] sm:%s818] %v816
    %s822 = scalar_lea.vmem [#allocation0], 200
    %v823 = vld [vmem:[%s822] sm:%s649]
    %s824 = sshll.u32 1, 4
    %s825 = ssub.s32 %s824, 1
    %s826 = smul.addr 4, 25
    %s827 = scalar_lea.vmem %s1, %s826
    %828 = vst [vmem:[%s827] sm:%s825] %v823
    %s829 = scalar_lea.vmem [#allocation0], 208
    %v830 = vld [vmem:[%s829] sm:%s649]
    %s831 = sshll.u32 1, 4
    %s832 = ssub.s32 %s831, 1
    %s833 = smul.addr 4, 26
    %s834 = scalar_lea.vmem %s1, %s833
    %835 = vst [vmem:[%s834] sm:%s832] %v830
    %s836 = scalar_lea.vmem [#allocation0], 216
    %v837 = vld [vmem:[%s836] sm:%s649]
    %s838 = sshll.u32 1, 4
    %s839 = ssub.s32 %s838, 1
    %s840 = smul.addr 4, 27
    %s841 = scalar_lea.vmem %s1, %s840
    %842 = vst [vmem:[%s841] sm:%s839] %v837
    %s843 = scalar_lea.vmem [#allocation0], 224
    %v844 = vld [vmem:[%s843] sm:%s649]
    %s845 = sshll.u32 1, 4
    %s846 = ssub.s32 %s845, 1
    %s847 = smul.addr 4, 28
    %s848 = scalar_lea.vmem %s1, %s847
    %849 = vst [vmem:[%s848] sm:%s846] %v844
    %s850 = scalar_lea.vmem [#allocation0], 232
    %v851 = vld [vmem:[%s850] sm:%s649]
    %s852 = sshll.u32 1, 4
    %s853 = ssub.s32 %s852, 1
    %s854 = smul.addr 4, 29
    %s855 = scalar_lea.vmem %s1, %s854
    %856 = vst [vmem:[%s855] sm:%s853] %v851
    %s857 = scalar_lea.vmem [#allocation0], 240
    %v858 = vld [vmem:[%s857] sm:%s649]
    %s859 = sshll.u32 1, 4
    %s860 = ssub.s32 %s859, 1
    %s861 = smul.addr 4, 30
    %s862 = scalar_lea.vmem %s1, %s861
    %863 = vst [vmem:[%s862] sm:%s860] %v858
    %s864 = scalar_lea.vmem [#allocation0], 248
    %v865 = vld [vmem:[%s864] sm:%s649]
    %s866 = sshll.u32 1, 4
    %s867 = ssub.s32 %s866, 1
    %s868 = smul.addr 4, 31
    %s869 = scalar_lea.vmem %s1, %s868
    %870 = vst [vmem:[%s869] sm:%s867] %v865

// kernel: tpgm_forward.2
$region0: #{tpgm_forward.2}
  #allocation0 [shape = 'u32[]', space=smem, size = 0x4, offset = 0x4, fixed_abs, tag = 'smem constant byte address 0x4 - core index']
  #allocation1 [shape = 'u32[144,128]{1,0:T(1,128)}', space=vmem, size = 0x12000, scoped, tag = 'internal scratch']
  #allocation2 [shape = 'f32[8,1]{1,0:T(8,128)}', space=vmem, size = 0x1000, scoped, tag = 'scratch operand']
  #allocation3 [shape = 'f32[8,1]{1,0:T(8,128)}', space=vmem, size = 0x1000, scoped, tag = 'scratch operand']
  %s0 = inlined_call_operand.vmem [shape: f32[8,384], index: 0, kind: input, shape index: {}]
  %s1 = inlined_call_operand.vmem [shape: f32[8,384], index: 1, kind: input, shape index: {}]
  %s2 = inlined_call_operand.vmem [shape: f32[8,1], index: 2, kind: input, shape index: {}]
  %s3 = inlined_call_operand.vmem [shape: f32[8,384], index: 3, kind: output, shape index: {0}]
  %s4 = inlined_call_operand.vmem [shape: f32[8,1], index: 4, kind: output, shape index: {1}]
  %5 = xla_tuple %s3, %s4
  %s6 = sld [smem:[#allocation0]]
  $region69: #{tpgm_forward.2} parent=0
    _
  %s8 = ssub.s32 1, %s6
  %s9 = scalar_select 0, %s8, %s6
  loop: start=0, step=1, limit=4
  $region2: #{tpgm_forward.2} parent=0 // loop_pre_header
    _
  $region3: #{tpgm_forward.2} parent=0 // loop_header
    %s11 = sphi 0, %s15
    %p12 = scmp.ge.s32.totalorder %s11, 4
    %s18 = sphi 0, %s30
    %s19 = sphi 0, %s26
    %s20 = sphi 0, %s18
    %s21 = sphi 0, %s19
    %s22 = sphi 0, %s20
    %s23 = sphi 0, %s21
    %s33 = sphi 0, %s35
    %s36 = sphi 0, %s33
    %s37 = sphi 0, %s36
    %s53 = sphi 0, %s37
    %s59 = sphi 0, %s61
    %s62 = sphi 0, %s59
    %s63 = sphi 0, %s62
    %s79 = sphi 0, %s63
    %s83 = sphi 0, %s83
    %s85 = sphi 0, %s83
    %s86 = sphi 0, %s85
    %s100 = sphi 0, %s86
    %s106 = sphi 0, %s108
    %s109 = sphi 0, %s106
    %s110 = sphi 0, %s109
    %s126 = sphi 0, %s110
    %s130 = sphi 0, %s130
    %s132 = sphi 0, %s130
    %s133 = sphi 0, %s132
    %s147 = sphi 0, %s133
  $region4: #{tpgm_forward.2} parent=0 // loop_header_branch
    %14 = sbr.rel (%p12) target = $region8
  $region5: #{tpgm_forward.2} parent=0 // loop_body
    %s16 = ssub.s32 %s11, 1
    %s17 = ssub.s32 %s11, 2
    %s24 = sadd.s32 1, %s19
    %p25 = scmp.ge.s32.totalorder %s24, 1
    %s26 = scalar_select %p25, 0, %s24
    %s27 = sadd.s32 1, %s18
    %s28 = scalar_select %p25, %s27, %s18
    %p29 = scmp.ge.s32.totalorder %s28, 2
    %s30 = scalar_select %p29, 0, %s28
    %s31 = ssub.s32 %s19, %s26
    %p32 = scmp.eq.s32.totalorder %s31, 0
    %s34 = sadd.s32 %s33, 1
    %s35 = scalar_select %p32, %s33, %s34
    %p38 = pneg %p32
    %p39 = scmp.eq.s32.totalorder %s11, 1
    %p40 = por %p38, %p39
    %p41 = scmp.ne.s32.totalorder %s33, %s36
    %p42 = scmp.eq.s32.totalorder %s11, 0
    %p43 = por %p41, %p42
    %p44 = scmp.ne.s32.totalorder %s33, %s36
    %p45 = scmp.eq.s32.totalorder %s16, 1
    %p46 = por %p44, %p45
    %p47 = scmp.ne.s32.totalorder %s36, %s37
    %p48 = scmp.eq.s32.totalorder %s16, 0
    %p49 = por %p47, %p48
    %p50 = scmp.ne.s32.totalorder %s36, %s37
    %p51 = scmp.eq.s32.totalorder %s17, 1
    %p52 = por %p50, %p51
    %p54 = scmp.ne.s32.totalorder %s37, %s53
    %p55 = scmp.eq.s32.totalorder %s17, 0
    %p56 = por %p54, %p55
    %s57 = ssub.s32 %s19, %s26
    %p58 = scmp.eq.s32.totalorder %s57, 0
    %s60 = sadd.s32 %s59, 1
    %s61 = scalar_select %p58, %s59, %s60
    %p64 = pneg %p58
    %p65 = scmp.eq.s32.totalorder %s11, 1
    %p66 = por %p64, %p65
    %p67 = scmp.ne.s32.totalorder %s59, %s62
    %p68 = scmp.eq.s32.totalorder %s11, 0
    %p69 = por %p67, %p68
    %p70 = scmp.ne.s32.totalorder %s59, %s62
    %p71 = scmp.eq.s32.totalorder %s16, 1
    %p72 = por %p70, %p71
    %p73 = scmp.ne.s32.totalorder %s62, %s63
    %p74 = scmp.eq.s32.totalorder %s16, 0
    %p75 = por %p73, %p74
    %p76 = scmp.ne.s32.totalorder %s62, %s63
    %p77 = scmp.eq.s32.totalorder %s17, 1
    %p78 = por %p76, %p77
    %p80 = scmp.ne.s32.totalorder %s63, %s79
    %p81 = scmp.eq.s32.totalorder %s17, 0
    %p82 = por %p80, %p81
    %s84 = sadd.s32 %s83, 1
    %p87 = scmp.eq.s32.totalorder %s11, 1
    %p88 = scmp.ne.s32.totalorder %s83, %s85
    %p89 = scmp.eq.s32.totalorder %s11, 0
    %p90 = por %p88, %p89
    %p91 = scmp.ne.s32.totalorder %s83, %s85
    %p92 = scmp.eq.s32.totalorder %s16, 1
    %p93 = por %p91, %p92
    %p94 = scmp.ne.s32.totalorder %s85, %s86
    %p95 = scmp.eq.s32.totalorder %s16, 0
    %p96 = por %p94, %p95
    %p97 = scmp.ne.s32.totalorder %s85, %s86
    %p98 = scmp.eq.s32.totalorder %s17, 1
    %p99 = por %p97, %p98
    %p101 = scmp.ne.s32.totalorder %s86, %s100
    %p102 = scmp.eq.s32.totalorder %s17, 0
    %p103 = por %p101, %p102
    %s104 = ssub.s32 %s19, %s26
    %p105 = scmp.eq.s32.totalorder %s104, 0
    %s107 = sadd.s32 %s106, 1
    %s108 = scalar_select %p105, %s106, %s107
    %p111 = pneg %p105
    %p112 = scmp.eq.s32.totalorder %s11, 1
    %p113 = por %p111, %p112
    %p114 = scmp.ne.s32.totalorder %s106, %s109
    %p115 = scmp.eq.s32.totalorder %s11, 0
    %p116 = por %p114, %p115
    %p117 = scmp.ne.s32.totalorder %s106, %s109
    %p118 = scmp.eq.s32.totalorder %s16, 1
    %p119 = por %p117, %p118
    %p120 = scmp.ne.s32.totalorder %s109, %s110
    %p121 = scmp.eq.s32.totalorder %s16, 0
    %p122 = por %p120, %p121
    %p123 = scmp.ne.s32.totalorder %s109, %s110
    %p124 = scmp.eq.s32.totalorder %s17, 1
    %p125 = por %p123, %p124
    %p127 = scmp.ne.s32.totalorder %s110, %s126
    %p128 = scmp.eq.s32.totalorder %s17, 0
    %p129 = por %p127, %p128
    %s131 = sadd.s32 %s130, 1
    %p134 = scmp.eq.s32.totalorder %s11, 1
    %p135 = scmp.ne.s32.totalorder %s130, %s132
    %p136 = scmp.eq.s32.totalorder %s11, 0
    %p137 = por %p135, %p136
    %p138 = scmp.ne.s32.totalorder %s130, %s132
    %p139 = scmp.eq.s32.totalorder %s16, 1
    %p140 = por %p138, %p139
    %p141 = scmp.ne.s32.totalorder %s132, %s133
    %p142 = scmp.eq.s32.totalorder %s16, 0
    %p143 = por %p141, %p142
    %p144 = scmp.ne.s32.totalorder %s132, %s133
    %p145 = scmp.eq.s32.totalorder %s17, 1
    %p146 = por %p144, %p145
    %p148 = scmp.ne.s32.totalorder %s133, %s147
    %p149 = scmp.eq.s32.totalorder %s17, 0
    %p150 = por %p148, %p149
    %p151 = scmp.le.s32.totalorder 1, %s11
    %p152 = scmp.lt.s32.totalorder %s11, 3
    %p153 = pnand %p151, %p152
    %p154 = pneg %p153
    // Predicated region
    $region9: #{tpgm_forward.2} parent=5 // pred_check
      _
    $region10: #{tpgm_forward.2} parent=5 // pred_check_branch
      %156 = sbr.rel (%p153) target = $region12
    $region11: #{tpgm_forward.2} parent=5 // pred_region
      %s157 = ssub.s32 %s11, 1
      // Predicated region
      $region13: #{tpgm_forward.2} parent=11 // pred_check
        %p158 = pneg %p49
      $region14: #{tpgm_forward.2} parent=11 // pred_check_branch
        %160 = sbr.rel (%p158) target = $region16
      $region15: #{tpgm_forward.2} parent=11 // pred_region
        %s161 = smul.u32 3, %s21
        %p162 = scmp.lt.s32.totalorder %s161, 2
        %s163 = scalar_select %p162, %s161, 2
        %s164 = smul.addr %s163, 8
        %s165 = scalar_lea.vmem %s0, %s164
        %s166 = smul.u32 3, %s21
      $region16: #{tpgm_forward.2} parent=11 // pred_fallthru
        _
      // Predicated region
      $region17: #{tpgm_forward.2} parent=11 // pred_check
        %p167 = pneg %p75
      $region18: #{tpgm_forward.2} parent=11 // pred_check_branch
        %169 = sbr.rel (%p167) target = $region20
      $region19: #{tpgm_forward.2} parent=11 // pred_region
        %s170 = smul.u32 3, %s21
        %p171 = scmp.lt.s32.totalorder %s170, 2
        %s172 = scalar_select %p171, %s170, 2
        %s173 = smul.addr %s172, 8
        %s174 = scalar_lea.vmem %s1, %s173
        %s175 = smul.u32 3, %s21
      $region20: #{tpgm_forward.2} parent=11 // pred_fallthru
        _
      // Predicated region
      $region21: #{tpgm_forward.2} parent=11 // pred_check
        %p176 = pneg %p96
      $region22: #{tpgm_forward.2} parent=11 // pred_check_branch
        %178 = sbr.rel (%p176) target = $region24
      $region23: #{tpgm_forward.2} parent=11 // pred_region
        _
      $region24: #{tpgm_forward.2} parent=11 // pred_fallthru
        _
    $region12: #{tpgm_forward.2} parent=5 // pred_fallthru
      _
    %p179 = scmp.lt.s32.totalorder %s11, 2
    // Predicated region
    $region25: #{tpgm_forward.2} parent=5 // pred_check
      %p180 = pneg %p179
    $region26: #{tpgm_forward.2} parent=5 // pred_check_branch
      %182 = sbr.rel (%p180) target = $region28
    $region27: #{tpgm_forward.2} parent=5 // pred_region
      _
    $region28: #{tpgm_forward.2} parent=5 // pred_fallthru
      _
    %p183 = scmp.le.s32.totalorder 1, %s11
    %p184 = scmp.lt.s32.totalorder %s11, 3
    %p185 = pnand %p183, %p184
    %p186 = pneg %p185
    // Predicated region
    $region29: #{tpgm_forward.2} parent=5 // pred_check
      _
    $region30: #{tpgm_forward.2} parent=5 // pred_check_branch
      %188 = sbr.rel (%p185) target = $region32
    $region31: #{tpgm_forward.2} parent=5 // pred_region
      %s189 = ssub.s32 %s11, 1
      %s190 = smul.u32 3, %s21
      %p191 = scmp.lt.s32.totalorder %s190, 2
      %s192 = scalar_select %p191, %s190, 2
      %s193 = smul.addr %s192, 8
      %s194 = scalar_lea.vmem %s0, %s193
      %p195 = pneg %p49
      %p196 = pneg %p46
      %s197 = smul.u32 3, %s21
      %p198 = scmp.lt.s32.totalorder %s197, 2
      %s199 = scalar_select %p198, %s197, 2
      %s200 = smul.addr %s199, 8
      %s201 = scalar_lea.vmem %s1, %s200
      %p202 = pneg %p75
      %p203 = pneg %p72
      %p204 = pneg %p96
      %p205 = pneg %p93
      %p206 = pneg %p122
      %p207 = pneg %p119
      %s208 = smul.u32 3, %s21
      %p209 = scmp.lt.s32.totalorder %s208, 2
      %s210 = scalar_select %p209, %s208, 2
      %s211 = smul.addr %s210, 8
      %s212 = scalar_lea.vmem %s3, %s211
      %p213 = pneg %p143
      %p214 = pneg %p140
      %s215 = smul.u32 3, %s21
      %p216 = scmp.lt.s32.totalorder %s215, 2
      %s217 = scalar_select %p216, %s215, 2
      %s218 = smul.addr %s217, 8
      %s219 = scalar_lea.vmem %s0, %s218
      %s220 = smul.u32 3, %s21
      %s221 = smul.u32 3, %s21
      %p222 = scmp.lt.s32.totalorder %s221, 2
      %s223 = scalar_select %p222, %s221, 2
      %s224 = smul.addr %s223, 8
      %s225 = scalar_lea.vmem %s1, %s224
      %s226 = smul.u32 3, %s21
      %s227 = smul.u32 3, %s21
      %p228 = scmp.lt.s32.totalorder %s227, 2
      %s229 = scalar_select %p228, %s227, 2
      %s230 = smul.addr %s229, 8
      %s231 = scalar_lea.vmem %s3, %s230
      %s232 = smul.u32 3, %s21
      %v233 = vld [vmem:[%s219] sm:$0xff]
      %v234 = vld [vmem:[%s219 + $0x8] sm:$0xff]
      %v235 = vld [vmem:[%s219 + $0x10] sm:$0xff]
      %v236 = vld [vmem:[%s225] sm:$0xff]
      %v237 = vld [vmem:[%s225 + $0x8] sm:$0xff]
      %v238 = vld [vmem:[%s225 + $0x10] sm:$0xff]
      %v239 = vsub.f32 %v233, %v236
      %v240 = vsub.f32 %v234, %v237
      %v241 = vsub.f32 %v235, %v238
      %p242 = scmp.eq.s32.totalorder %s20, 0
      // Predicated region
      $region33: #{tpgm_forward.2} parent=31 // pred_check
        %p243 = pneg %p242
      $region34: #{tpgm_forward.2} parent=31 // pred_check_branch
        %245 = sbr.rel (%p243) target = $region36
      $region35: #{tpgm_forward.2} parent=31 // pred_region
        %p246 = scmp.eq.s32.totalorder %s21, 0
        // Predicated region
        $region37: #{tpgm_forward.2} parent=35 // pred_check
          %p247 = pneg %p246
        $region38: #{tpgm_forward.2} parent=35 // pred_check_branch
          %249 = sbr.rel (%p247) target = $region40
        $region39: #{tpgm_forward.2} parent=35 // pred_region
          %vm250 = vcmask 7168
          %251 = vst.msk [vmem:[#allocation2] sm:$0xff] %vm250, 0.0
        $region40: #{tpgm_forward.2} parent=35 // pred_fallthru
          _
        %v252 = vld [vmem:[#allocation2] sm:$0xff]
        %v253 = vmul.f32 %v239, %v239
        %v254 = vmul.f32 %v240, %v240
        %v255 = vmul.f32 %v241, %v241
        %v256 = vadd.f32 %v253, %v254
        %v257 = vadd.f32 %v256, %v255
        %258 = vadd.xlane.f32.xlu0 %v257
        %v259 = vpop.xlane.xlu0 %258
        %v260 = vadd.f32 %v252, %v259
        %vm261 = vcmask 7168
        %262 = vst.msk [vmem:[#allocation2] sm:$0xff] %vm261, %v260
        %v263 = vld [vmem:[%s219] sm:$0xff]
        %v264 = vld [vmem:[%s219 + $0x8] sm:$0xff]
        %v265 = vld [vmem:[%s219 + $0x10] sm:$0xff]
        %266 = vst [vmem:[%s231] sm:$0xff] %v263
        %267 = vst [vmem:[%s231 + $0x8] sm:$0xff] %v264
        %268 = vst [vmem:[%s231 + $0x10] sm:$0xff] %v265
        %v269 = vld [vmem:[%s2] sm:$0xff]
        %270 = vst.msk [vmem:[%s4] sm:$0xff] %vm261, %v269
      $region36: #{tpgm_forward.2} parent=31 // pred_fallthru
        _
      %p271 = scmp.eq.s32.totalorder %s20, 1
      // Predicated region
      $region41: #{tpgm_forward.2} parent=31 // pred_check
        %p272 = pneg %p271
      $region42: #{tpgm_forward.2} parent=31 // pred_check_branch
        %274 = sbr.rel (%p272) target = $region44
      $region43: #{tpgm_forward.2} parent=31 // pred_region
        %p275 = scmp.eq.s32.totalorder %s21, 0
        // Predicated region
        $region45: #{tpgm_forward.2} parent=43 // pred_check
          %p276 = pneg %p275
        $region46: #{tpgm_forward.2} parent=43 // pred_check_branch
          %278 = sbr.rel (%p276) target = $region48
        $region47: #{tpgm_forward.2} parent=43 // pred_region
          %v279 = vld [vmem:[#allocation2] sm:$0xff]
          %v280 = vadd.f32 %v279, 1e-30
          %v281 = vrsqrt.pop %v280
          %v282 = vmul.f32 %v279, %v281
          %v283 = vmul.f32 %v282, 0.5
          %v284 = vmax.f32 %v283, 1e-08
          %v285 = vmin.f32 %v282, %v284
          %v286 = vmul.f32 %v285, %v281
          %v287 = vmax.f32 %v286, 0.0
          %v288 = vmin.f32 %v287, 1.0
          %vm289 = vcmask 7168
          %290 = vst.msk [vmem:[#allocation3] sm:$0xff] %vm289, %v288
          %291 = vst.msk [vmem:[%s4] sm:$0xff] %vm289, %v285
        $region48: #{tpgm_forward.2} parent=43 // pred_fallthru
          _
        %v292 = vld [vmem:[%s225] sm:$0xff]
        %v293 = vld [vmem:[%s225 + $0x8] sm:$0xff]
        %v294 = vld [vmem:[%s225 + $0x10] sm:$0xff]
        %v295 = vld [vmem:[#allocation3] sm:$0xff]
        %297 = vset.pattern.permute.xlu0 0
        %298 = vperm.xlu0 %297, %v295
        %v299 = vpop.permute.xlu0 %298
        %v301 = vmul.f32 %v239, %v299
        %v302 = vmul.f32 %v240, %v299
        %v303 = vmul.f32 %v241, %v299
        %v304 = vadd.f32 %v292, %v301
        %v305 = vadd.f32 %v293, %v302
        %v306 = vadd.f32 %v294, %v303
        %307 = vst [vmem:[%s231] sm:$0xff] %v304
        %308 = vst [vmem:[%s231 + $0x8] sm:$0xff] %v305
        %309 = vst [vmem:[%s231 + $0x10] sm:$0xff] %v306
      $region44: #{tpgm_forward.2} parent=31 // pred_fallthru
        _
      %s310 = smul.u32 3, %s21
      %p311 = scmp.lt.s32.totalorder %s310, 2
      %s312 = scalar_select %p311, %s310, 2
      %s313 = smul.addr %s312, 8
      %s314 = scalar_lea.vmem %s3, %s313
      // Predicated region
      $region49: #{tpgm_forward.2} parent=31 // pred_check
        %p315 = pneg %p119
      $region50: #{tpgm_forward.2} parent=31 // pred_check_branch
        %317 = sbr.rel (%p315) target = $region52
      $region51: #{tpgm_forward.2} parent=31 // pred_region
        %s318 = smul.u32 3, %s21
      $region52: #{tpgm_forward.2} parent=31 // pred_fallthru
        _
      // Predicated region
      $region53: #{tpgm_forward.2} parent=31 // pred_check
        %p319 = pneg %p140
      $region54: #{tpgm_forward.2} parent=31 // pred_check_branch
        %321 = sbr.rel (%p319) target = $region56
      $region55: #{tpgm_forward.2} parent=31 // pred_region
        _
      $region56: #{tpgm_forward.2} parent=31 // pred_fallthru
        _
      // Predicated region
      $region57: #{tpgm_forward.2} parent=31 // pred_check
        %p322 = pneg %p119
      $region58: #{tpgm_forward.2} parent=31 // pred_check_branch
        %324 = sbr.rel (%p322) target = $region60
      $region59: #{tpgm_forward.2} parent=31 // pred_region
        %s325 = smul.u32 3, %s21
        %p326 = scmp.lt.s32.totalorder %s325, 2
        %s327 = scalar_select %p326, %s325, 2
        %s328 = smul.addr %s327, 8
        %s329 = scalar_lea.vmem %s3, %s328
      $region60: #{tpgm_forward.2} parent=31 // pred_fallthru
        _
      // Predicated region
      $region61: #{tpgm_forward.2} parent=31 // pred_check
        %p330 = pneg %p140
      $region62: #{tpgm_forward.2} parent=31 // pred_check_branch
        %332 = sbr.rel (%p330) target = $region64
      $region63: #{tpgm_forward.2} parent=31 // pred_region
        _
      $region64: #{tpgm_forward.2} parent=31 // pred_fallthru
        _
    $region32: #{tpgm_forward.2} parent=5 // pred_fallthru
      _
    %p333 = scmp.le.s32.totalorder 2, %s11
    // Predicated region
    $region65: #{tpgm_forward.2} parent=5 // pred_check
      %p334 = pneg %p333
    $region66: #{tpgm_forward.2} parent=5 // pred_check_branch
      %336 = sbr.rel (%p334) target = $region68
    $region67: #{tpgm_forward.2} parent=5 // pred_region
      %s337 = ssub.s32 %s11, 2
    $region68: #{tpgm_forward.2} parent=5 // pred_fallthru
      _
  $region6: #{tpgm_forward.2} parent=0 // loop_footer
    %s15 = sadd.s32 1, %s11
  $region7: #{tpgm_forward.2} parent=0 // loop_footer_branch
    %10 = sbr.rel target = $region3
  $region8: #{tpgm_forward.2} parent=0 // loop_exit
    _

// kernel: tpgm_forward.3
$region0: #{tpgm_forward.3}
  #allocation0 [shape = 'u32[]', space=smem, size = 0x4, offset = 0x4, fixed_abs, tag = 'smem constant byte address 0x4 - core index']
  #allocation1 [shape = 'u32[144,128]{1,0:T(1,128)}', space=vmem, size = 0x12000, scoped, tag = 'internal scratch']
  %s0 = inlined_call_operand.vmem [shape: bf16[2048,36], index: 0, kind: input, shape index: {}]
  %s1 = inlined_call_operand.vmem [shape: bf16[36,128], index: 1, kind: input, shape index: {}]
  %s2 = inlined_call_operand.vmem [shape: f32[1,128], index: 2, kind: input, shape index: {}]
  %s3 = inlined_call_operand.vmem [shape: bf16[128,128], index: 3, kind: input, shape index: {}]
  %s4 = inlined_call_operand.vmem [shape: f32[1,128], index: 4, kind: input, shape index: {}]
  %s5 = inlined_call_operand.vmem [shape: f32[8,128], index: 5, kind: output, shape index: {}]
  %s6 = sld [smem:[#allocation0]]
  $region30: #{tpgm_forward.3} parent=0
    _
  %s8 = ssub.s32 1, %s6
  %s9 = scalar_select 0, %s8, %s6
  // Predicated region
  $region2: #{tpgm_forward.3} parent=0 // pred_check
    _
  $region3: #{tpgm_forward.3} parent=0 // pred_check_branch
    %11 = sbr.rel (0) target = $region5
  $region4: #{tpgm_forward.3} parent=0 // pred_region
    _
  $region5: #{tpgm_forward.3} parent=0 // pred_fallthru
    _
  // Predicated region
  $region6: #{tpgm_forward.3} parent=0 // pred_check
    _
  $region7: #{tpgm_forward.3} parent=0 // pred_check_branch
    %13 = sbr.rel (0) target = $region9
  $region8: #{tpgm_forward.3} parent=0 // pred_region
    _
  $region9: #{tpgm_forward.3} parent=0 // pred_fallthru
    _
  // Predicated region
  $region10: #{tpgm_forward.3} parent=0 // pred_check
    _
  $region11: #{tpgm_forward.3} parent=0 // pred_check_branch
    %15 = sbr.rel (0) target = $region13
  $region12: #{tpgm_forward.3} parent=0 // pred_region
    _
  $region13: #{tpgm_forward.3} parent=0 // pred_fallthru
    _
  // Predicated region
  $region14: #{tpgm_forward.3} parent=0 // pred_check
    _
  $region15: #{tpgm_forward.3} parent=0 // pred_check_branch
    %17 = sbr.rel (0) target = $region17
  $region16: #{tpgm_forward.3} parent=0 // pred_region
    _
  $region17: #{tpgm_forward.3} parent=0 // pred_fallthru
    _
  // Predicated region
  $region18: #{tpgm_forward.3} parent=0 // pred_check
    _
  $region19: #{tpgm_forward.3} parent=0 // pred_check_branch
    %19 = sbr.rel (0) target = $region21
  $region20: #{tpgm_forward.3} parent=0 // pred_region
    _
  $region21: #{tpgm_forward.3} parent=0 // pred_fallthru
    _
  %v21 = vld [vmem:[%s0] sm:$0xf]
  %v22 = vld [vmem:[%s0 + $0x4] sm:$0xf]
  %v23 = vld [vmem:[%s0 + $0x8] sm:$0xf]
  %v24 = vld [vmem:[%s0 + $0xc] sm:$0xf]
  %v25 = vld [vmem:[%s0 + $0x10] sm:$0xf]
  %v26 = vld [vmem:[%s0 + $0x14] sm:$0xf]
  %v27 = vld [vmem:[%s0 + $0x18] sm:$0xf]
  %v28 = vld [vmem:[%s0 + $0x1c] sm:$0xf]
  %v29 = vld [vmem:[%s0 + $0x20] sm:$0xf]
  %v30 = vld [vmem:[%s0 + $0x24] sm:$0xf]
  %v31 = vld [vmem:[%s0 + $0x28] sm:$0xf]
  %v32 = vld [vmem:[%s0 + $0x2c] sm:$0xf]
  %v33 = vld [vmem:[%s0 + $0x30] sm:$0xf]
  %v34 = vld [vmem:[%s0 + $0x34] sm:$0xf]
  %v35 = vld [vmem:[%s0 + $0x38] sm:$0xf]
  %v36 = vld [vmem:[%s0 + $0x3c] sm:$0xf]
  %v37 = vld [vmem:[%s0 + $0x40] sm:$0xf]
  %v38 = vld [vmem:[%s0 + $0x44] sm:$0xf]
  %v39 = vld [vmem:[%s0 + $0x48] sm:$0xf]
  %v40 = vld [vmem:[%s0 + $0x4c] sm:$0xf]
  %v41 = vld [vmem:[%s0 + $0x50] sm:$0xf]
  %v42 = vld [vmem:[%s0 + $0x54] sm:$0xf]
  %v43 = vld [vmem:[%s0 + $0x58] sm:$0xf]
  %v44 = vld [vmem:[%s0 + $0x5c] sm:$0xf]
  %v45 = vld [vmem:[%s0 + $0x60] sm:$0xf]
  %v46 = vld [vmem:[%s0 + $0x64] sm:$0xf]
  %v47 = vld [vmem:[%s0 + $0x68] sm:$0xf]
  %v48 = vld [vmem:[%s0 + $0x6c] sm:$0xf]
  %v49 = vld [vmem:[%s0 + $0x70] sm:$0xf]
  %v50 = vld [vmem:[%s0 + $0x74] sm:$0xf]
  %v51 = vld [vmem:[%s0 + $0x78] sm:$0xf]
  %v52 = vld [vmem:[%s0 + $0x7c] sm:$0xf]
  %v53 = vld [vmem:[%s0 + $0x80] sm:$0xf]
  %v54 = vld [vmem:[%s0 + $0x84] sm:$0xf]
  %v55 = vld [vmem:[%s0 + $0x88] sm:$0xf]
  %v56 = vld [vmem:[%s0 + $0x8c] sm:$0xf]
  %v57 = vld [vmem:[%s0 + $0x90] sm:$0xf]
  %v58 = vld [vmem:[%s0 + $0x94] sm:$0xf]
  %v59 = vld [vmem:[%s0 + $0x98] sm:$0xf]
  %v60 = vld [vmem:[%s0 + $0x9c] sm:$0xf]
  %v61 = vld [vmem:[%s0 + $0xa0] sm:$0xf]
  %v62 = vld [vmem:[%s0 + $0xa4] sm:$0xf]
  %v63 = vld [vmem:[%s0 + $0xa8] sm:$0xf]
  %v64 = vld [vmem:[%s0 + $0xac] sm:$0xf]
  %v65 = vld [vmem:[%s0 + $0xb0] sm:$0xf]
  %v66 = vld [vmem:[%s0 + $0xb4] sm:$0xf]
  %v67 = vld [vmem:[%s0 + $0xb8] sm:$0xf]
  %v68 = vld [vmem:[%s0 + $0xbc] sm:$0xf]
  %v69 = vld [vmem:[%s0 + $0xc0] sm:$0xf]
  %v70 = vld [vmem:[%s0 + $0xc4] sm:$0xf]
  %v71 = vld [vmem:[%s0 + $0xc8] sm:$0xf]
  %v72 = vld [vmem:[%s0 + $0xcc] sm:$0xf]
  %v73 = vld [vmem:[%s0 + $0xd0] sm:$0xf]
  %v74 = vld [vmem:[%s0 + $0xd4] sm:$0xf]
  %v75 = vld [vmem:[%s0 + $0xd8] sm:$0xf]
  %v76 = vld [vmem:[%s0 + $0xdc] sm:$0xf]
  %v77 = vld [vmem:[%s0 + $0xe0] sm:$0xf]
  %v78 = vld [vmem:[%s0 + $0xe4] sm:$0xf]
  %v79 = vld [vmem:[%s0 + $0xe8] sm:$0xf]
  %v80 = vld [vmem:[%s0 + $0xec] sm:$0xf]
  %v81 = vld [vmem:[%s0 + $0xf0] sm:$0xf]
  %v82 = vld [vmem:[%s0 + $0xf4] sm:$0xf]
  %v83 = vld [vmem:[%s0 + $0xf8] sm:$0xf]
  %v84 = vld [vmem:[%s0 + $0xfc] sm:$0xf]
  %v85 = vld [vmem:[%s0 + $0x100] sm:$0xf]
  %v86 = vld [vmem:[%s0 + $0x104] sm:$0xf]
  %v87 = vld [vmem:[%s0 + $0x108] sm:$0xf]
  %v88 = vld [vmem:[%s0 + $0x10c] sm:$0xf]
  %v89 = vld [vmem:[%s0 + $0x110] sm:$0xf]
  %v90 = vld [vmem:[%s0 + $0x114] sm:$0xf]
  %v91 = vld [vmem:[%s0 + $0x118] sm:$0xf]
  %v92 = vld [vmem:[%s0 + $0x11c] sm:$0xf]
  %v93 = vld [vmem:[%s0 + $0x120] sm:$0xf]
  %v94 = vld [vmem:[%s0 + $0x124] sm:$0xf]
  %v95 = vld [vmem:[%s0 + $0x128] sm:$0xf]
  %v96 = vld [vmem:[%s0 + $0x12c] sm:$0xf]
  %v97 = vld [vmem:[%s0 + $0x130] sm:$0xf]
  %v98 = vld [vmem:[%s0 + $0x134] sm:$0xf]
  %v99 = vld [vmem:[%s0 + $0x138] sm:$0xf]
  %v100 = vld [vmem:[%s0 + $0x13c] sm:$0xf]
  %v101 = vld [vmem:[%s0 + $0x140] sm:$0xf]
  %v102 = vld [vmem:[%s0 + $0x144] sm:$0xf]
  %v103 = vld [vmem:[%s0 + $0x148] sm:$0xf]
  %v104 = vld [vmem:[%s0 + $0x14c] sm:$0xf]
  %v105 = vld [vmem:[%s0 + $0x150] sm:$0xf]
  %v106 = vld [vmem:[%s0 + $0x154] sm:$0xf]
  %v107 = vld [vmem:[%s0 + $0x158] sm:$0xf]
  %v108 = vld [vmem:[%s0 + $0x15c] sm:$0xf]
  %v109 = vld [vmem:[%s0 + $0x160] sm:$0xf]
  %v110 = vld [vmem:[%s0 + $0x164] sm:$0xf]
  %v111 = vld [vmem:[%s0 + $0x168] sm:$0xf]
  %v112 = vld [vmem:[%s0 + $0x16c] sm:$0xf]
  %v113 = vld [vmem:[%s0 + $0x170] sm:$0xf]
  %v114 = vld [vmem:[%s0 + $0x174] sm:$0xf]
  %v115 = vld [vmem:[%s0 + $0x178] sm:$0xf]
  %v116 = vld [vmem:[%s0 + $0x17c] sm:$0xf]
  %v117 = vld [vmem:[%s0 + $0x180] sm:$0xf]
  %v118 = vld [vmem:[%s0 + $0x184] sm:$0xf]
  %v119 = vld [vmem:[%s0 + $0x188] sm:$0xf]
  %v120 = vld [vmem:[%s0 + $0x18c] sm:$0xf]
  %v121 = vld [vmem:[%s0 + $0x190] sm:$0xf]
  %v122 = vld [vmem:[%s0 + $0x194] sm:$0xf]
  %v123 = vld [vmem:[%s0 + $0x198] sm:$0xf]
  %v124 = vld [vmem:[%s0 + $0x19c] sm:$0xf]
  %v125 = vld [vmem:[%s0 + $0x1a0] sm:$0xf]
  %v126 = vld [vmem:[%s0 + $0x1a4] sm:$0xf]
  %v127 = vld [vmem:[%s0 + $0x1a8] sm:$0xf]
  %v128 = vld [vmem:[%s0 + $0x1ac] sm:$0xf]
  %v129 = vld [vmem:[%s0 + $0x1b0] sm:$0xf]
  %v130 = vld [vmem:[%s0 + $0x1b4] sm:$0xf]
  %v131 = vld [vmem:[%s0 + $0x1b8] sm:$0xf]
  %v132 = vld [vmem:[%s0 + $0x1bc] sm:$0xf]
  %v133 = vld [vmem:[%s0 + $0x1c0] sm:$0xf]
  %v134 = vld [vmem:[%s0 + $0x1c4] sm:$0xf]
  %v135 = vld [vmem:[%s0 + $0x1c8] sm:$0xf]
  %v136 = vld [vmem:[%s0 + $0x1cc] sm:$0xf]
  %v137 = vld [vmem:[%s0 + $0x1d0] sm:$0xf]
  %v138 = vld [vmem:[%s0 + $0x1d4] sm:$0xf]
  %v139 = vld [vmem:[%s0 + $0x1d8] sm:$0xf]
  %v140 = vld [vmem:[%s0 + $0x1dc] sm:$0xf]
  %v141 = vld [vmem:[%s0 + $0x1e0] sm:$0xf]
  %v142 = vld [vmem:[%s0 + $0x1e4] sm:$0xf]
  %v143 = vld [vmem:[%s0 + $0x1e8] sm:$0xf]
  %v144 = vld [vmem:[%s0 + $0x1ec] sm:$0xf]
  %v145 = vld [vmem:[%s0 + $0x1f0] sm:$0xf]
  %v146 = vld [vmem:[%s0 + $0x1f4] sm:$0xf]
  %v147 = vld [vmem:[%s0 + $0x1f8] sm:$0xf]
  %v148 = vld [vmem:[%s0 + $0x1fc] sm:$0xf]
  %v149 = vld [vmem:[%s0 + $0x200] sm:$0xf]
  %v150 = vld [vmem:[%s0 + $0x204] sm:$0xf]
  %v151 = vld [vmem:[%s0 + $0x208] sm:$0xf]
  %v152 = vld [vmem:[%s0 + $0x20c] sm:$0xf]
  %v153 = vld [vmem:[%s0 + $0x210] sm:$0xf]
  %v154 = vld [vmem:[%s0 + $0x214] sm:$0xf]
  %v155 = vld [vmem:[%s0 + $0x218] sm:$0xf]
  %v156 = vld [vmem:[%s0 + $0x21c] sm:$0xf]
  %v157 = vld [vmem:[%s0 + $0x220] sm:$0xf]
  %v158 = vld [vmem:[%s0 + $0x224] sm:$0xf]
  %v159 = vld [vmem:[%s0 + $0x228] sm:$0xf]
  %v160 = vld [vmem:[%s0 + $0x22c] sm:$0xf]
  %v161 = vld [vmem:[%s0 + $0x230] sm:$0xf]
  %v162 = vld [vmem:[%s0 + $0x234] sm:$0xf]
  %v163 = vld [vmem:[%s0 + $0x238] sm:$0xf]
  %v164 = vld [vmem:[%s0 + $0x23c] sm:$0xf]
  %v165 = vld [vmem:[%s0 + $0x240] sm:$0xf]
  %v166 = vld [vmem:[%s0 + $0x244] sm:$0xf]
  %v167 = vld [vmem:[%s0 + $0x248] sm:$0xf]
  %v168 = vld [vmem:[%s0 + $0x24c] sm:$0xf]
  %v169 = vld [vmem:[%s0 + $0x250] sm:$0xf]
  %v170 = vld [vmem:[%s0 + $0x254] sm:$0xf]
  %v171 = vld [vmem:[%s0 + $0x258] sm:$0xf]
  %v172 = vld [vmem:[%s0 + $0x25c] sm:$0xf]
  %v173 = vld [vmem:[%s0 + $0x260] sm:$0xf]
  %v174 = vld [vmem:[%s0 + $0x264] sm:$0xf]
  %v175 = vld [vmem:[%s0 + $0x268] sm:$0xf]
  %v176 = vld [vmem:[%s0 + $0x26c] sm:$0xf]
  %v177 = vld [vmem:[%s0 + $0x270] sm:$0xf]
  %v178 = vld [vmem:[%s0 + $0x274] sm:$0xf]
  %v179 = vld [vmem:[%s0 + $0x278] sm:$0xf]
  %v180 = vld [vmem:[%s0 + $0x27c] sm:$0xf]
  %v181 = vld [vmem:[%s0 + $0x280] sm:$0xf]
  %v182 = vld [vmem:[%s0 + $0x284] sm:$0xf]
  %v183 = vld [vmem:[%s0 + $0x288] sm:$0xf]
  %v184 = vld [vmem:[%s0 + $0x28c] sm:$0xf]
  %v185 = vld [vmem:[%s0 + $0x290] sm:$0xf]
  %v186 = vld [vmem:[%s0 + $0x294] sm:$0xf]
  %v187 = vld [vmem:[%s0 + $0x298] sm:$0xf]
  %v188 = vld [vmem:[%s0 + $0x29c] sm:$0xf]
  %v189 = vld [vmem:[%s0 + $0x2a0] sm:$0xf]
  %v190 = vld [vmem:[%s0 + $0x2a4] sm:$0xf]
  %v191 = vld [vmem:[%s0 + $0x2a8] sm:$0xf]
  %v192 = vld [vmem:[%s0 + $0x2ac] sm:$0xf]
  %v193 = vld [vmem:[%s0 + $0x2b0] sm:$0xf]
  %v194 = vld [vmem:[%s0 + $0x2b4] sm:$0xf]
  %v195 = vld [vmem:[%s0 + $0x2b8] sm:$0xf]
  %v196 = vld [vmem:[%s0 + $0x2bc] sm:$0xf]
  %v197 = vld [vmem:[%s0 + $0x2c0] sm:$0xf]
  %v198 = vld [vmem:[%s0 + $0x2c4] sm:$0xf]
  %v199 = vld [vmem:[%s0 + $0x2c8] sm:$0xf]
  %v200 = vld [vmem:[%s0 + $0x2cc] sm:$0xf]
  %v201 = vld [vmem:[%s0 + $0x2d0] sm:$0xf]
  %v202 = vld [vmem:[%s0 + $0x2d4] sm:$0xf]
  %v203 = vld [vmem:[%s0 + $0x2d8] sm:$0xf]
  %v204 = vld [vmem:[%s0 + $0x2dc] sm:$0xf]
  %v205 = vld [vmem:[%s0 + $0x2e0] sm:$0xf]
  %v206 = vld [vmem:[%s0 + $0x2e4] sm:$0xf]
  %v207 = vld [vmem:[%s0 + $0x2e8] sm:$0xf]
  %v208 = vld [vmem:[%s0 + $0x2ec] sm:$0xf]
  %v209 = vld [vmem:[%s0 + $0x2f0] sm:$0xf]
  %v210 = vld [vmem:[%s0 + $0x2f4] sm:$0xf]
  %v211 = vld [vmem:[%s0 + $0x2f8] sm:$0xf]
  %v212 = vld [vmem:[%s0 + $0x2fc] sm:$0xf]
  %v213 = vld [vmem:[%s0 + $0x300] sm:$0xf]
  %v214 = vld [vmem:[%s0 + $0x304] sm:$0xf]
  %v215 = vld [vmem:[%s0 + $0x308] sm:$0xf]
  %v216 = vld [vmem:[%s0 + $0x30c] sm:$0xf]
  %v217 = vld [vmem:[%s0 + $0x310] sm:$0xf]
  %v218 = vld [vmem:[%s0 + $0x314] sm:$0xf]
  %v219 = vld [vmem:[%s0 + $0x318] sm:$0xf]
  %v220 = vld [vmem:[%s0 + $0x31c] sm:$0xf]
  %v221 = vld [vmem:[%s0 + $0x320] sm:$0xf]
  %v222 = vld [vmem:[%s0 + $0x324] sm:$0xf]
  %v223 = vld [vmem:[%s0 + $0x328] sm:$0xf]
  %v224 = vld [vmem:[%s0 + $0x32c] sm:$0xf]
  %v225 = vld [vmem:[%s0 + $0x330] sm:$0xf]
  %v226 = vld [vmem:[%s0 + $0x334] sm:$0xf]
  %v227 = vld [vmem:[%s0 + $0x338] sm:$0xf]
  %v228 = vld [vmem:[%s0 + $0x33c] sm:$0xf]
  %v229 = vld [vmem:[%s0 + $0x340] sm:$0xf]
  %v230 = vld [vmem:[%s0 + $0x344] sm:$0xf]
  %v231 = vld [vmem:[%s0 + $0x348] sm:$0xf]
  %v232 = vld [vmem:[%s0 + $0x34c] sm:$0xf]
  %v233 = vld [vmem:[%s0 + $0x350] sm:$0xf]
  %v234 = vld [vmem:[%s0 + $0x354] sm:$0xf]
  %v235 = vld [vmem:[%s0 + $0x358] sm:$0xf]
  %v236 = vld [vmem:[%s0 + $0x35c] sm:$0xf]
  %v237 = vld [vmem:[%s0 + $0x360] sm:$0xf]
  %v238 = vld [vmem:[%s0 + $0x364] sm:$0xf]
  %v239 = vld [vmem:[%s0 + $0x368] sm:$0xf]
  %v240 = vld [vmem:[%s0 + $0x36c] sm:$0xf]
  %v241 = vld [vmem:[%s0 + $0x370] sm:$0xf]
  %v242 = vld [vmem:[%s0 + $0x374] sm:$0xf]
  %v243 = vld [vmem:[%s0 + $0x378] sm:$0xf]
  %v244 = vld [vmem:[%s0 + $0x37c] sm:$0xf]
  %v245 = vld [vmem:[%s0 + $0x380] sm:$0xf]
  %v246 = vld [vmem:[%s0 + $0x384] sm:$0xf]
  %v247 = vld [vmem:[%s0 + $0x388] sm:$0xf]
  %v248 = vld [vmem:[%s0 + $0x38c] sm:$0xf]
  %v249 = vld [vmem:[%s0 + $0x390] sm:$0xf]
  %v250 = vld [vmem:[%s0 + $0x394] sm:$0xf]
  %v251 = vld [vmem:[%s0 + $0x398] sm:$0xf]
  %v252 = vld [vmem:[%s0 + $0x39c] sm:$0xf]
  %v253 = vld [vmem:[%s0 + $0x3a0] sm:$0xf]
  %v254 = vld [vmem:[%s0 + $0x3a4] sm:$0xf]
  %v255 = vld [vmem:[%s0 + $0x3a8] sm:$0xf]
  %v256 = vld [vmem:[%s0 + $0x3ac] sm:$0xf]
  %v257 = vld [vmem:[%s0 + $0x3b0] sm:$0xf]
  %v258 = vld [vmem:[%s0 + $0x3b4] sm:$0xf]
  %v259 = vld [vmem:[%s0 + $0x3b8] sm:$0xf]
  %v260 = vld [vmem:[%s0 + $0x3bc] sm:$0xf]
  %v261 = vld [vmem:[%s0 + $0x3c0] sm:$0xf]
  %v262 = vld [vmem:[%s0 + $0x3c4] sm:$0xf]
  %v263 = vld [vmem:[%s0 + $0x3c8] sm:$0xf]
  %v264 = vld [vmem:[%s0 + $0x3cc] sm:$0xf]
  %v265 = vld [vmem:[%s0 + $0x3d0] sm:$0xf]
  %v266 = vld [vmem:[%s0 + $0x3d4] sm:$0xf]
  %v267 = vld [vmem:[%s0 + $0x3d8] sm:$0xf]
  %v268 = vld [vmem:[%s0 + $0x3dc] sm:$0xf]
  %v269 = vld [vmem:[%s0 + $0x3e0] sm:$0xf]
  %v270 = vld [vmem:[%s0 + $0x3e4] sm:$0xf]
  %v271 = vld [vmem:[%s0 + $0x3e8] sm:$0xf]
  %v272 = vld [vmem:[%s0 + $0x3ec] sm:$0xf]
  %v273 = vld [vmem:[%s0 + $0x3f0] sm:$0xf]
  %v274 = vld [vmem:[%s0 + $0x3f4] sm:$0xf]
  %v275 = vld [vmem:[%s0 + $0x3f8] sm:$0xf]
  %v276 = vld [vmem:[%s0 + $0x3fc] sm:$0xf]
  %v277 = vld [vmem:[%s1] sm:$0xf]
  %v278 = vld [vmem:[%s1 + $0x4] sm:$0xf]
  %v279 = vld [vmem:[%s1 + $0x8] sm:$0xf]
  %v280 = vld [vmem:[%s1 + $0xc] sm:$0xf]
  %v281 = vld [vmem:[%s1 + $0x10] sm:$0x3]
  %v282 = vld [vmem:[%s2] sm:$0x1]
  %v284 = vlaneseq
  %v285 = vshrl.u32 %v284, 7
  %v286 = vsub.s32 0, %v285
  %v287 = vrot.slane %v282, %v286
  %v545 = vunpack.c.l.b16 %v21
  %v546 = vunpack.c.l.b16 %v22
  %v547 = vunpack.c.l.b16 %v23
  %v548 = vunpack.c.l.b16 %v24
  %v549 = vunpack.c.l.b16 %v25
  %v550 = vunpack.c.l.b16 %v26
  %v551 = vunpack.c.l.b16 %v27
  %v552 = vunpack.c.l.b16 %v28
  %v553 = vunpack.c.l.b16 %v29
  %v554 = vunpack.c.l.b16 %v30
  %v555 = vunpack.c.l.b16 %v31
  %v556 = vunpack.c.l.b16 %v32
  %v557 = vunpack.c.l.b16 %v33
  %v558 = vunpack.c.l.b16 %v34
  %v559 = vunpack.c.l.b16 %v35
  %v560 = vunpack.c.l.b16 %v36
  %v561 = vunpack.c.l.b16 %v37
  %v562 = vunpack.c.l.b16 %v38
  %v563 = vunpack.c.l.b16 %v39
  %v564 = vunpack.c.l.b16 %v40
  %v565 = vunpack.c.l.b16 %v41
  %v566 = vunpack.c.l.b16 %v42
  %v567 = vunpack.c.l.b16 %v43
  %v568 = vunpack.c.l.b16 %v44
  %v569 = vunpack.c.l.b16 %v45
  %v570 = vunpack.c.l.b16 %v46
  %v571 = vunpack.c.l.b16 %v47
  %v572 = vunpack.c.l.b16 %v48
  %v573 = vunpack.c.l.b16 %v49
  %v574 = vunpack.c.l.b16 %v50
  %v575 = vunpack.c.l.b16 %v51
  %v576 = vunpack.c.l.b16 %v52
  %v577 = vunpack.c.l.b16 %v53
  %v578 = vunpack.c.l.b16 %v54
  %v579 = vunpack.c.l.b16 %v55
  %v580 = vunpack.c.l.b16 %v56
  %v581 = vunpack.c.l.b16 %v57
  %v582 = vunpack.c.l.b16 %v58
  %v583 = vunpack.c.l.b16 %v59
  %v584 = vunpack.c.l.b16 %v60
  %v585 = vunpack.c.l.b16 %v61
  %v586 = vunpack.c.l.b16 %v62
  %v587 = vunpack.c.l.b16 %v63
  %v588 = vunpack.c.l.b16 %v64
  %v589 = vunpack.c.l.b16 %v65
  %v590 = vunpack.c.l.b16 %v66
  %v591 = vunpack.c.l.b16 %v67
  %v592 = vunpack.c.l.b16 %v68
  %v593 = vunpack.c.l.b16 %v69
  %v594 = vunpack.c.l.b16 %v70
  %v595 = vunpack.c.l.b16 %v71
  %v596 = vunpack.c.l.b16 %v72
  %v597 = vunpack.c.l.b16 %v73
  %v598 = vunpack.c.l.b16 %v74
  %v599 = vunpack.c.l.b16 %v75
  %v600 = vunpack.c.l.b16 %v76
  %v601 = vunpack.c.l.b16 %v77
  %v602 = vunpack.c.l.b16 %v78
  %v603 = vunpack.c.l.b16 %v79
  %v604 = vunpack.c.l.b16 %v80
  %v605 = vunpack.c.l.b16 %v81
  %v606 = vunpack.c.l.b16 %v82
  %v607 = vunpack.c.l.b16 %v83
  %v608 = vunpack.c.l.b16 %v84
  %v609 = vunpack.c.l.b16 %v85
  %v610 = vunpack.c.l.b16 %v86
  %v611 = vunpack.c.l.b16 %v87
  %v612 = vunpack.c.l.b16 %v88
  %v613 = vunpack.c.l.b16 %v89
  %v614 = vunpack.c.l.b16 %v90
  %v615 = vunpack.c.l.b16 %v91
  %v616 = vunpack.c.l.b16 %v92
  %v617 = vunpack.c.l.b16 %v93
  %v618 = vunpack.c.l.b16 %v94
  %v619 = vunpack.c.l.b16 %v95
  %v620 = vunpack.c.l.b16 %v96
  %v621 = vunpack.c.l.b16 %v97
  %v622 = vunpack.c.l.b16 %v98
  %v623 = vunpack.c.l.b16 %v99
  %v624 = vunpack.c.l.b16 %v100
  %v625 = vunpack.c.l.b16 %v101
  %v626 = vunpack.c.l.b16 %v102
  %v627 = vunpack.c.l.b16 %v103
  %v628 = vunpack.c.l.b16 %v104
  %v629 = vunpack.c.l.b16 %v105
  %v630 = vunpack.c.l.b16 %v106
  %v631 = vunpack.c.l.b16 %v107
  %v632 = vunpack.c.l.b16 %v108
  %v633 = vunpack.c.l.b16 %v109
  %v634 = vunpack.c.l.b16 %v110
  %v635 = vunpack.c.l.b16 %v111
  %v636 = vunpack.c.l.b16 %v112
  %v637 = vunpack.c.l.b16 %v113
  %v638 = vunpack.c.l.b16 %v114
  %v639 = vunpack.c.l.b16 %v115
  %v640 = vunpack.c.l.b16 %v116
  %v641 = vunpack.c.l.b16 %v117
  %v642 = vunpack.c.l.b16 %v118
  %v643 = vunpack.c.l.b16 %v119
  %v644 = vunpack.c.l.b16 %v120
  %v645 = vunpack.c.l.b16 %v121
  %v646 = vunpack.c.l.b16 %v122
  %v647 = vunpack.c.l.b16 %v123
  %v648 = vunpack.c.l.b16 %v124
  %v649 = vunpack.c.l.b16 %v125
  %v650 = vunpack.c.l.b16 %v126
  %v651 = vunpack.c.l.b16 %v127
  %v652 = vunpack.c.l.b16 %v128
  %v653 = vunpack.c.l.b16 %v129
  %v654 = vunpack.c.l.b16 %v130
  %v655 = vunpack.c.l.b16 %v131
  %v656 = vunpack.c.l.b16 %v132
  %v657 = vunpack.c.l.b16 %v133
  %v658 = vunpack.c.l.b16 %v134
  %v659 = vunpack.c.l.b16 %v135
  %v660 = vunpack.c.l.b16 %v136
  %v661 = vunpack.c.l.b16 %v137
  %v662 = vunpack.c.l.b16 %v138
  %v663 = vunpack.c.l.b16 %v139
  %v664 = vunpack.c.l.b16 %v140
  %v665 = vunpack.c.l.b16 %v141
  %v666 = vunpack.c.l.b16 %v142
  %v667 = vunpack.c.l.b16 %v143
  %v668 = vunpack.c.l.b16 %v144
  %v669 = vunpack.c.l.b16 %v145
  %v670 = vunpack.c.l.b16 %v146
  %v671 = vunpack.c.l.b16 %v147
  %v672 = vunpack.c.l.b16 %v148
  %v673 = vunpack.c.l.b16 %v149
  %v674 = vunpack.c.l.b16 %v150
  %v675 = vunpack.c.l.b16 %v151
  %v676 = vunpack.c.l.b16 %v152
  %v677 = vunpack.c.l.b16 %v153
  %v678 = vunpack.c.l.b16 %v154
  %v679 = vunpack.c.l.b16 %v155
  %v680 = vunpack.c.l.b16 %v156
  %v681 = vunpack.c.l.b16 %v157
  %v682 = vunpack.c.l.b16 %v158
  %v683 = vunpack.c.l.b16 %v159
  %v684 = vunpack.c.l.b16 %v160
  %v685 = vunpack.c.l.b16 %v161
  %v686 = vunpack.c.l.b16 %v162
  %v687 = vunpack.c.l.b16 %v163
  %v688 = vunpack.c.l.b16 %v164
  %v689 = vunpack.c.l.b16 %v165
  %v690 = vunpack.c.l.b16 %v166
  %v691 = vunpack.c.l.b16 %v167
  %v692 = vunpack.c.l.b16 %v168
  %v693 = vunpack.c.l.b16 %v169
  %v694 = vunpack.c.l.b16 %v170
  %v695 = vunpack.c.l.b16 %v171
  %v696 = vunpack.c.l.b16 %v172
  %v697 = vunpack.c.l.b16 %v173
  %v698 = vunpack.c.l.b16 %v174
  %v699 = vunpack.c.l.b16 %v175
  %v700 = vunpack.c.l.b16 %v176
  %v701 = vunpack.c.l.b16 %v177
  %v702 = vunpack.c.l.b16 %v178
  %v703 = vunpack.c.l.b16 %v179
  %v704 = vunpack.c.l.b16 %v180
  %v705 = vunpack.c.l.b16 %v181
  %v706 = vunpack.c.l.b16 %v182
  %v707 = vunpack.c.l.b16 %v183
  %v708 = vunpack.c.l.b16 %v184
  %v709 = vunpack.c.l.b16 %v185
  %v710 = vunpack.c.l.b16 %v186
  %v711 = vunpack.c.l.b16 %v187
  %v712 = vunpack.c.l.b16 %v188
  %v713 = vunpack.c.l.b16 %v189
  %v714 = vunpack.c.l.b16 %v190
  %v715 = vunpack.c.l.b16 %v191
  %v716 = vunpack.c.l.b16 %v192
  %v717 = vunpack.c.l.b16 %v193
  %v718 = vunpack.c.l.b16 %v194
  %v719 = vunpack.c.l.b16 %v195
  %v720 = vunpack.c.l.b16 %v196
  %v721 = vunpack.c.l.b16 %v197
  %v722 = vunpack.c.l.b16 %v198
  %v723 = vunpack.c.l.b16 %v199
  %v724 = vunpack.c.l.b16 %v200
  %v725 = vunpack.c.l.b16 %v201
  %v726 = vunpack.c.l.b16 %v202
  %v727 = vunpack.c.l.b16 %v203
  %v728 = vunpack.c.l.b16 %v204
  %v729 = vunpack.c.l.b16 %v205
  %v730 = vunpack.c.l.b16 %v206
  %v731 = vunpack.c.l.b16 %v207
  %v732 = vunpack.c.l.b16 %v208
  %v733 = vunpack.c.l.b16 %v209
  %v734 = vunpack.c.l.b16 %v210
  %v735 = vunpack.c.l.b16 %v211
  %v736 = vunpack.c.l.b16 %v212
  %v737 = vunpack.c.l.b16 %v213
  %v738 = vunpack.c.l.b16 %v214
  %v739 = vunpack.c.l.b16 %v215
  %v740 = vunpack.c.l.b16 %v216
  %v741 = vunpack.c.l.b16 %v217
  %v742 = vunpack.c.l.b16 %v218
  %v743 = vunpack.c.l.b16 %v219
  %v744 = vunpack.c.l.b16 %v220
  %v745 = vunpack.c.l.b16 %v221
  %v746 = vunpack.c.l.b16 %v222
  %v747 = vunpack.c.l.b16 %v223
  %v748 = vunpack.c.l.b16 %v224
  %v749 = vunpack.c.l.b16 %v225
  %v750 = vunpack.c.l.b16 %v226
  %v751 = vunpack.c.l.b16 %v227
  %v752 = vunpack.c.l.b16 %v228
  %v753 = vunpack.c.l.b16 %v229
  %v754 = vunpack.c.l.b16 %v230
  %v755 = vunpack.c.l.b16 %v231
  %v756 = vunpack.c.l.b16 %v232
  %v757 = vunpack.c.l.b16 %v233
  %v758 = vunpack.c.l.b16 %v234
  %v759 = vunpack.c.l.b16 %v235
  %v760 = vunpack.c.l.b16 %v236
  %v761 = vunpack.c.l.b16 %v237
  %v762 = vunpack.c.l.b16 %v238
  %v763 = vunpack.c.l.b16 %v239
  %v764 = vunpack.c.l.b16 %v240
  %v765 = vunpack.c.l.b16 %v241
  %v766 = vunpack.c.l.b16 %v242
  %v767 = vunpack.c.l.b16 %v243
  %v768 = vunpack.c.l.b16 %v244
  %v769 = vunpack.c.l.b16 %v245
  %v770 = vunpack.c.l.b16 %v246
  %v771 = vunpack.c.l.b16 %v247
  %v772 = vunpack.c.l.b16 %v248
  %v773 = vunpack.c.l.b16 %v249
  %v774 = vunpack.c.l.b16 %v250
  %v775 = vunpack.c.l.b16 %v251
  %v776 = vunpack.c.l.b16 %v252
  %v777 = vunpack.c.l.b16 %v253
  %v778 = vunpack.c.l.b16 %v254
  %v779 = vunpack.c.l.b16 %v255
  %v780 = vunpack.c.l.b16 %v256
  %v781 = vunpack.c.l.b16 %v257
  %v782 = vunpack.c.l.b16 %v258
  %v783 = vunpack.c.l.b16 %v259
  %v784 = vunpack.c.l.b16 %v260
  %v785 = vunpack.c.l.b16 %v261
  %v786 = vunpack.c.l.b16 %v262
  %v787 = vunpack.c.l.b16 %v263
  %v788 = vunpack.c.l.b16 %v264
  %v789 = vunpack.c.l.b16 %v265
  %v790 = vunpack.c.l.b16 %v266
  %v791 = vunpack.c.l.b16 %v267
  %v792 = vunpack.c.l.b16 %v268
  %v793 = vunpack.c.l.b16 %v269
  %v794 = vunpack.c.l.b16 %v270
  %v795 = vunpack.c.l.b16 %v271
  %v796 = vunpack.c.l.b16 %v272
  %v797 = vunpack.c.l.b16 %v273
  %v798 = vunpack.c.l.b16 %v274
  %v799 = vunpack.c.l.b16 %v275
  %v800 = vunpack.c.l.b16 %v276
  %v801 = vpack.c.b16 %v546, %v545
  %v802 = vpack.c.b16 %v548, %v547
  %v803 = vpack.c.b16 %v550, %v549
  %v804 = vpack.c.b16 %v552, %v551
  %v805 = vpack.c.b16 %v554, %v553
  %v806 = vpack.c.b16 %v556, %v555
  %v807 = vpack.c.b16 %v558, %v557
  %v808 = vpack.c.b16 %v560, %v559
  %v809 = vpack.c.b16 %v562, %v561
  %v810 = vpack.c.b16 %v564, %v563
  %v811 = vpack.c.b16 %v566, %v565
  %v812 = vpack.c.b16 %v568, %v567
  %v813 = vpack.c.b16 %v570, %v569
  %v814 = vpack.c.b16 %v572, %v571
  %v815 = vpack.c.b16 %v574, %v573
  %v816 = vpack.c.b16 %v576, %v575
  %v817 = vpack.c.b16 %v578, %v577
  %v818 = vpack.c.b16 %v580, %v579
  %v819 = vpack.c.b16 %v582, %v581
  %v820 = vpack.c.b16 %v584, %v583
  %v821 = vpack.c.b16 %v586, %v585
  %v822 = vpack.c.b16 %v588, %v587
  %v823 = vpack.c.b16 %v590, %v589
  %v824 = vpack.c.b16 %v592, %v591
  %v825 = vpack.c.b16 %v594, %v593
  %v826 = vpack.c.b16 %v596, %v595
  %v827 = vpack.c.b16 %v598, %v597
  %v828 = vpack.c.b16 %v600, %v599
  %v829 = vpack.c.b16 %v602, %v601
  %v830 = vpack.c.b16 %v604, %v603
  %v831 = vpack.c.b16 %v606, %v605
  %v832 = vpack.c.b16 %v608, %v607
  %v833 = vpack.c.b16 %v610, %v609
  %v834 = vpack.c.b16 %v612, %v611
  %v835 = vpack.c.b16 %v614, %v613
  %v836 = vpack.c.b16 %v616, %v615
  %v837 = vpack.c.b16 %v618, %v617
  %v838 = vpack.c.b16 %v620, %v619
  %v839 = vpack.c.b16 %v622, %v621
  %v840 = vpack.c.b16 %v624, %v623
  %v841 = vpack.c.b16 %v626, %v625
  %v842 = vpack.c.b16 %v628, %v627
  %v843 = vpack.c.b16 %v630, %v629
  %v844 = vpack.c.b16 %v632, %v631
  %v845 = vpack.c.b16 %v634, %v633
  %v846 = vpack.c.b16 %v636, %v635
  %v847 = vpack.c.b16 %v638, %v637
  %v848 = vpack.c.b16 %v640, %v639
  %v849 = vpack.c.b16 %v642, %v641
  %v850 = vpack.c.b16 %v644, %v643
  %v851 = vpack.c.b16 %v646, %v645
  %v852 = vpack.c.b16 %v648, %v647
  %v853 = vpack.c.b16 %v650, %v649
  %v854 = vpack.c.b16 %v652, %v651
  %v855 = vpack.c.b16 %v654, %v653
  %v856 = vpack.c.b16 %v656, %v655
  %v857 = vpack.c.b16 %v658, %v657
  %v858 = vpack.c.b16 %v660, %v659
  %v859 = vpack.c.b16 %v662, %v661
  %v860 = vpack.c.b16 %v664, %v663
  %v861 = vpack.c.b16 %v666, %v665
  %v862 = vpack.c.b16 %v668, %v667
  %v863 = vpack.c.b16 %v670, %v669
  %v864 = vpack.c.b16 %v672, %v671
  %v865 = vpack.c.b16 %v674, %v673
  %v866 = vpack.c.b16 %v676, %v675
  %v867 = vpack.c.b16 %v678, %v677
  %v868 = vpack.c.b16 %v680, %v679
  %v869 = vpack.c.b16 %v682, %v681
  %v870 = vpack.c.b16 %v684, %v683
  %v871 = vpack.c.b16 %v686, %v685
  %v872 = vpack.c.b16 %v688, %v687
  %v873 = vpack.c.b16 %v690, %v689
  %v874 = vpack.c.b16 %v692, %v691
  %v875 = vpack.c.b16 %v694, %v693
  %v876 = vpack.c.b16 %v696, %v695
  %v877 = vpack.c.b16 %v698, %v697
  %v878 = vpack.c.b16 %v700, %v699
  %v879 = vpack.c.b16 %v702, %v701
  %v880 = vpack.c.b16 %v704, %v703
  %v881 = vpack.c.b16 %v706, %v705
  %v882 = vpack.c.b16 %v708, %v707
  %v883 = vpack.c.b16 %v710, %v709
  %v884 = vpack.c.b16 %v712, %v711
  %v885 = vpack.c.b16 %v714, %v713
  %v886 = vpack.c.b16 %v716, %v715
  %v887 = vpack.c.b16 %v718, %v717
  %v888 = vpack.c.b16 %v720, %v719
  %v889 = vpack.c.b16 %v722, %v721
  %v890 = vpack.c.b16 %v724, %v723
  %v891 = vpack.c.b16 %v726, %v725
  %v892 = vpack.c.b16 %v728, %v727
  %v893 = vpack.c.b16 %v730, %v729
  %v894 = vpack.c.b16 %v732, %v731
  %v895 = vpack.c.b16 %v734, %v733
  %v896 = vpack.c.b16 %v736, %v735
  %v897 = vpack.c.b16 %v738, %v737
  %v898 = vpack.c.b16 %v740, %v739
  %v899 = vpack.c.b16 %v742, %v741
  %v900 = vpack.c.b16 %v744, %v743
  %v901 = vpack.c.b16 %v746, %v745
  %v902 = vpack.c.b16 %v748, %v747
  %v903 = vpack.c.b16 %v750, %v749
  %v904 = vpack.c.b16 %v752, %v751
  %v905 = vpack.c.b16 %v754, %v753
  %v906 = vpack.c.b16 %v756, %v755
  %v907 = vpack.c.b16 %v758, %v757
  %v908 = vpack.c.b16 %v760, %v759
  %v909 = vpack.c.b16 %v762, %v761
  %v910 = vpack.c.b16 %v764, %v763
  %v911 = vpack.c.b16 %v766, %v765
  %v912 = vpack.c.b16 %v768, %v767
  %v913 = vpack.c.b16 %v770, %v769
  %v914 = vpack.c.b16 %v772, %v771
  %v915 = vpack.c.b16 %v774, %v773
  %v916 = vpack.c.b16 %v776, %v775
  %v917 = vpack.c.b16 %v778, %v777
  %v918 = vpack.c.b16 %v780, %v779
  %v919 = vpack.c.b16 %v782, %v781
  %v920 = vpack.c.b16 %v784, %v783
  %v921 = vpack.c.b16 %v786, %v785
  %v922 = vpack.c.b16 %v788, %v787
  %v923 = vpack.c.b16 %v790, %v789
  %v924 = vpack.c.b16 %v792, %v791
  %v925 = vpack.c.b16 %v794, %v793
  %v926 = vpack.c.b16 %v796, %v795
  %v927 = vpack.c.b16 %v798, %v797
  %v928 = vpack.c.b16 %v800, %v799
  %v934 = vunpack.c.l.b16 %v277
  %v935 = vunpack.c.l.b16 %v278
  %v936 = vunpack.c.l.b16 %v279
  %v937 = vunpack.c.l.b16 %v280
  %v938 = vunpack.c.l.b16 %v281
  %v939 = vpack.c.b16 %v935, %v934
  %v940 = vpack.c.b16 %v937, %v936
  %v941 = vpack.c.b16 %v938, %v938
  %vm944 = vcmask 293888
  %v946 = vsel %vm944, %v801, 0
  %v949 = vsel %vm944, %v802, 0
  %v952 = vsel %vm944, %v803, 0
  %v955 = vsel %vm944, %v804, 0
  %v958 = vsel %vm944, %v805, 0
  %v961 = vsel %vm944, %v806, 0
  %v964 = vsel %vm944, %v807, 0
  %v967 = vsel %vm944, %v808, 0
  %v970 = vsel %vm944, %v809, 0
  %v973 = vsel %vm944, %v810, 0
  %v976 = vsel %vm944, %v811, 0
  %v979 = vsel %vm944, %v812, 0
  %v982 = vsel %vm944, %v813, 0
  %v985 = vsel %vm944, %v814, 0
  %v988 = vsel %vm944, %v815, 0
  %v991 = vsel %vm944, %v816, 0
  %v994 = vsel %vm944, %v817, 0
  %v997 = vsel %vm944, %v818, 0
  %v1000 = vsel %vm944, %v819, 0
  %v1003 = vsel %vm944, %v820, 0
  %v1006 = vsel %vm944, %v821, 0
  %v1009 = vsel %vm944, %v822, 0
  %v1012 = vsel %vm944, %v823, 0
  %v1015 = vsel %vm944, %v824, 0
  %v1018 = vsel %vm944, %v825, 0
  %v1021 = vsel %vm944, %v826, 0
  %v1024 = vsel %vm944, %v827, 0
  %v1027 = vsel %vm944, %v828, 0
  %v1030 = vsel %vm944, %v829, 0
  %v1033 = vsel %vm944, %v830, 0
  %v1036 = vsel %vm944, %v831, 0
  %v1039 = vsel %vm944, %v832, 0
  %v1042 = vsel %vm944, %v833, 0
  %v1045 = vsel %vm944, %v834, 0
  %v1048 = vsel %vm944, %v835, 0
  %v1051 = vsel %vm944, %v836, 0
  %v1054 = vsel %vm944, %v837, 0
  %v1057 = vsel %vm944, %v838, 0
  %v1060 = vsel %vm944, %v839, 0
  %v1063 = vsel %vm944, %v840, 0
  %v1066 = vsel %vm944, %v841, 0
  %v1069 = vsel %vm944, %v842, 0
  %v1072 = vsel %vm944, %v843, 0
  %v1075 = vsel %vm944, %v844, 0
  %v1078 = vsel %vm944, %v845, 0
  %v1081 = vsel %vm944, %v846, 0
  %v1084 = vsel %vm944, %v847, 0
  %v1087 = vsel %vm944, %v848, 0
  %v1090 = vsel %vm944, %v849, 0
  %v1093 = vsel %vm944, %v850, 0
  %v1096 = vsel %vm944, %v851, 0
  %v1099 = vsel %vm944, %v852, 0
  %v1102 = vsel %vm944, %v853, 0
  %v1105 = vsel %vm944, %v854, 0
  %v1108 = vsel %vm944, %v855, 0
  %v1111 = vsel %vm944, %v856, 0
  %v1114 = vsel %vm944, %v857, 0
  %v1117 = vsel %vm944, %v858, 0
  %v1120 = vsel %vm944, %v859, 0
  %v1123 = vsel %vm944, %v860, 0
  %v1126 = vsel %vm944, %v861, 0
  %v1129 = vsel %vm944, %v862, 0
  %v1132 = vsel %vm944, %v863, 0
  %v1135 = vsel %vm944, %v864, 0
  %v1138 = vsel %vm944, %v865, 0
  %v1141 = vsel %vm944, %v866, 0
  %v1144 = vsel %vm944, %v867, 0
  %v1147 = vsel %vm944, %v868, 0
  %v1150 = vsel %vm944, %v869, 0
  %v1153 = vsel %vm944, %v870, 0
  %v1156 = vsel %vm944, %v871, 0
  %v1159 = vsel %vm944, %v872, 0
  %v1162 = vsel %vm944, %v873, 0
  %v1165 = vsel %vm944, %v874, 0
  %v1168 = vsel %vm944, %v875, 0
  %v1171 = vsel %vm944, %v876, 0
  %v1174 = vsel %vm944, %v877, 0
  %v1177 = vsel %vm944, %v878, 0
  %v1180 = vsel %vm944, %v879, 0
  %v1183 = vsel %vm944, %v880, 0
  %v1186 = vsel %vm944, %v881, 0
  %v1189 = vsel %vm944, %v882, 0
  %v1192 = vsel %vm944, %v883, 0
  %v1195 = vsel %vm944, %v884, 0
  %v1198 = vsel %vm944, %v885, 0
  %v1201 = vsel %vm944, %v886, 0
  %v1204 = vsel %vm944, %v887, 0
  %v1207 = vsel %vm944, %v888, 0
  %v1210 = vsel %vm944, %v889, 0
  %v1213 = vsel %vm944, %v890, 0
  %v1216 = vsel %vm944, %v891, 0
  %v1219 = vsel %vm944, %v892, 0
  %v1222 = vsel %vm944, %v893, 0
  %v1225 = vsel %vm944, %v894, 0
  %v1228 = vsel %vm944, %v895, 0
  %v1231 = vsel %vm944, %v896, 0
  %v1234 = vsel %vm944, %v897, 0
  %v1237 = vsel %vm944, %v898, 0
  %v1240 = vsel %vm944, %v899, 0
  %v1243 = vsel %vm944, %v900, 0
  %v1246 = vsel %vm944, %v901, 0
  %v1249 = vsel %vm944, %v902, 0
  %v1252 = vsel %vm944, %v903, 0
  %v1255 = vsel %vm944, %v904, 0
  %v1258 = vsel %vm944, %v905, 0
  %v1261 = vsel %vm944, %v906, 0
  %v1264 = vsel %vm944, %v907, 0
  %v1267 = vsel %vm944, %v908, 0
  %v1270 = vsel %vm944, %v909, 0
  %v1273 = vsel %vm944, %v910, 0
  %v1276 = vsel %vm944, %v911, 0
  %v1279 = vsel %vm944, %v912, 0
  %v1282 = vsel %vm944, %v913, 0
  %v1285 = vsel %vm944, %v914, 0
  %v1288 = vsel %vm944, %v915, 0
  %v1291 = vsel %vm944, %v916, 0
  %v1294 = vsel %vm944, %v917, 0
  %v1297 = vsel %vm944, %v918, 0
  %v1300 = vsel %vm944, %v919, 0
  %v1303 = vsel %vm944, %v920, 0
  %v1306 = vsel %vm944, %v921, 0
  %v1309 = vsel %vm944, %v922, 0
  %v1312 = vsel %vm944, %v923, 0
  %v1315 = vsel %vm944, %v924, 0
  %v1318 = vsel %vm944, %v925, 0
  %v1321 = vsel %vm944, %v926, 0
  %v1324 = vsel %vm944, %v927, 0
  %v1327 = vsel %vm944, %v928, 0
  %vm1329 = vcmask 1041408
  %v1331 = vsel %vm1329, %v941, 0
  %1333 = vmatprep.subr.bf16.mxu0 0
  %1334 = vmatpush1.bf16.msra.mxu0 0
  %1335 = vmatprep.subr.bf16.mxu0 0
  %1336 = vmatpush1.bf16.msra.mxu0 0
  %1337 = vmatprep.subr.bf16.mxu0 0
  %1338 = vmatpush1.bf16.msra.mxu0 0
  %1339 = vmatprep.subr.bf16.mxu0 0
  %1340 = vmatpush1.bf16.msra.mxu0 0
  %1341 = vmatprep.subr.bf16.mxu0 0
  %1342 = vmatpush1.bf16.msra.mxu0 0
  %1343 = vmatprep.subr.bf16.mxu0 0
  %1344 = vmatpush1.bf16.msra.mxu0 %v1331
  %1345 = vmatprep.subr.bf16.mxu0 0
  %1346 = vmatpush1.bf16.msra.mxu0 %v940
  %1347 = vmatprep.subr.bf16.mxu0 0
  %1348 = vmatpush1.bf16.msra.mxu0 %v939
  %1349 = vmatprep.subr.bf16.mxu0 0
  %1350 = vmatpush2.bf16.msra.mxu0 0
  %1351 = vmatprep.subr.bf16.mxu0 0
  %1352 = vmatpush2.bf16.msra.mxu0 0
  %1353 = vmatprep.subr.bf16.mxu0 0
  %1354 = vmatpush2.bf16.msra.mxu0 0
  %1355 = vmatprep.subr.bf16.mxu0 0
  %1356 = vmatpush2.bf16.msra.mxu0 0
  %1357 = vmatprep.subr.bf16.mxu0 0
  %1358 = vmatpush2.bf16.msra.mxu0 0
  %1359 = vmatprep.subr.bf16.mxu0 0
  %1360 = vmatpush2.bf16.msra.mxu0 0
  %1361 = vmatprep.subr.bf16.mxu0 0
  %1362 = vmatpush2.bf16.msra.mxu0 0
  %1363 = vmatprep.subr.bf16.mxu0 0
  %1364 = vmatpush2.bf16.msra.mxu0 0
  %1365 = vmatprep.mubr.bf16.mxu0 0
  %1366 = vmatmul.mubr.bf16.gmra.mxu0 %v946
  %v1367 = vpop.f32.mrf.mxu0
  %v1368 = vadd.f32 %v287, %v1367
  %v1369 = vpop.f32.mrf.mxu0
  %v1370 = vpop.f32.mrf.mxu0
  %v1371 = vadd.f32 %v287, %v1370
  %v1372 = vpop.f32.mrf.mxu0
  %1373 = vmatprep.mubr.bf16.mxu0 0
  %1374 = vmatmul.mubr.bf16.gmra.mxu0 %v949
  %v1375 = vpop.f32.mrf.mxu0
  %v1376 = vadd.f32 %v287, %v1375
  %v1377 = vpop.f32.mrf.mxu0
  %v1378 = vpop.f32.mrf.mxu0
  %v1379 = vadd.f32 %v287, %v1378
  %v1380 = vpop.f32.mrf.mxu0
  %1381 = vmatprep.mubr.bf16.mxu0 0
  %1382 = vmatmul.mubr.bf16.gmra.mxu0 %v952
  %v1383 = vpop.f32.mrf.mxu0
  %v1384 = vadd.f32 %v287, %v1383
  %v1385 = vpop.f32.mrf.mxu0
  %v1386 = vpop.f32.mrf.mxu0
  %v1387 = vadd.f32 %v287, %v1386
  %v1388 = vpop.f32.mrf.mxu0
  %1389 = vmatprep.mubr.bf16.mxu0 0
  %1390 = vmatmul.mubr.bf16.gmra.mxu0 %v955
  %v1391 = vpop.f32.mrf.mxu0
  %v1392 = vadd.f32 %v287, %v1391
  %v1393 = vpop.f32.mrf.mxu0
  %v1394 = vpop.f32.mrf.mxu0
  %v1395 = vadd.f32 %v287, %v1394
  %v1396 = vpop.f32.mrf.mxu0
  %1397 = vmatprep.mubr.bf16.mxu0 0
  %1398 = vmatmul.mubr.bf16.gmra.mxu0 %v958
  %v1399 = vpop.f32.mrf.mxu0
  %v1400 = vadd.f32 %v287, %v1399
  %v1401 = vpop.f32.mrf.mxu0
  %v1402 = vpop.f32.mrf.mxu0
  %v1403 = vadd.f32 %v287, %v1402
  %v1404 = vpop.f32.mrf.mxu0
  %1405 = vmatprep.mubr.bf16.mxu0 0
  %1406 = vmatmul.mubr.bf16.gmra.mxu0 %v961
  %v1407 = vpop.f32.mrf.mxu0
  %v1408 = vadd.f32 %v287, %v1407
  %v1409 = vpop.f32.mrf.mxu0
  %v1410 = vpop.f32.mrf.mxu0
  %v1411 = vadd.f32 %v287, %v1410
  %v1412 = vpop.f32.mrf.mxu0
  %1413 = vmatprep.mubr.bf16.mxu0 0
  %1414 = vmatmul.mubr.bf16.gmra.mxu0 %v964
  %v1415 = vpop.f32.mrf.mxu0
  %v1416 = vadd.f32 %v287, %v1415
  %v1417 = vpop.f32.mrf.mxu0
  %v1418 = vpop.f32.mrf.mxu0
  %v1419 = vadd.f32 %v287, %v1418
  %v1420 = vpop.f32.mrf.mxu0
  %1421 = vmatprep.mubr.bf16.mxu0 0
  %1422 = vmatmul.mubr.bf16.gmra.mxu0 %v967
  %v1423 = vpop.f32.mrf.mxu0
  %v1424 = vadd.f32 %v287, %v1423
  %v1425 = vpop.f32.mrf.mxu0
  %v1426 = vpop.f32.mrf.mxu0
  %v1427 = vadd.f32 %v287, %v1426
  %v1428 = vpop.f32.mrf.mxu0
  %1429 = vmatprep.mubr.bf16.mxu0 0
  %1430 = vmatmul.mubr.bf16.gmra.mxu0 %v970
  %v1431 = vpop.f32.mrf.mxu0
  %v1432 = vadd.f32 %v287, %v1431
  %v1433 = vpop.f32.mrf.mxu0
  %v1434 = vpop.f32.mrf.mxu0
  %v1435 = vadd.f32 %v287, %v1434
  %v1436 = vpop.f32.mrf.mxu0
  %1437 = vmatprep.mubr.bf16.mxu0 0
  %1438 = vmatmul.mubr.bf16.gmra.mxu0 %v973
  %v1439 = vpop.f32.mrf.mxu0
  %v1440 = vadd.f32 %v287, %v1439
  %v1441 = vpop.f32.mrf.mxu0
  %v1442 = vpop.f32.mrf.mxu0
  %v1443 = vadd.f32 %v287, %v1442
  %v1444 = vpop.f32.mrf.mxu0
  %1445 = vmatprep.mubr.bf16.mxu0 0
  %1446 = vmatmul.mubr.bf16.gmra.mxu0 %v976
  %v1447 = vpop.f32.mrf.mxu0
  %v1448 = vadd.f32 %v287, %v1447
  %v1449 = vpop.f32.mrf.mxu0
  %v1450 = vpop.f32.mrf.mxu0
  %v1451 = vadd.f32 %v287, %v1450
  %v1452 = vpop.f32.mrf.mxu0
  %1453 = vmatprep.mubr.bf16.mxu0 0
  %1454 = vmatmul.mubr.bf16.gmra.mxu0 %v979
  %v1455 = vpop.f32.mrf.mxu0
  %v1456 = vadd.f32 %v287, %v1455
  %v1457 = vpop.f32.mrf.mxu0
  %v1458 = vpop.f32.mrf.mxu0
  %v1459 = vadd.f32 %v287, %v1458
  %v1460 = vpop.f32.mrf.mxu0
  %1461 = vmatprep.mubr.bf16.mxu0 0
  %1462 = vmatmul.mubr.bf16.gmra.mxu0 %v982
  %v1463 = vpop.f32.mrf.mxu0
  %v1464 = vadd.f32 %v287, %v1463
  %v1465 = vpop.f32.mrf.mxu0
  %v1466 = vpop.f32.mrf.mxu0
  %v1467 = vadd.f32 %v287, %v1466
  %v1468 = vpop.f32.mrf.mxu0
  %1469 = vmatprep.mubr.bf16.mxu0 0
  %1470 = vmatmul.mubr.bf16.gmra.mxu0 %v985
  %v1471 = vpop.f32.mrf.mxu0
  %v1472 = vadd.f32 %v287, %v1471
  %v1473 = vpop.f32.mrf.mxu0
  %v1474 = vpop.f32.mrf.mxu0
  %v1475 = vadd.f32 %v287, %v1474
  %v1476 = vpop.f32.mrf.mxu0
  %1477 = vmatprep.mubr.bf16.mxu0 0
  %1478 = vmatmul.mubr.bf16.gmra.mxu0 %v988
  %v1479 = vpop.f32.mrf.mxu0
  %v1480 = vadd.f32 %v287, %v1479
  %v1481 = vpop.f32.mrf.mxu0
  %v1482 = vpop.f32.mrf.mxu0
  %v1483 = vadd.f32 %v287, %v1482
  %v1484 = vpop.f32.mrf.mxu0
  %1485 = vmatprep.mubr.bf16.mxu0 0
  %1486 = vmatmul.mubr.bf16.gmra.mxu0 %v991
  %v1487 = vpop.f32.mrf.mxu0
  %v1488 = vadd.f32 %v287, %v1487
  %v1489 = vpop.f32.mrf.mxu0
  %v1490 = vpop.f32.mrf.mxu0
  %v1491 = vadd.f32 %v287, %v1490
  %v1492 = vpop.f32.mrf.mxu0
  %1493 = vmatprep.mubr.bf16.mxu0 0
  %1494 = vmatmul.mubr.bf16.gmra.mxu0 %v994
  %v1495 = vpop.f32.mrf.mxu0
  %v1496 = vadd.f32 %v287, %v1495
  %v1497 = vpop.f32.mrf.mxu0
  %v1498 = vpop.f32.mrf.mxu0
  %v1499 = vadd.f32 %v287, %v1498
  %v1500 = vpop.f32.mrf.mxu0
  %1501 = vmatprep.mubr.bf16.mxu0 0
  %1502 = vmatmul.mubr.bf16.gmra.mxu0 %v997
  %v1503 = vpop.f32.mrf.mxu0
  %v1504 = vadd.f32 %v287, %v1503
  %v1505 = vpop.f32.mrf.mxu0
  %v1506 = vpop.f32.mrf.mxu0
  %v1507 = vadd.f32 %v287, %v1506
  %v1508 = vpop.f32.mrf.mxu0
  %1509 = vmatprep.mubr.bf16.mxu0 0
  %1510 = vmatmul.mubr.bf16.gmra.mxu0 %v1000
  %v1511 = vpop.f32.mrf.mxu0
  %v1512 = vadd.f32 %v287, %v1511
  %v1513 = vpop.f32.mrf.mxu0
  %v1514 = vpop.f32.mrf.mxu0
  %v1515 = vadd.f32 %v287, %v1514
  %v1516 = vpop.f32.mrf.mxu0
  %1517 = vmatprep.mubr.bf16.mxu0 0
  %1518 = vmatmul.mubr.bf16.gmra.mxu0 %v1003
  %v1519 = vpop.f32.mrf.mxu0
  %v1520 = vadd.f32 %v287, %v1519
  %v1521 = vpop.f32.mrf.mxu0
  %v1522 = vpop.f32.mrf.mxu0
  %v1523 = vadd.f32 %v287, %v1522
  %v1524 = vpop.f32.mrf.mxu0
  %1525 = vmatprep.mubr.bf16.mxu0 0
  %1526 = vmatmul.mubr.bf16.gmra.mxu0 %v1006
  %v1527 = vpop.f32.mrf.mxu0
  %v1528 = vadd.f32 %v287, %v1527
  %v1529 = vpop.f32.mrf.mxu0
  %v1530 = vpop.f32.mrf.mxu0
  %v1531 = vadd.f32 %v287, %v1530
  %v1532 = vpop.f32.mrf.mxu0
  %1533 = vmatprep.mubr.bf16.mxu0 0
  %1534 = vmatmul.mubr.bf16.gmra.mxu0 %v1009
  %v1535 = vpop.f32.mrf.mxu0
  %v1536 = vadd.f32 %v287, %v1535
  %v1537 = vpop.f32.mrf.mxu0
  %v1538 = vpop.f32.mrf.mxu0
  %v1539 = vadd.f32 %v287, %v1538
  %v1540 = vpop.f32.mrf.mxu0
  %1541 = vmatprep.mubr.bf16.mxu0 0
  %1542 = vmatmul.mubr.bf16.gmra.mxu0 %v1012
  %v1543 = vpop.f32.mrf.mxu0
  %v1544 = vadd.f32 %v287, %v1543
  %v1545 = vpop.f32.mrf.mxu0
  %v1546 = vpop.f32.mrf.mxu0
  %v1547 = vadd.f32 %v287, %v1546
  %v1548 = vpop.f32.mrf.mxu0
  %1549 = vmatprep.mubr.bf16.mxu0 0
  %1550 = vmatmul.mubr.bf16.gmra.mxu0 %v1015
  %v1551 = vpop.f32.mrf.mxu0
  %v1552 = vadd.f32 %v287, %v1551
  %v1553 = vpop.f32.mrf.mxu0
  %v1554 = vpop.f32.mrf.mxu0
  %v1555 = vadd.f32 %v287, %v1554
  %v1556 = vpop.f32.mrf.mxu0
  %1557 = vmatprep.mubr.bf16.mxu0 0
  %1558 = vmatmul.mubr.bf16.gmra.mxu0 %v1018
  %v1559 = vpop.f32.mrf.mxu0
  %v1560 = vadd.f32 %v287, %v1559
  %v1561 = vpop.f32.mrf.mxu0
  %v1562 = vpop.f32.mrf.mxu0
  %v1563 = vadd.f32 %v287, %v1562
  %v1564 = vpop.f32.mrf.mxu0
  %1565 = vmatprep.mubr.bf16.mxu0 0
  %1566 = vmatmul.mubr.bf16.gmra.mxu0 %v1021
  %v1567 = vpop.f32.mrf.mxu0
  %v1568 = vadd.f32 %v287, %v1567
  %v1569 = vpop.f32.mrf.mxu0
  %v1570 = vpop.f32.mrf.mxu0
  %v1571 = vadd.f32 %v287, %v1570
  %v1572 = vpop.f32.mrf.mxu0
  %1573 = vmatprep.mubr.bf16.mxu0 0
  %1574 = vmatmul.mubr.bf16.gmra.mxu0 %v1024
  %v1575 = vpop.f32.mrf.mxu0
  %v1576 = vadd.f32 %v287, %v1575
  %v1577 = vpop.f32.mrf.mxu0
  %v1578 = vpop.f32.mrf.mxu0
  %v1579 = vadd.f32 %v287, %v1578
  %v1580 = vpop.f32.mrf.mxu0
  %1581 = vmatprep.mubr.bf16.mxu0 0
  %1582 = vmatmul.mubr.bf16.gmra.mxu0 %v1027
  %v1583 = vpop.f32.mrf.mxu0
  %v1584 = vadd.f32 %v287, %v1583
  %v1585 = vpop.f32.mrf.mxu0
  %v1586 = vpop.f32.mrf.mxu0
  %v1587 = vadd.f32 %v287, %v1586
  %v1588 = vpop.f32.mrf.mxu0
  %1589 = vmatprep.mubr.bf16.mxu0 0
  %1590 = vmatmul.mubr.bf16.gmra.mxu0 %v1030
  %v1591 = vpop.f32.mrf.mxu0
  %v1592 = vadd.f32 %v287, %v1591
  %v1593 = vpop.f32.mrf.mxu0
  %v1594 = vpop.f32.mrf.mxu0
  %v1595 = vadd.f32 %v287, %v1594
  %v1596 = vpop.f32.mrf.mxu0
  %1597 = vmatprep.mubr.bf16.mxu0 0
  %1598 = vmatmul.mubr.bf16.gmra.mxu0 %v1033
  %v1599 = vpop.f32.mrf.mxu0
  %v1600 = vadd.f32 %v287, %v1599
  %v1601 = vpop.f32.mrf.mxu0
  %v1602 = vpop.f32.mrf.mxu0
  %v1603 = vadd.f32 %v287, %v1602
  %v1604 = vpop.f32.mrf.mxu0
  %1605 = vmatprep.mubr.bf16.mxu0 0
  %1606 = vmatmul.mubr.bf16.gmra.mxu0 %v1036
  %v1607 = vpop.f32.mrf.mxu0
  %v1608 = vadd.f32 %v287, %v1607
  %v1609 = vpop.f32.mrf.mxu0
  %v1610 = vpop.f32.mrf.mxu0
  %v1611 = vadd.f32 %v287, %v1610
  %v1612 = vpop.f32.mrf.mxu0
  %1613 = vmatprep.mubr.bf16.mxu0 0
  %1614 = vmatmul.mubr.bf16.gmra.mxu0 %v1039
  %v1615 = vpop.f32.mrf.mxu0
  %v1616 = vadd.f32 %v287, %v1615
  %v1617 = vpop.f32.mrf.mxu0
  %v1618 = vpop.f32.mrf.mxu0
  %v1619 = vadd.f32 %v287, %v1618
  %v1620 = vpop.f32.mrf.mxu0
  %1621 = vmatprep.mubr.bf16.mxu0 0
  %1622 = vmatmul.mubr.bf16.gmra.mxu0 %v1042
  %v1623 = vpop.f32.mrf.mxu0
  %v1624 = vadd.f32 %v287, %v1623
  %v1625 = vpop.f32.mrf.mxu0
  %v1626 = vpop.f32.mrf.mxu0
  %v1627 = vadd.f32 %v287, %v1626
  %v1628 = vpop.f32.mrf.mxu0
  %1629 = vmatprep.mubr.bf16.mxu0 0
  %1630 = vmatmul.mubr.bf16.gmra.mxu0 %v1045
  %v1631 = vpop.f32.mrf.mxu0
  %v1632 = vadd.f32 %v287, %v1631
  %v1633 = vpop.f32.mrf.mxu0
  %v1634 = vpop.f32.mrf.mxu0
  %v1635 = vadd.f32 %v287, %v1634
  %v1636 = vpop.f32.mrf.mxu0
  %1637 = vmatprep.mubr.bf16.mxu0 0
  %1638 = vmatmul.mubr.bf16.gmra.mxu0 %v1048
  %v1639 = vpop.f32.mrf.mxu0
  %v1640 = vadd.f32 %v287, %v1639
  %v1641 = vpop.f32.mrf.mxu0
  %v1642 = vpop.f32.mrf.mxu0
  %v1643 = vadd.f32 %v287, %v1642
  %v1644 = vpop.f32.mrf.mxu0
  %1645 = vmatprep.mubr.bf16.mxu0 0
  %1646 = vmatmul.mubr.bf16.gmra.mxu0 %v1051
  %v1647 = vpop.f32.mrf.mxu0
  %v1648 = vadd.f32 %v287, %v1647
  %v1649 = vpop.f32.mrf.mxu0
  %v1650 = vpop.f32.mrf.mxu0
  %v1651 = vadd.f32 %v287, %v1650
  %v1652 = vpop.f32.mrf.mxu0
  %1653 = vmatprep.mubr.bf16.mxu0 0
  %1654 = vmatmul.mubr.bf16.gmra.mxu0 %v1054
  %v1655 = vpop.f32.mrf.mxu0
  %v1656 = vadd.f32 %v287, %v1655
  %v1657 = vpop.f32.mrf.mxu0
  %v1658 = vpop.f32.mrf.mxu0
  %v1659 = vadd.f32 %v287, %v1658
  %v1660 = vpop.f32.mrf.mxu0
  %1661 = vmatprep.mubr.bf16.mxu0 0
  %1662 = vmatmul.mubr.bf16.gmra.mxu0 %v1057
  %v1663 = vpop.f32.mrf.mxu0
  %v1664 = vadd.f32 %v287, %v1663
  %v1665 = vpop.f32.mrf.mxu0
  %v1666 = vpop.f32.mrf.mxu0
  %v1667 = vadd.f32 %v287, %v1666
  %v1668 = vpop.f32.mrf.mxu0
  %1669 = vmatprep.mubr.bf16.mxu0 0
  %1670 = vmatmul.mubr.bf16.gmra.mxu0 %v1060
  %v1671 = vpop.f32.mrf.mxu0
  %v1672 = vadd.f32 %v287, %v1671
  %v1673 = vpop.f32.mrf.mxu0
  %v1674 = vpop.f32.mrf.mxu0
  %v1675 = vadd.f32 %v287, %v1674
  %v1676 = vpop.f32.mrf.mxu0
  %1677 = vmatprep.mubr.bf16.mxu0 0
  %1678 = vmatmul.mubr.bf16.gmra.mxu0 %v1063
  %v1679 = vpop.f32.mrf.mxu0
  %v1680 = vadd.f32 %v287, %v1679
  %v1681 = vpop.f32.mrf.mxu0
  %v1682 = vpop.f32.mrf.mxu0
  %v1683 = vadd.f32 %v287, %v1682
  %v1684 = vpop.f32.mrf.mxu0
  %1685 = vmatprep.mubr.bf16.mxu0 0
  %1686 = vmatmul.mubr.bf16.gmra.mxu0 %v1066
  %v1687 = vpop.f32.mrf.mxu0
  %v1688 = vadd.f32 %v287, %v1687
  %v1689 = vpop.f32.mrf.mxu0
  %v1690 = vpop.f32.mrf.mxu0
  %v1691 = vadd.f32 %v287, %v1690
  %v1692 = vpop.f32.mrf.mxu0
  %1693 = vmatprep.mubr.bf16.mxu0 0
  %1694 = vmatmul.mubr.bf16.gmra.mxu0 %v1069
  %v1695 = vpop.f32.mrf.mxu0
  %v1696 = vadd.f32 %v287, %v1695
  %v1697 = vpop.f32.mrf.mxu0
  %v1698 = vpop.f32.mrf.mxu0
  %v1699 = vadd.f32 %v287, %v1698
  %v1700 = vpop.f32.mrf.mxu0
  %1701 = vmatprep.mubr.bf16.mxu0 0
  %1702 = vmatmul.mubr.bf16.gmra.mxu0 %v1072
  %v1703 = vpop.f32.mrf.mxu0
  %v1704 = vadd.f32 %v287, %v1703
  %v1705 = vpop.f32.mrf.mxu0
  %v1706 = vpop.f32.mrf.mxu0
  %v1707 = vadd.f32 %v287, %v1706
  %v1708 = vpop.f32.mrf.mxu0
  %1709 = vmatprep.mubr.bf16.mxu0 0
  %1710 = vmatmul.mubr.bf16.gmra.mxu0 %v1075
  %v1711 = vpop.f32.mrf.mxu0
  %v1712 = vadd.f32 %v287, %v1711
  %v1713 = vpop.f32.mrf.mxu0
  %v1714 = vpop.f32.mrf.mxu0
  %v1715 = vadd.f32 %v287, %v1714
  %v1716 = vpop.f32.mrf.mxu0
  %1717 = vmatprep.mubr.bf16.mxu0 0
  %1718 = vmatmul.mubr.bf16.gmra.mxu0 %v1078
  %v1719 = vpop.f32.mrf.mxu0
  %v1720 = vadd.f32 %v287, %v1719
  %v1721 = vpop.f32.mrf.mxu0
  %v1722 = vpop.f32.mrf.mxu0
  %v1723 = vadd.f32 %v287, %v1722
  %v1724 = vpop.f32.mrf.mxu0
  %1725 = vmatprep.mubr.bf16.mxu0 0
  %1726 = vmatmul.mubr.bf16.gmra.mxu0 %v1081
  %v1727 = vpop.f32.mrf.mxu0
  %v1728 = vadd.f32 %v287, %v1727
  %v1729 = vpop.f32.mrf.mxu0
  %v1730 = vpop.f32.mrf.mxu0
  %v1731 = vadd.f32 %v287, %v1730
  %v1732 = vpop.f32.mrf.mxu0
  %1733 = vmatprep.mubr.bf16.mxu0 0
  %1734 = vmatmul.mubr.bf16.gmra.mxu0 %v1084
  %v1735 = vpop.f32.mrf.mxu0
  %v1736 = vadd.f32 %v287, %v1735
  %v1737 = vpop.f32.mrf.mxu0
  %v1738 = vpop.f32.mrf.mxu0
  %v1739 = vadd.f32 %v287, %v1738
  %v1740 = vpop.f32.mrf.mxu0
  %1741 = vmatprep.mubr.bf16.mxu0 0
  %1742 = vmatmul.mubr.bf16.gmra.mxu0 %v1087
  %v1743 = vpop.f32.mrf.mxu0
  %v1744 = vadd.f32 %v287, %v1743
  %v1745 = vpop.f32.mrf.mxu0
  %v1746 = vpop.f32.mrf.mxu0
  %v1747 = vadd.f32 %v287, %v1746
  %v1748 = vpop.f32.mrf.mxu0
  %1749 = vmatprep.mubr.bf16.mxu0 0
  %1750 = vmatmul.mubr.bf16.gmra.mxu0 %v1090
  %v1751 = vpop.f32.mrf.mxu0
  %v1752 = vadd.f32 %v287, %v1751
  %v1753 = vpop.f32.mrf.mxu0
  %v1754 = vpop.f32.mrf.mxu0
  %v1755 = vadd.f32 %v287, %v1754
  %v1756 = vpop.f32.mrf.mxu0
  %1757 = vmatprep.mubr.bf16.mxu0 0
  %1758 = vmatmul.mubr.bf16.gmra.mxu0 %v1093
  %v1759 = vpop.f32.mrf.mxu0
  %v1760 = vadd.f32 %v287, %v1759
  %v1761 = vpop.f32.mrf.mxu0
  %v1762 = vpop.f32.mrf.mxu0
  %v1763 = vadd.f32 %v287, %v1762
  %v1764 = vpop.f32.mrf.mxu0
  %1765 = vmatprep.mubr.bf16.mxu0 0
  %1766 = vmatmul.mubr.bf16.gmra.mxu0 %v1096
  %v1767 = vpop.f32.mrf.mxu0
  %v1768 = vadd.f32 %v287, %v1767
  %v1769 = vpop.f32.mrf.mxu0
  %v1770 = vpop.f32.mrf.mxu0
  %v1771 = vadd.f32 %v287, %v1770
  %v1772 = vpop.f32.mrf.mxu0
  %1773 = vmatprep.mubr.bf16.mxu0 0
  %1774 = vmatmul.mubr.bf16.gmra.mxu0 %v1099
  %v1775 = vpop.f32.mrf.mxu0
  %v1776 = vadd.f32 %v287, %v1775
  %v1777 = vpop.f32.mrf.mxu0
  %v1778 = vpop.f32.mrf.mxu0
  %v1779 = vadd.f32 %v287, %v1778
  %v1780 = vpop.f32.mrf.mxu0
  %1781 = vmatprep.mubr.bf16.mxu0 0
  %1782 = vmatmul.mubr.bf16.gmra.mxu0 %v1102
  %v1783 = vpop.f32.mrf.mxu0
  %v1784 = vadd.f32 %v287, %v1783
  %v1785 = vpop.f32.mrf.mxu0
  %v1786 = vpop.f32.mrf.mxu0
  %v1787 = vadd.f32 %v287, %v1786
  %v1788 = vpop.f32.mrf.mxu0
  %1789 = vmatprep.mubr.bf16.mxu0 0
  %1790 = vmatmul.mubr.bf16.gmra.mxu0 %v1105
  %v1791 = vpop.f32.mrf.mxu0
  %v1792 = vadd.f32 %v287, %v1791
  %v1793 = vpop.f32.mrf.mxu0
  %v1794 = vpop.f32.mrf.mxu0
  %v1795 = vadd.f32 %v287, %v1794
  %v1796 = vpop.f32.mrf.mxu0
  %1797 = vmatprep.mubr.bf16.mxu0 0
  %1798 = vmatmul.mubr.bf16.gmra.mxu0 %v1108
  %v1799 = vpop.f32.mrf.mxu0
  %v1800 = vadd.f32 %v287, %v1799
  %v1801 = vpop.f32.mrf.mxu0
  %v1802 = vpop.f32.mrf.mxu0
  %v1803 = vadd.f32 %v287, %v1802
  %v1804 = vpop.f32.mrf.mxu0
  %1805 = vmatprep.mubr.bf16.mxu0 0
  %1806 = vmatmul.mubr.bf16.gmra.mxu0 %v1111
  %v1807 = vpop.f32.mrf.mxu0
  %v1808 = vadd.f32 %v287, %v1807
  %v1809 = vpop.f32.mrf.mxu0
  %v1810 = vpop.f32.mrf.mxu0
  %v1811 = vadd.f32 %v287, %v1810
  %v1812 = vpop.f32.mrf.mxu0
  %1813 = vmatprep.mubr.bf16.mxu0 0
  %1814 = vmatmul.mubr.bf16.gmra.mxu0 %v1114
  %v1815 = vpop.f32.mrf.mxu0
  %v1816 = vadd.f32 %v287, %v1815
  %v1817 = vpop.f32.mrf.mxu0
  %v1818 = vpop.f32.mrf.mxu0
  %v1819 = vadd.f32 %v287, %v1818
  %v1820 = vpop.f32.mrf.mxu0
  %1821 = vmatprep.mubr.bf16.mxu0 0
  %1822 = vmatmul.mubr.bf16.gmra.mxu0 %v1117
  %v1823 = vpop.f32.mrf.mxu0
  %v1824 = vadd.f32 %v287, %v1823
  %v1825 = vpop.f32.mrf.mxu0
  %v1826 = vpop.f32.mrf.mxu0
  %v1827 = vadd.f32 %v287, %v1826
  %v1828 = vpop.f32.mrf.mxu0
  %1829 = vmatprep.mubr.bf16.mxu0 0
  %1830 = vmatmul.mubr.bf16.gmra.mxu0 %v1120
  %v1831 = vpop.f32.mrf.mxu0
  %v1832 = vadd.f32 %v287, %v1831
  %v1833 = vpop.f32.mrf.mxu0
  %v1834 = vpop.f32.mrf.mxu0
  %v1835 = vadd.f32 %v287, %v1834
  %v1836 = vpop.f32.mrf.mxu0
  %1837 = vmatprep.mubr.bf16.mxu0 0
  %1838 = vmatmul.mubr.bf16.gmra.mxu0 %v1123
  %v1839 = vpop.f32.mrf.mxu0
  %v1840 = vadd.f32 %v287, %v1839
  %v1841 = vpop.f32.mrf.mxu0
  %v1842 = vpop.f32.mrf.mxu0
  %v1843 = vadd.f32 %v287, %v1842
  %v1844 = vpop.f32.mrf.mxu0
  %1845 = vmatprep.mubr.bf16.mxu0 0
  %1846 = vmatmul.mubr.bf16.gmra.mxu0 %v1126
  %v1847 = vpop.f32.mrf.mxu0
  %v1848 = vadd.f32 %v287, %v1847
  %v1849 = vpop.f32.mrf.mxu0
  %v1850 = vpop.f32.mrf.mxu0
  %v1851 = vadd.f32 %v287, %v1850
  %v1852 = vpop.f32.mrf.mxu0
  %1853 = vmatprep.mubr.bf16.mxu0 0
  %1854 = vmatmul.mubr.bf16.gmra.mxu0 %v1129
  %v1855 = vpop.f32.mrf.mxu0
  %v1856 = vadd.f32 %v287, %v1855
  %v1857 = vpop.f32.mrf.mxu0
  %v1858 = vpop.f32.mrf.mxu0
  %v1859 = vadd.f32 %v287, %v1858
  %v1860 = vpop.f32.mrf.mxu0
  %1861 = vmatprep.mubr.bf16.mxu0 0
  %1862 = vmatmul.mubr.bf16.gmra.mxu0 %v1132
  %v1863 = vpop.f32.mrf.mxu0
  %v1864 = vadd.f32 %v287, %v1863
  %v1865 = vpop.f32.mrf.mxu0
  %v1866 = vpop.f32.mrf.mxu0
  %v1867 = vadd.f32 %v287, %v1866
  %v1868 = vpop.f32.mrf.mxu0
  %1869 = vmatprep.mubr.bf16.mxu0 0
  %1870 = vmatmul.mubr.bf16.gmra.mxu0 %v1135
  %v1871 = vpop.f32.mrf.mxu0
  %v1872 = vadd.f32 %v287, %v1871
  %v1873 = vpop.f32.mrf.mxu0
  %v1874 = vpop.f32.mrf.mxu0
  %v1875 = vadd.f32 %v287, %v1874
  %v1876 = vpop.f32.mrf.mxu0
  %1877 = vmatprep.mubr.bf16.mxu0 0
  %1878 = vmatmul.mubr.bf16.gmra.mxu0 %v1138
  %v1879 = vpop.f32.mrf.mxu0
  %v1880 = vadd.f32 %v287, %v1879
  %v1881 = vpop.f32.mrf.mxu0
  %v1882 = vpop.f32.mrf.mxu0
  %v1883 = vadd.f32 %v287, %v1882
  %v1884 = vpop.f32.mrf.mxu0
  %1885 = vmatprep.mubr.bf16.mxu0 0
  %1886 = vmatmul.mubr.bf16.gmra.mxu0 %v1141
  %v1887 = vpop.f32.mrf.mxu0
  %v1888 = vadd.f32 %v287, %v1887
  %v1889 = vpop.f32.mrf.mxu0
  %v1890 = vpop.f32.mrf.mxu0
  %v1891 = vadd.f32 %v287, %v1890
  %v1892 = vpop.f32.mrf.mxu0
  %1893 = vmatprep.mubr.bf16.mxu0 0
  %1894 = vmatmul.mubr.bf16.gmra.mxu0 %v1144
  %v1895 = vpop.f32.mrf.mxu0
  %v1896 = vadd.f32 %v287, %v1895
  %v1897 = vpop.f32.mrf.mxu0
  %v1898 = vpop.f32.mrf.mxu0
  %v1899 = vadd.f32 %v287, %v1898
  %v1900 = vpop.f32.mrf.mxu0
  %1901 = vmatprep.mubr.bf16.mxu0 0
  %1902 = vmatmul.mubr.bf16.gmra.mxu0 %v1147
  %v1903 = vpop.f32.mrf.mxu0
  %v1904 = vadd.f32 %v287, %v1903
  %v1905 = vpop.f32.mrf.mxu0
  %v1906 = vpop.f32.mrf.mxu0
  %v1907 = vadd.f32 %v287, %v1906
  %v1908 = vpop.f32.mrf.mxu0
  %1909 = vmatprep.mubr.bf16.mxu0 0
  %1910 = vmatmul.mubr.bf16.gmra.mxu0 %v1150
  %v1911 = vpop.f32.mrf.mxu0
  %v1912 = vadd.f32 %v287, %v1911
  %v1913 = vpop.f32.mrf.mxu0
  %v1914 = vpop.f32.mrf.mxu0
  %v1915 = vadd.f32 %v287, %v1914
  %v1916 = vpop.f32.mrf.mxu0
  %1917 = vmatprep.mubr.bf16.mxu0 0
  %1918 = vmatmul.mubr.bf16.gmra.mxu0 %v1153
  %v1919 = vpop.f32.mrf.mxu0
  %v1920 = vadd.f32 %v287, %v1919
  %v1921 = vpop.f32.mrf.mxu0
  %v1922 = vpop.f32.mrf.mxu0
  %v1923 = vadd.f32 %v287, %v1922
  %v1924 = vpop.f32.mrf.mxu0
  %1925 = vmatprep.mubr.bf16.mxu0 0
  %1926 = vmatmul.mubr.bf16.gmra.mxu0 %v1156
  %v1927 = vpop.f32.mrf.mxu0
  %v1928 = vadd.f32 %v287, %v1927
  %v1929 = vpop.f32.mrf.mxu0
  %v1930 = vpop.f32.mrf.mxu0
  %v1931 = vadd.f32 %v287, %v1930
  %v1932 = vpop.f32.mrf.mxu0
  %1933 = vmatprep.mubr.bf16.mxu0 0
  %1934 = vmatmul.mubr.bf16.gmra.mxu0 %v1159
  %v1935 = vpop.f32.mrf.mxu0
  %v1936 = vadd.f32 %v287, %v1935
  %v1937 = vpop.f32.mrf.mxu0
  %v1938 = vpop.f32.mrf.mxu0
  %v1939 = vadd.f32 %v287, %v1938
  %v1940 = vpop.f32.mrf.mxu0
  %1941 = vmatprep.mubr.bf16.mxu0 0
  %1942 = vmatmul.mubr.bf16.gmra.mxu0 %v1162
  %v1943 = vpop.f32.mrf.mxu0
  %v1944 = vadd.f32 %v287, %v1943
  %v1945 = vpop.f32.mrf.mxu0
  %v1946 = vpop.f32.mrf.mxu0
  %v1947 = vadd.f32 %v287, %v1946
  %v1948 = vpop.f32.mrf.mxu0
  %1949 = vmatprep.mubr.bf16.mxu0 0
  %1950 = vmatmul.mubr.bf16.gmra.mxu0 %v1165
  %v1951 = vpop.f32.mrf.mxu0
  %v1952 = vadd.f32 %v287, %v1951
  %v1953 = vpop.f32.mrf.mxu0
  %v1954 = vpop.f32.mrf.mxu0
  %v1955 = vadd.f32 %v287, %v1954
  %v1956 = vpop.f32.mrf.mxu0
  %1957 = vmatprep.mubr.bf16.mxu0 0
  %1958 = vmatmul.mubr.bf16.gmra.mxu0 %v1168
  %v1959 = vpop.f32.mrf.mxu0
  %v1960 = vadd.f32 %v287, %v1959
  %v1961 = vpop.f32.mrf.mxu0
  %v1962 = vpop.f32.mrf.mxu0
  %v1963 = vadd.f32 %v287, %v1962
  %v1964 = vpop.f32.mrf.mxu0
  %1965 = vmatprep.mubr.bf16.mxu0 0
  %1966 = vmatmul.mubr.bf16.gmra.mxu0 %v1171
  %v1967 = vpop.f32.mrf.mxu0
  %v1968 = vadd.f32 %v287, %v1967
  %v1969 = vpop.f32.mrf.mxu0
  %v1970 = vpop.f32.mrf.mxu0
  %v1971 = vadd.f32 %v287, %v1970
  %v1972 = vpop.f32.mrf.mxu0
  %1973 = vmatprep.mubr.bf16.mxu0 0
  %1974 = vmatmul.mubr.bf16.gmra.mxu0 %v1174
  %v1975 = vpop.f32.mrf.mxu0
  %v1976 = vadd.f32 %v287, %v1975
  %v1977 = vpop.f32.mrf.mxu0
  %v1978 = vpop.f32.mrf.mxu0
  %v1979 = vadd.f32 %v287, %v1978
  %v1980 = vpop.f32.mrf.mxu0
  %1981 = vmatprep.mubr.bf16.mxu0 0
  %1982 = vmatmul.mubr.bf16.gmra.mxu0 %v1177
  %v1983 = vpop.f32.mrf.mxu0
  %v1984 = vadd.f32 %v287, %v1983
  %v1985 = vpop.f32.mrf.mxu0
  %v1986 = vpop.f32.mrf.mxu0
  %v1987 = vadd.f32 %v287, %v1986
  %v1988 = vpop.f32.mrf.mxu0
  %1989 = vmatprep.mubr.bf16.mxu0 0
  %1990 = vmatmul.mubr.bf16.gmra.mxu0 %v1180
  %v1991 = vpop.f32.mrf.mxu0
  %v1992 = vadd.f32 %v287, %v1991
  %v1993 = vpop.f32.mrf.mxu0
  %v1994 = vpop.f32.mrf.mxu0
  %v1995 = vadd.f32 %v287, %v1994
  %v1996 = vpop.f32.mrf.mxu0
  %1997 = vmatprep.mubr.bf16.mxu0 0
  %1998 = vmatmul.mubr.bf16.gmra.mxu0 %v1183
  %v1999 = vpop.f32.mrf.mxu0
  %v2000 = vadd.f32 %v287, %v1999
  %v2001 = vpop.f32.mrf.mxu0
  %v2002 = vpop.f32.mrf.mxu0
  %v2003 = vadd.f32 %v287, %v2002
  %v2004 = vpop.f32.mrf.mxu0
  %2005 = vmatprep.mubr.bf16.mxu0 0
  %2006 = vmatmul.mubr.bf16.gmra.mxu0 %v1186
  %v2007 = vpop.f32.mrf.mxu0
  %v2008 = vadd.f32 %v287, %v2007
  %v2009 = vpop.f32.mrf.mxu0
  %v2010 = vpop.f32.mrf.mxu0
  %v2011 = vadd.f32 %v287, %v2010
  %v2012 = vpop.f32.mrf.mxu0
  %2013 = vmatprep.mubr.bf16.mxu0 0
  %2014 = vmatmul.mubr.bf16.gmra.mxu0 %v1189
  %v2015 = vpop.f32.mrf.mxu0
  %v2016 = vadd.f32 %v287, %v2015
  %v2017 = vpop.f32.mrf.mxu0
  %v2018 = vpop.f32.mrf.mxu0
  %v2019 = vadd.f32 %v287, %v2018
  %v2020 = vpop.f32.mrf.mxu0
  %2021 = vmatprep.mubr.bf16.mxu0 0
  %2022 = vmatmul.mubr.bf16.gmra.mxu0 %v1192
  %v2023 = vpop.f32.mrf.mxu0
  %v2024 = vadd.f32 %v287, %v2023
  %v2025 = vpop.f32.mrf.mxu0
  %v2026 = vpop.f32.mrf.mxu0
  %v2027 = vadd.f32 %v287, %v2026
  %v2028 = vpop.f32.mrf.mxu0
  %2029 = vmatprep.mubr.bf16.mxu0 0
  %2030 = vmatmul.mubr.bf16.gmra.mxu0 %v1195
  %v2031 = vpop.f32.mrf.mxu0
  %v2032 = vadd.f32 %v287, %v2031
  %v2033 = vpop.f32.mrf.mxu0
  %v2034 = vpop.f32.mrf.mxu0
  %v2035 = vadd.f32 %v287, %v2034
  %v2036 = vpop.f32.mrf.mxu0
  %2037 = vmatprep.mubr.bf16.mxu0 0
  %2038 = vmatmul.mubr.bf16.gmra.mxu0 %v1198
  %v2039 = vpop.f32.mrf.mxu0
  %v2040 = vadd.f32 %v287, %v2039
  %v2041 = vpop.f32.mrf.mxu0
  %v2042 = vpop.f32.mrf.mxu0
  %v2043 = vadd.f32 %v287, %v2042
  %v2044 = vpop.f32.mrf.mxu0
  %2045 = vmatprep.mubr.bf16.mxu0 0
  %2046 = vmatmul.mubr.bf16.gmra.mxu0 %v1201
  %v2047 = vpop.f32.mrf.mxu0
  %v2048 = vadd.f32 %v287, %v2047
  %v2049 = vpop.f32.mrf.mxu0
  %v2050 = vpop.f32.mrf.mxu0
  %v2051 = vadd.f32 %v287, %v2050
  %v2052 = vpop.f32.mrf.mxu0
  %2053 = vmatprep.mubr.bf16.mxu0 0
  %2054 = vmatmul.mubr.bf16.gmra.mxu0 %v1204
  %v2055 = vpop.f32.mrf.mxu0
  %v2056 = vadd.f32 %v287, %v2055
  %v2057 = vpop.f32.mrf.mxu0
  %v2058 = vpop.f32.mrf.mxu0
  %v2059 = vadd.f32 %v287, %v2058
  %v2060 = vpop.f32.mrf.mxu0
  %2061 = vmatprep.mubr.bf16.mxu0 0
  %2062 = vmatmul.mubr.bf16.gmra.mxu0 %v1207
  %v2063 = vpop.f32.mrf.mxu0
  %v2064 = vadd.f32 %v287, %v2063
  %v2065 = vpop.f32.mrf.mxu0
  %v2066 = vpop.f32.mrf.mxu0
  %v2067 = vadd.f32 %v287, %v2066
  %v2068 = vpop.f32.mrf.mxu0
  %2069 = vmatprep.mubr.bf16.mxu0 0
  %2070 = vmatmul.mubr.bf16.gmra.mxu0 %v1210
  %v2071 = vpop.f32.mrf.mxu0
  %v2072 = vadd.f32 %v287, %v2071
  %v2073 = vpop.f32.mrf.mxu0
  %v2074 = vpop.f32.mrf.mxu0
  %v2075 = vadd.f32 %v287, %v2074
  %v2076 = vpop.f32.mrf.mxu0
  %2077 = vmatprep.mubr.bf16.mxu0 0
  %2078 = vmatmul.mubr.bf16.gmra.mxu0 %v1213
  %v2079 = vpop.f32.mrf.mxu0
  %v2080 = vadd.f32 %v287, %v2079
  %v2081 = vpop.f32.mrf.mxu0
  %v2082 = vpop.f32.mrf.mxu0
  %v2083 = vadd.f32 %v287, %v2082
  %v2084 = vpop.f32.mrf.mxu0
  %2085 = vmatprep.mubr.bf16.mxu0 0
  %2086 = vmatmul.mubr.bf16.gmra.mxu0 %v1216
  %v2087 = vpop.f32.mrf.mxu0
  %v2088 = vadd.f32 %v287, %v2087
  %v2089 = vpop.f32.mrf.mxu0
  %v2090 = vpop.f32.mrf.mxu0
  %v2091 = vadd.f32 %v287, %v2090
  %v2092 = vpop.f32.mrf.mxu0
  %2093 = vmatprep.mubr.bf16.mxu0 0
  %2094 = vmatmul.mubr.bf16.gmra.mxu0 %v1219
  %v2095 = vpop.f32.mrf.mxu0
  %v2096 = vadd.f32 %v287, %v2095
  %v2097 = vpop.f32.mrf.mxu0
  %v2098 = vpop.f32.mrf.mxu0
  %v2099 = vadd.f32 %v287, %v2098
  %v2100 = vpop.f32.mrf.mxu0
  %2101 = vmatprep.mubr.bf16.mxu0 0
  %2102 = vmatmul.mubr.bf16.gmra.mxu0 %v1222
  %v2103 = vpop.f32.mrf.mxu0
  %v2104 = vadd.f32 %v287, %v2103
  %v2105 = vpop.f32.mrf.mxu0
  %v2106 = vpop.f32.mrf.mxu0
  %v2107 = vadd.f32 %v287, %v2106
  %v2108 = vpop.f32.mrf.mxu0
  %2109 = vmatprep.mubr.bf16.mxu0 0
  %2110 = vmatmul.mubr.bf16.gmra.mxu0 %v1225
  %v2111 = vpop.f32.mrf.mxu0
  %v2112 = vadd.f32 %v287, %v2111
  %v2113 = vpop.f32.mrf.mxu0
  %v2114 = vpop.f32.mrf.mxu0
  %v2115 = vadd.f32 %v287, %v2114
  %v2116 = vpop.f32.mrf.mxu0
  %2117 = vmatprep.mubr.bf16.mxu0 0
  %2118 = vmatmul.mubr.bf16.gmra.mxu0 %v1228
  %v2119 = vpop.f32.mrf.mxu0
  %v2120 = vadd.f32 %v287, %v2119
  %v2121 = vpop.f32.mrf.mxu0
  %v2122 = vpop.f32.mrf.mxu0
  %v2123 = vadd.f32 %v287, %v2122
  %v2124 = vpop.f32.mrf.mxu0
  %2125 = vmatprep.mubr.bf16.mxu0 0
  %2126 = vmatmul.mubr.bf16.gmra.mxu0 %v1231
  %v2127 = vpop.f32.mrf.mxu0
  %v2128 = vadd.f32 %v287, %v2127
  %v2129 = vpop.f32.mrf.mxu0
  %v2130 = vpop.f32.mrf.mxu0
  %v2131 = vadd.f32 %v287, %v2130
  %v2132 = vpop.f32.mrf.mxu0
  %2133 = vmatprep.mubr.bf16.mxu0 0
  %2134 = vmatmul.mubr.bf16.gmra.mxu0 %v1234
  %v2135 = vpop.f32.mrf.mxu0
  %v2136 = vadd.f32 %v287, %v2135
  %v2137 = vpop.f32.mrf.mxu0
  %v2138 = vpop.f32.mrf.mxu0
  %v2139 = vadd.f32 %v287, %v2138
  %v2140 = vpop.f32.mrf.mxu0
  %2141 = vmatprep.mubr.bf16.mxu0 0
  %2142 = vmatmul.mubr.bf16.gmra.mxu0 %v1237
  %v2143 = vpop.f32.mrf.mxu0
  %v2144 = vadd.f32 %v287, %v2143
  %v2145 = vpop.f32.mrf.mxu0
  %v2146 = vpop.f32.mrf.mxu0
  %v2147 = vadd.f32 %v287, %v2146
  %v2148 = vpop.f32.mrf.mxu0
  %2149 = vmatprep.mubr.bf16.mxu0 0
  %2150 = vmatmul.mubr.bf16.gmra.mxu0 %v1240
  %v2151 = vpop.f32.mrf.mxu0
  %v2152 = vadd.f32 %v287, %v2151
  %v2153 = vpop.f32.mrf.mxu0
  %v2154 = vpop.f32.mrf.mxu0
  %v2155 = vadd.f32 %v287, %v2154
  %v2156 = vpop.f32.mrf.mxu0
  %2157 = vmatprep.mubr.bf16.mxu0 0
  %2158 = vmatmul.mubr.bf16.gmra.mxu0 %v1243
  %v2159 = vpop.f32.mrf.mxu0
  %v2160 = vadd.f32 %v287, %v2159
  %v2161 = vpop.f32.mrf.mxu0
  %v2162 = vpop.f32.mrf.mxu0
  %v2163 = vadd.f32 %v287, %v2162
  %v2164 = vpop.f32.mrf.mxu0
  %2165 = vmatprep.mubr.bf16.mxu0 0
  %2166 = vmatmul.mubr.bf16.gmra.mxu0 %v1246
  %v2167 = vpop.f32.mrf.mxu0
  %v2168 = vadd.f32 %v287, %v2167
  %v2169 = vpop.f32.mrf.mxu0
  %v2170 = vpop.f32.mrf.mxu0
  %v2171 = vadd.f32 %v287, %v2170
  %v2172 = vpop.f32.mrf.mxu0
  %2173 = vmatprep.mubr.bf16.mxu0 0
  %2174 = vmatmul.mubr.bf16.gmra.mxu0 %v1249
  %v2175 = vpop.f32.mrf.mxu0
  %v2176 = vadd.f32 %v287, %v2175
  %v2177 = vpop.f32.mrf.mxu0
  %v2178 = vpop.f32.mrf.mxu0
  %v2179 = vadd.f32 %v287, %v2178
  %v2180 = vpop.f32.mrf.mxu0
  %2181 = vmatprep.mubr.bf16.mxu0 0
  %2182 = vmatmul.mubr.bf16.gmra.mxu0 %v1252
  %v2183 = vpop.f32.mrf.mxu0
  %v2184 = vadd.f32 %v287, %v2183
  %v2185 = vpop.f32.mrf.mxu0
  %v2186 = vpop.f32.mrf.mxu0
  %v2187 = vadd.f32 %v287, %v2186
  %v2188 = vpop.f32.mrf.mxu0
  %2189 = vmatprep.mubr.bf16.mxu0 0
  %2190 = vmatmul.mubr.bf16.gmra.mxu0 %v1255
  %v2191 = vpop.f32.mrf.mxu0
  %v2192 = vadd.f32 %v287, %v2191
  %v2193 = vpop.f32.mrf.mxu0
  %v2194 = vpop.f32.mrf.mxu0
  %v2195 = vadd.f32 %v287, %v2194
  %v2196 = vpop.f32.mrf.mxu0
  %2197 = vmatprep.mubr.bf16.mxu0 0
  %2198 = vmatmul.mubr.bf16.gmra.mxu0 %v1258
  %v2199 = vpop.f32.mrf.mxu0
  %v2200 = vadd.f32 %v287, %v2199
  %v2201 = vpop.f32.mrf.mxu0
  %v2202 = vpop.f32.mrf.mxu0
  %v2203 = vadd.f32 %v287, %v2202
  %v2204 = vpop.f32.mrf.mxu0
  %2205 = vmatprep.mubr.bf16.mxu0 0
  %2206 = vmatmul.mubr.bf16.gmra.mxu0 %v1261
  %v2207 = vpop.f32.mrf.mxu0
  %v2208 = vadd.f32 %v287, %v2207
  %v2209 = vpop.f32.mrf.mxu0
  %v2210 = vpop.f32.mrf.mxu0
  %v2211 = vadd.f32 %v287, %v2210
  %v2212 = vpop.f32.mrf.mxu0
  %2213 = vmatprep.mubr.bf16.mxu0 0
  %2214 = vmatmul.mubr.bf16.gmra.mxu0 %v1264
  %v2215 = vpop.f32.mrf.mxu0
  %v2216 = vadd.f32 %v287, %v2215
  %v2217 = vpop.f32.mrf.mxu0
  %v2218 = vpop.f32.mrf.mxu0
  %v2219 = vadd.f32 %v287, %v2218
  %v2220 = vpop.f32.mrf.mxu0
  %2221 = vmatprep.mubr.bf16.mxu0 0
  %2222 = vmatmul.mubr.bf16.gmra.mxu0 %v1267
  %v2223 = vpop.f32.mrf.mxu0
  %v2224 = vadd.f32 %v287, %v2223
  %v2225 = vpop.f32.mrf.mxu0
  %v2226 = vpop.f32.mrf.mxu0
  %v2227 = vadd.f32 %v287, %v2226
  %v2228 = vpop.f32.mrf.mxu0
  %2229 = vmatprep.mubr.bf16.mxu0 0
  %2230 = vmatmul.mubr.bf16.gmra.mxu0 %v1270
  %v2231 = vpop.f32.mrf.mxu0
  %v2232 = vadd.f32 %v287, %v2231
  %v2233 = vpop.f32.mrf.mxu0
  %v2234 = vpop.f32.mrf.mxu0
  %v2235 = vadd.f32 %v287, %v2234
  %v2236 = vpop.f32.mrf.mxu0
  %2237 = vmatprep.mubr.bf16.mxu0 0
  %2238 = vmatmul.mubr.bf16.gmra.mxu0 %v1273
  %v2239 = vpop.f32.mrf.mxu0
  %v2240 = vadd.f32 %v287, %v2239
  %v2241 = vpop.f32.mrf.mxu0
  %v2242 = vpop.f32.mrf.mxu0
  %v2243 = vadd.f32 %v287, %v2242
  %v2244 = vpop.f32.mrf.mxu0
  %2245 = vmatprep.mubr.bf16.mxu0 0
  %2246 = vmatmul.mubr.bf16.gmra.mxu0 %v1276
  %v2247 = vpop.f32.mrf.mxu0
  %v2248 = vadd.f32 %v287, %v2247
  %v2249 = vpop.f32.mrf.mxu0
  %v2250 = vpop.f32.mrf.mxu0
  %v2251 = vadd.f32 %v287, %v2250
  %v2252 = vpop.f32.mrf.mxu0
  %2253 = vmatprep.mubr.bf16.mxu0 0
  %2254 = vmatmul.mubr.bf16.gmra.mxu0 %v1279
  %v2255 = vpop.f32.mrf.mxu0
  %v2256 = vadd.f32 %v287, %v2255
  %v2257 = vpop.f32.mrf.mxu0
  %v2258 = vpop.f32.mrf.mxu0
  %v2259 = vadd.f32 %v287, %v2258
  %v2260 = vpop.f32.mrf.mxu0
  %2261 = vmatprep.mubr.bf16.mxu0 0
  %2262 = vmatmul.mubr.bf16.gmra.mxu0 %v1282
  %v2263 = vpop.f32.mrf.mxu0
  %v2264 = vadd.f32 %v287, %v2263
  %v2265 = vpop.f32.mrf.mxu0
  %v2266 = vpop.f32.mrf.mxu0
  %v2267 = vadd.f32 %v287, %v2266
  %v2268 = vpop.f32.mrf.mxu0
  %2269 = vmatprep.mubr.bf16.mxu0 0
  %2270 = vmatmul.mubr.bf16.gmra.mxu0 %v1285
  %v2271 = vpop.f32.mrf.mxu0
  %v2272 = vadd.f32 %v287, %v2271
  %v2273 = vpop.f32.mrf.mxu0
  %v2274 = vpop.f32.mrf.mxu0
  %v2275 = vadd.f32 %v287, %v2274
  %v2276 = vpop.f32.mrf.mxu0
  %2277 = vmatprep.mubr.bf16.mxu0 0
  %2278 = vmatmul.mubr.bf16.gmra.mxu0 %v1288
  %v2279 = vpop.f32.mrf.mxu0
  %v2280 = vadd.f32 %v287, %v2279
  %v2281 = vpop.f32.mrf.mxu0
  %v2282 = vpop.f32.mrf.mxu0
  %v2283 = vadd.f32 %v287, %v2282
  %v2284 = vpop.f32.mrf.mxu0
  %2285 = vmatprep.mubr.bf16.mxu0 0
  %2286 = vmatmul.mubr.bf16.gmra.mxu0 %v1291
  %v2287 = vpop.f32.mrf.mxu0
  %v2288 = vadd.f32 %v287, %v2287
  %v2289 = vpop.f32.mrf.mxu0
  %v2290 = vpop.f32.mrf.mxu0
  %v2291 = vadd.f32 %v287, %v2290
  %v2292 = vpop.f32.mrf.mxu0
  %2293 = vmatprep.mubr.bf16.mxu0 0
  %2294 = vmatmul.mubr.bf16.gmra.mxu0 %v1294
  %v2295 = vpop.f32.mrf.mxu0
  %v2296 = vadd.f32 %v287, %v2295
  %v2297 = vpop.f32.mrf.mxu0
  %v2298 = vpop.f32.mrf.mxu0
  %v2299 = vadd.f32 %v287, %v2298
  %v2300 = vpop.f32.mrf.mxu0
  %2301 = vmatprep.mubr.bf16.mxu0 0
  %2302 = vmatmul.mubr.bf16.gmra.mxu0 %v1297
  %v2303 = vpop.f32.mrf.mxu0
  %v2304 = vadd.f32 %v287, %v2303
  %v2305 = vpop.f32.mrf.mxu0
  %v2306 = vpop.f32.mrf.mxu0
  %v2307 = vadd.f32 %v287, %v2306
  %v2308 = vpop.f32.mrf.mxu0
  %2309 = vmatprep.mubr.bf16.mxu0 0
  %2310 = vmatmul.mubr.bf16.gmra.mxu0 %v1300
  %v2311 = vpop.f32.mrf.mxu0
  %v2312 = vadd.f32 %v287, %v2311
  %v2313 = vpop.f32.mrf.mxu0
  %v2314 = vpop.f32.mrf.mxu0
  %v2315 = vadd.f32 %v287, %v2314
  %v2316 = vpop.f32.mrf.mxu0
  %2317 = vmatprep.mubr.bf16.mxu0 0
  %2318 = vmatmul.mubr.bf16.gmra.mxu0 %v1303
  %v2319 = vpop.f32.mrf.mxu0
  %v2320 = vadd.f32 %v287, %v2319
  %v2321 = vpop.f32.mrf.mxu0
  %v2322 = vpop.f32.mrf.mxu0
  %v2323 = vadd.f32 %v287, %v2322
  %v2324 = vpop.f32.mrf.mxu0
  %2325 = vmatprep.mubr.bf16.mxu0 0
  %2326 = vmatmul.mubr.bf16.gmra.mxu0 %v1306
  %v2327 = vpop.f32.mrf.mxu0
  %v2328 = vadd.f32 %v287, %v2327
  %v2329 = vpop.f32.mrf.mxu0
  %v2330 = vpop.f32.mrf.mxu0
  %v2331 = vadd.f32 %v287, %v2330
  %v2332 = vpop.f32.mrf.mxu0
  %2333 = vmatprep.mubr.bf16.mxu0 0
  %2334 = vmatmul.mubr.bf16.gmra.mxu0 %v1309
  %v2335 = vpop.f32.mrf.mxu0
  %v2336 = vadd.f32 %v287, %v2335
  %v2337 = vpop.f32.mrf.mxu0
  %v2338 = vpop.f32.mrf.mxu0
  %v2339 = vadd.f32 %v287, %v2338
  %v2340 = vpop.f32.mrf.mxu0
  %2341 = vmatprep.mubr.bf16.mxu0 0
  %2342 = vmatmul.mubr.bf16.gmra.mxu0 %v1312
  %v2343 = vpop.f32.mrf.mxu0
  %v2344 = vadd.f32 %v287, %v2343
  %v2345 = vpop.f32.mrf.mxu0
  %v2346 = vpop.f32.mrf.mxu0
  %v2347 = vadd.f32 %v287, %v2346
  %v2348 = vpop.f32.mrf.mxu0
  %2349 = vmatprep.mubr.bf16.mxu0 0
  %2350 = vmatmul.mubr.bf16.gmra.mxu0 %v1315
  %v2351 = vpop.f32.mrf.mxu0
  %v2352 = vadd.f32 %v287, %v2351
  %v2353 = vpop.f32.mrf.mxu0
  %v2354 = vpop.f32.mrf.mxu0
  %v2355 = vadd.f32 %v287, %v2354
  %v2356 = vpop.f32.mrf.mxu0
  %2357 = vmatprep.mubr.bf16.mxu0 0
  %2358 = vmatmul.mubr.bf16.gmra.mxu0 %v1318
  %v2359 = vpop.f32.mrf.mxu0
  %v2360 = vadd.f32 %v287, %v2359
  %v2361 = vpop.f32.mrf.mxu0
  %v2362 = vpop.f32.mrf.mxu0
  %v2363 = vadd.f32 %v287, %v2362
  %v2364 = vpop.f32.mrf.mxu0
  %2365 = vmatprep.mubr.bf16.mxu0 0
  %2366 = vmatmul.mubr.bf16.gmra.mxu0 %v1321
  %v2367 = vpop.f32.mrf.mxu0
  %v2368 = vadd.f32 %v287, %v2367
  %v2369 = vpop.f32.mrf.mxu0
  %v2370 = vpop.f32.mrf.mxu0
  %v2371 = vadd.f32 %v287, %v2370
  %v2372 = vpop.f32.mrf.mxu0
  %2373 = vmatprep.mubr.bf16.mxu0 0
  %2374 = vmatmul.mubr.bf16.gmra.mxu0 %v1324
  %v2375 = vpop.f32.mrf.mxu0
  %v2376 = vadd.f32 %v287, %v2375
  %v2377 = vpop.f32.mrf.mxu0
  %v2378 = vpop.f32.mrf.mxu0
  %v2379 = vadd.f32 %v287, %v2378
  %v2380 = vpop.f32.mrf.mxu0
  %2381 = vmatprep.mubr.bf16.mxu0 0
  %2382 = vmatmul.mubr.bf16.gmra.mxu0 %v1327
  %v2383 = vpop.f32.mrf.mxu0
  %v2384 = vadd.f32 %v287, %v2383
  %v2385 = vpop.f32.mrf.mxu0
  %v2386 = vpop.f32.mrf.mxu0
  %v2387 = vadd.f32 %v287, %v2386
  %v2388 = vpop.f32.mrf.mxu0
  %2389 = vdwg.mxu0
  %v2390 = vmax.f32 %v1368, 0.0
  %v2391 = vmax.f32 %v1371, 0.0
  %v2392 = vmax.f32 %v1376, 0.0
  %v2393 = vmax.f32 %v1379, 0.0
  %v2394 = vmax.f32 %v1384, 0.0
  %v2395 = vmax.f32 %v1387, 0.0
  %v2396 = vmax.f32 %v1392, 0.0
  %v2397 = vmax.f32 %v1395, 0.0
  %v2398 = vmax.f32 %v1400, 0.0
  %v2399 = vmax.f32 %v1403, 0.0
  %v2400 = vmax.f32 %v1408, 0.0
  %v2401 = vmax.f32 %v1411, 0.0
  %v2402 = vmax.f32 %v1416, 0.0
  %v2403 = vmax.f32 %v1419, 0.0
  %v2404 = vmax.f32 %v1424, 0.0
  %v2405 = vmax.f32 %v1427, 0.0
  %v2406 = vmax.f32 %v1432, 0.0
  %v2407 = vmax.f32 %v1435, 0.0
  %v2408 = vmax.f32 %v1440, 0.0
  %v2409 = vmax.f32 %v1443, 0.0
  %v2410 = vmax.f32 %v1448, 0.0
  %v2411 = vmax.f32 %v1451, 0.0
  %v2412 = vmax.f32 %v1456, 0.0
  %v2413 = vmax.f32 %v1459, 0.0
  %v2414 = vmax.f32 %v1464, 0.0
  %v2415 = vmax.f32 %v1467, 0.0
  %v2416 = vmax.f32 %v1472, 0.0
  %v2417 = vmax.f32 %v1475, 0.0
  %v2418 = vmax.f32 %v1480, 0.0
  %v2419 = vmax.f32 %v1483, 0.0
  %v2420 = vmax.f32 %v1488, 0.0
  %v2421 = vmax.f32 %v1491, 0.0
  %v2422 = vmax.f32 %v1496, 0.0
  %v2423 = vmax.f32 %v1499, 0.0
  %v2424 = vmax.f32 %v1504, 0.0
  %v2425 = vmax.f32 %v1507, 0.0
  %v2426 = vmax.f32 %v1512, 0.0
  %v2427 = vmax.f32 %v1515, 0.0
  %v2428 = vmax.f32 %v1520, 0.0
  %v2429 = vmax.f32 %v1523, 0.0
  %v2430 = vmax.f32 %v1528, 0.0
  %v2431 = vmax.f32 %v1531, 0.0
  %v2432 = vmax.f32 %v1536, 0.0
  %v2433 = vmax.f32 %v1539, 0.0
  %v2434 = vmax.f32 %v1544, 0.0
  %v2435 = vmax.f32 %v1547, 0.0
  %v2436 = vmax.f32 %v1552, 0.0
  %v2437 = vmax.f32 %v1555, 0.0
  %v2438 = vmax.f32 %v1560, 0.0
  %v2439 = vmax.f32 %v1563, 0.0
  %v2440 = vmax.f32 %v1568, 0.0
  %v2441 = vmax.f32 %v1571, 0.0
  %v2442 = vmax.f32 %v1576, 0.0
  %v2443 = vmax.f32 %v1579, 0.0
  %v2444 = vmax.f32 %v1584, 0.0
  %v2445 = vmax.f32 %v1587, 0.0
  %v2446 = vmax.f32 %v1592, 0.0
  %v2447 = vmax.f32 %v1595, 0.0
  %v2448 = vmax.f32 %v1600, 0.0
  %v2449 = vmax.f32 %v1603, 0.0
  %v2450 = vmax.f32 %v1608, 0.0
  %v2451 = vmax.f32 %v1611, 0.0
  %v2452 = vmax.f32 %v1616, 0.0
  %v2453 = vmax.f32 %v1619, 0.0
  %v2454 = vmax.f32 %v1624, 0.0
  %v2455 = vmax.f32 %v1627, 0.0
  %v2456 = vmax.f32 %v1632, 0.0
  %v2457 = vmax.f32 %v1635, 0.0
  %v2458 = vmax.f32 %v1640, 0.0
  %v2459 = vmax.f32 %v1643, 0.0
  %v2460 = vmax.f32 %v1648, 0.0
  %v2461 = vmax.f32 %v1651, 0.0
  %v2462 = vmax.f32 %v1656, 0.0
  %v2463 = vmax.f32 %v1659, 0.0
  %v2464 = vmax.f32 %v1664, 0.0
  %v2465 = vmax.f32 %v1667, 0.0
  %v2466 = vmax.f32 %v1672, 0.0
  %v2467 = vmax.f32 %v1675, 0.0
  %v2468 = vmax.f32 %v1680, 0.0
  %v2469 = vmax.f32 %v1683, 0.0
  %v2470 = vmax.f32 %v1688, 0.0
  %v2471 = vmax.f32 %v1691, 0.0
  %v2472 = vmax.f32 %v1696, 0.0
  %v2473 = vmax.f32 %v1699, 0.0
  %v2474 = vmax.f32 %v1704, 0.0
  %v2475 = vmax.f32 %v1707, 0.0
  %v2476 = vmax.f32 %v1712, 0.0
  %v2477 = vmax.f32 %v1715, 0.0
  %v2478 = vmax.f32 %v1720, 0.0
  %v2479 = vmax.f32 %v1723, 0.0
  %v2480 = vmax.f32 %v1728, 0.0
  %v2481 = vmax.f32 %v1731, 0.0
  %v2482 = vmax.f32 %v1736, 0.0
  %v2483 = vmax.f32 %v1739, 0.0
  %v2484 = vmax.f32 %v1744, 0.0
  %v2485 = vmax.f32 %v1747, 0.0
  %v2486 = vmax.f32 %v1752, 0.0
  %v2487 = vmax.f32 %v1755, 0.0
  %v2488 = vmax.f32 %v1760, 0.0
  %v2489 = vmax.f32 %v1763, 0.0
  %v2490 = vmax.f32 %v1768, 0.0
  %v2491 = vmax.f32 %v1771, 0.0
  %v2492 = vmax.f32 %v1776, 0.0
  %v2493 = vmax.f32 %v1779, 0.0
  %v2494 = vmax.f32 %v1784, 0.0
  %v2495 = vmax.f32 %v1787, 0.0
  %v2496 = vmax.f32 %v1792, 0.0
  %v2497 = vmax.f32 %v1795, 0.0
  %v2498 = vmax.f32 %v1800, 0.0
  %v2499 = vmax.f32 %v1803, 0.0
  %v2500 = vmax.f32 %v1808, 0.0
  %v2501 = vmax.f32 %v1811, 0.0
  %v2502 = vmax.f32 %v1816, 0.0
  %v2503 = vmax.f32 %v1819, 0.0
  %v2504 = vmax.f32 %v1824, 0.0
  %v2505 = vmax.f32 %v1827, 0.0
  %v2506 = vmax.f32 %v1832, 0.0
  %v2507 = vmax.f32 %v1835, 0.0
  %v2508 = vmax.f32 %v1840, 0.0
  %v2509 = vmax.f32 %v1843, 0.0
  %v2510 = vmax.f32 %v1848, 0.0
  %v2511 = vmax.f32 %v1851, 0.0
  %v2512 = vmax.f32 %v1856, 0.0
  %v2513 = vmax.f32 %v1859, 0.0
  %v2514 = vmax.f32 %v1864, 0.0
  %v2515 = vmax.f32 %v1867, 0.0
  %v2516 = vmax.f32 %v1872, 0.0
  %v2517 = vmax.f32 %v1875, 0.0
  %v2518 = vmax.f32 %v1880, 0.0
  %v2519 = vmax.f32 %v1883, 0.0
  %v2520 = vmax.f32 %v1888, 0.0
  %v2521 = vmax.f32 %v1891, 0.0
  %v2522 = vmax.f32 %v1896, 0.0
  %v2523 = vmax.f32 %v1899, 0.0
  %v2524 = vmax.f32 %v1904, 0.0
  %v2525 = vmax.f32 %v1907, 0.0
  %v2526 = vmax.f32 %v1912, 0.0
  %v2527 = vmax.f32 %v1915, 0.0
  %v2528 = vmax.f32 %v1920, 0.0
  %v2529 = vmax.f32 %v1923, 0.0
  %v2530 = vmax.f32 %v1928, 0.0
  %v2531 = vmax.f32 %v1931, 0.0
  %v2532 = vmax.f32 %v1936, 0.0
  %v2533 = vmax.f32 %v1939, 0.0
  %v2534 = vmax.f32 %v1944, 0.0
  %v2535 = vmax.f32 %v1947, 0.0
  %v2536 = vmax.f32 %v1952, 0.0
  %v2537 = vmax.f32 %v1955, 0.0
  %v2538 = vmax.f32 %v1960, 0.0
  %v2539 = vmax.f32 %v1963, 0.0
  %v2540 = vmax.f32 %v1968, 0.0
  %v2541 = vmax.f32 %v1971, 0.0
  %v2542 = vmax.f32 %v1976, 0.0
  %v2543 = vmax.f32 %v1979, 0.0
  %v2544 = vmax.f32 %v1984, 0.0
  %v2545 = vmax.f32 %v1987, 0.0
  %v2546 = vmax.f32 %v1992, 0.0
  %v2547 = vmax.f32 %v1995, 0.0
  %v2548 = vmax.f32 %v2000, 0.0
  %v2549 = vmax.f32 %v2003, 0.0
  %v2550 = vmax.f32 %v2008, 0.0
  %v2551 = vmax.f32 %v2011, 0.0
  %v2552 = vmax.f32 %v2016, 0.0
  %v2553 = vmax.f32 %v2019, 0.0
  %v2554 = vmax.f32 %v2024, 0.0
  %v2555 = vmax.f32 %v2027, 0.0
  %v2556 = vmax.f32 %v2032, 0.0
  %v2557 = vmax.f32 %v2035, 0.0
  %v2558 = vmax.f32 %v2040, 0.0
  %v2559 = vmax.f32 %v2043, 0.0
  %v2560 = vmax.f32 %v2048, 0.0
  %v2561 = vmax.f32 %v2051, 0.0
  %v2562 = vmax.f32 %v2056, 0.0
  %v2563 = vmax.f32 %v2059, 0.0
  %v2564 = vmax.f32 %v2064, 0.0
  %v2565 = vmax.f32 %v2067, 0.0
  %v2566 = vmax.f32 %v2072, 0.0
  %v2567 = vmax.f32 %v2075, 0.0
  %v2568 = vmax.f32 %v2080, 0.0
  %v2569 = vmax.f32 %v2083, 0.0
  %v2570 = vmax.f32 %v2088, 0.0
  %v2571 = vmax.f32 %v2091, 0.0
  %v2572 = vmax.f32 %v2096, 0.0
  %v2573 = vmax.f32 %v2099, 0.0
  %v2574 = vmax.f32 %v2104, 0.0
  %v2575 = vmax.f32 %v2107, 0.0
  %v2576 = vmax.f32 %v2112, 0.0
  %v2577 = vmax.f32 %v2115, 0.0
  %v2578 = vmax.f32 %v2120, 0.0
  %v2579 = vmax.f32 %v2123, 0.0
  %v2580 = vmax.f32 %v2128, 0.0
  %v2581 = vmax.f32 %v2131, 0.0
  %v2582 = vmax.f32 %v2136, 0.0
  %v2583 = vmax.f32 %v2139, 0.0
  %v2584 = vmax.f32 %v2144, 0.0
  %v2585 = vmax.f32 %v2147, 0.0
  %v2586 = vmax.f32 %v2152, 0.0
  %v2587 = vmax.f32 %v2155, 0.0
  %v2588 = vmax.f32 %v2160, 0.0
  %v2589 = vmax.f32 %v2163, 0.0
  %v2590 = vmax.f32 %v2168, 0.0
  %v2591 = vmax.f32 %v2171, 0.0
  %v2592 = vmax.f32 %v2176, 0.0
  %v2593 = vmax.f32 %v2179, 0.0
  %v2594 = vmax.f32 %v2184, 0.0
  %v2595 = vmax.f32 %v2187, 0.0
  %v2596 = vmax.f32 %v2192, 0.0
  %v2597 = vmax.f32 %v2195, 0.0
  %v2598 = vmax.f32 %v2200, 0.0
  %v2599 = vmax.f32 %v2203, 0.0
  %v2600 = vmax.f32 %v2208, 0.0
  %v2601 = vmax.f32 %v2211, 0.0
  %v2602 = vmax.f32 %v2216, 0.0
  %v2603 = vmax.f32 %v2219, 0.0
  %v2604 = vmax.f32 %v2224, 0.0
  %v2605 = vmax.f32 %v2227, 0.0
  %v2606 = vmax.f32 %v2232, 0.0
  %v2607 = vmax.f32 %v2235, 0.0
  %v2608 = vmax.f32 %v2240, 0.0
  %v2609 = vmax.f32 %v2243, 0.0
  %v2610 = vmax.f32 %v2248, 0.0
  %v2611 = vmax.f32 %v2251, 0.0
  %v2612 = vmax.f32 %v2256, 0.0
  %v2613 = vmax.f32 %v2259, 0.0
  %v2614 = vmax.f32 %v2264, 0.0
  %v2615 = vmax.f32 %v2267, 0.0
  %v2616 = vmax.f32 %v2272, 0.0
  %v2617 = vmax.f32 %v2275, 0.0
  %v2618 = vmax.f32 %v2280, 0.0
  %v2619 = vmax.f32 %v2283, 0.0
  %v2620 = vmax.f32 %v2288, 0.0
  %v2621 = vmax.f32 %v2291, 0.0
  %v2622 = vmax.f32 %v2296, 0.0
  %v2623 = vmax.f32 %v2299, 0.0
  %v2624 = vmax.f32 %v2304, 0.0
  %v2625 = vmax.f32 %v2307, 0.0
  %v2626 = vmax.f32 %v2312, 0.0
  %v2627 = vmax.f32 %v2315, 0.0
  %v2628 = vmax.f32 %v2320, 0.0
  %v2629 = vmax.f32 %v2323, 0.0
  %v2630 = vmax.f32 %v2328, 0.0
  %v2631 = vmax.f32 %v2331, 0.0
  %v2632 = vmax.f32 %v2336, 0.0
  %v2633 = vmax.f32 %v2339, 0.0
  %v2634 = vmax.f32 %v2344, 0.0
  %v2635 = vmax.f32 %v2347, 0.0
  %v2636 = vmax.f32 %v2352, 0.0
  %v2637 = vmax.f32 %v2355, 0.0
  %v2638 = vmax.f32 %v2360, 0.0
  %v2639 = vmax.f32 %v2363, 0.0
  %v2640 = vmax.f32 %v2368, 0.0
  %v2641 = vmax.f32 %v2371, 0.0
  %v2642 = vmax.f32 %v2376, 0.0
  %v2643 = vmax.f32 %v2379, 0.0
  %v2644 = vmax.f32 %v2384, 0.0
  %v2645 = vmax.f32 %v2387, 0.0
  %v2646 = vadd.f32 %v2390, %v2391
  %v2647 = vadd.f32 %v2646, %v2392
  %v2648 = vadd.f32 %v2647, %v2393
  %v2649 = vadd.f32 %v2648, %v2394
  %v2650 = vadd.f32 %v2649, %v2395
  %v2651 = vadd.f32 %v2650, %v2396
  %v2652 = vadd.f32 %v2651, %v2397
  %v2653 = vadd.f32 %v2652, %v2398
  %v2654 = vadd.f32 %v2653, %v2399
  %v2655 = vadd.f32 %v2654, %v2400
  %v2656 = vadd.f32 %v2655, %v2401
  %v2657 = vadd.f32 %v2656, %v2402
  %v2658 = vadd.f32 %v2657, %v2403
  %v2659 = vadd.f32 %v2658, %v2404
  %v2660 = vadd.f32 %v2659, %v2405
  %v2661 = vadd.f32 %v2660, %v2406
  %v2662 = vadd.f32 %v2661, %v2407
  %v2663 = vadd.f32 %v2662, %v2408
  %v2664 = vadd.f32 %v2663, %v2409
  %v2665 = vadd.f32 %v2664, %v2410
  %v2666 = vadd.f32 %v2665, %v2411
  %v2667 = vadd.f32 %v2666, %v2412
  %v2668 = vadd.f32 %v2667, %v2413
  %v2669 = vadd.f32 %v2668, %v2414
  %v2670 = vadd.f32 %v2669, %v2415
  %v2671 = vadd.f32 %v2670, %v2416
  %v2672 = vadd.f32 %v2671, %v2417
  %v2673 = vadd.f32 %v2672, %v2418
  %v2674 = vadd.f32 %v2673, %v2419
  %v2675 = vadd.f32 %v2674, %v2420
  %v2676 = vadd.f32 %v2675, %v2421
  %v2677 = vrot.slane %v2676, 4
  %v2678 = vadd.f32 %v2676, %v2677
  %v2679 = vrot.slane %v2678, 2
  %v2680 = vadd.f32 %v2678, %v2679
  %v2681 = vrot.slane %v2680, 1
  %v2682 = vadd.f32 %v2680, %v2681
  %v2683 = vadd.f32 %v2422, %v2423
  %v2684 = vadd.f32 %v2683, %v2424
  %v2685 = vadd.f32 %v2684, %v2425
  %v2686 = vadd.f32 %v2685, %v2426
  %v2687 = vadd.f32 %v2686, %v2427
  %v2688 = vadd.f32 %v2687, %v2428
  %v2689 = vadd.f32 %v2688, %v2429
  %v2690 = vadd.f32 %v2689, %v2430
  %v2691 = vadd.f32 %v2690, %v2431
  %v2692 = vadd.f32 %v2691, %v2432
  %v2693 = vadd.f32 %v2692, %v2433
  %v2694 = vadd.f32 %v2693, %v2434
  %v2695 = vadd.f32 %v2694, %v2435
  %v2696 = vadd.f32 %v2695, %v2436
  %v2697 = vadd.f32 %v2696, %v2437
  %v2698 = vadd.f32 %v2697, %v2438
  %v2699 = vadd.f32 %v2698, %v2439
  %v2700 = vadd.f32 %v2699, %v2440
  %v2701 = vadd.f32 %v2700, %v2441
  %v2702 = vadd.f32 %v2701, %v2442
  %v2703 = vadd.f32 %v2702, %v2443
  %v2704 = vadd.f32 %v2703, %v2444
  %v2705 = vadd.f32 %v2704, %v2445
  %v2706 = vadd.f32 %v2705, %v2446
  %v2707 = vadd.f32 %v2706, %v2447
  %v2708 = vadd.f32 %v2707, %v2448
  %v2709 = vadd.f32 %v2708, %v2449
  %v2710 = vadd.f32 %v2709, %v2450
  %v2711 = vadd.f32 %v2710, %v2451
  %v2712 = vadd.f32 %v2711, %v2452
  %v2713 = vadd.f32 %v2712, %v2453
  %v2714 = vrot.slane %v2713, 4
  %v2715 = vadd.f32 %v2713, %v2714
  %v2716 = vrot.slane %v2715, 2
  %v2717 = vadd.f32 %v2715, %v2716
  %v2718 = vrot.slane %v2717, 1
  %v2719 = vadd.f32 %v2717, %v2718
  %v2720 = vadd.f32 %v2454, %v2455
  %v2721 = vadd.f32 %v2720, %v2456
  %v2722 = vadd.f32 %v2721, %v2457
  %v2723 = vadd.f32 %v2722, %v2458
  %v2724 = vadd.f32 %v2723, %v2459
  %v2725 = vadd.f32 %v2724, %v2460
  %v2726 = vadd.f32 %v2725, %v2461
  %v2727 = vadd.f32 %v2726, %v2462
  %v2728 = vadd.f32 %v2727, %v2463
  %v2729 = vadd.f32 %v2728, %v2464
  %v2730 = vadd.f32 %v2729, %v2465
  %v2731 = vadd.f32 %v2730, %v2466
  %v2732 = vadd.f32 %v2731, %v2467
  %v2733 = vadd.f32 %v2732, %v2468
  %v2734 = vadd.f32 %v2733, %v2469
  %v2735 = vadd.f32 %v2734, %v2470
  %v2736 = vadd.f32 %v2735, %v2471
  %v2737 = vadd.f32 %v2736, %v2472
  %v2738 = vadd.f32 %v2737, %v2473
  %v2739 = vadd.f32 %v2738, %v2474
  %v2740 = vadd.f32 %v2739, %v2475
  %v2741 = vadd.f32 %v2740, %v2476
  %v2742 = vadd.f32 %v2741, %v2477
  %v2743 = vadd.f32 %v2742, %v2478
  %v2744 = vadd.f32 %v2743, %v2479
  %v2745 = vadd.f32 %v2744, %v2480
  %v2746 = vadd.f32 %v2745, %v2481
  %v2747 = vadd.f32 %v2746, %v2482
  %v2748 = vadd.f32 %v2747, %v2483
  %v2749 = vadd.f32 %v2748, %v2484
  %v2750 = vadd.f32 %v2749, %v2485
  %v2751 = vrot.slane %v2750, 4
  %v2752 = vadd.f32 %v2750, %v2751
  %v2753 = vrot.slane %v2752, 2
  %v2754 = vadd.f32 %v2752, %v2753
  %v2755 = vrot.slane %v2754, 1
  %v2756 = vadd.f32 %v2754, %v2755
  %v2757 = vadd.f32 %v2486, %v2487
  %v2758 = vadd.f32 %v2757, %v2488
  %v2759 = vadd.f32 %v2758, %v2489
  %v2760 = vadd.f32 %v2759, %v2490
  %v2761 = vadd.f32 %v2760, %v2491
  %v2762 = vadd.f32 %v2761, %v2492
  %v2763 = vadd.f32 %v2762, %v2493
  %v2764 = vadd.f32 %v2763, %v2494
  %v2765 = vadd.f32 %v2764, %v2495
  %v2766 = vadd.f32 %v2765, %v2496
  %v2767 = vadd.f32 %v2766, %v2497
  %v2768 = vadd.f32 %v2767, %v2498
  %v2769 = vadd.f32 %v2768, %v2499
  %v2770 = vadd.f32 %v2769, %v2500
  %v2771 = vadd.f32 %v2770, %v2501
  %v2772 = vadd.f32 %v2771, %v2502
  %v2773 = vadd.f32 %v2772, %v2503
  %v2774 = vadd.f32 %v2773, %v2504
  %v2775 = vadd.f32 %v2774, %v2505
  %v2776 = vadd.f32 %v2775, %v2506
  %v2777 = vadd.f32 %v2776, %v2507
  %v2778 = vadd.f32 %v2777, %v2508
  %v2779 = vadd.f32 %v2778, %v2509
  %v2780 = vadd.f32 %v2779, %v2510
  %v2781 = vadd.f32 %v2780, %v2511
  %v2782 = vadd.f32 %v2781, %v2512
  %v2783 = vadd.f32 %v2782, %v2513
  %v2784 = vadd.f32 %v2783, %v2514
  %v2785 = vadd.f32 %v2784, %v2515
  %v2786 = vadd.f32 %v2785, %v2516
  %v2787 = vadd.f32 %v2786, %v2517
  %v2788 = vrot.slane %v2787, 4
  %v2789 = vadd.f32 %v2787, %v2788
  %v2790 = vrot.slane %v2789, 2
  %v2791 = vadd.f32 %v2789, %v2790
  %v2792 = vrot.slane %v2791, 1
  %v2793 = vadd.f32 %v2791, %v2792
  %v2794 = vadd.f32 %v2518, %v2519
  %v2795 = vadd.f32 %v2794, %v2520
  %v2796 = vadd.f32 %v2795, %v2521
  %v2797 = vadd.f32 %v2796, %v2522
  %v2798 = vadd.f32 %v2797, %v2523
  %v2799 = vadd.f32 %v2798, %v2524
  %v2800 = vadd.f32 %v2799, %v2525
  %v2801 = vadd.f32 %v2800, %v2526
  %v2802 = vadd.f32 %v2801, %v2527
  %v2803 = vadd.f32 %v2802, %v2528
  %v2804 = vadd.f32 %v2803, %v2529
  %v2805 = vadd.f32 %v2804, %v2530
  %v2806 = vadd.f32 %v2805, %v2531
  %v2807 = vadd.f32 %v2806, %v2532
  %v2808 = vadd.f32 %v2807, %v2533
  %v2809 = vadd.f32 %v2808, %v2534
  %v2810 = vadd.f32 %v2809, %v2535
  %v2811 = vadd.f32 %v2810, %v2536
  %v2812 = vadd.f32 %v2811, %v2537
  %v2813 = vadd.f32 %v2812, %v2538
  %v2814 = vadd.f32 %v2813, %v2539
  %v2815 = vadd.f32 %v2814, %v2540
  %v2816 = vadd.f32 %v2815, %v2541
  %v2817 = vadd.f32 %v2816, %v2542
  %v2818 = vadd.f32 %v2817, %v2543
  %v2819 = vadd.f32 %v2818, %v2544
  %v2820 = vadd.f32 %v2819, %v2545
  %v2821 = vadd.f32 %v2820, %v2546
  %v2822 = vadd.f32 %v2821, %v2547
  %v2823 = vadd.f32 %v2822, %v2548
  %v2824 = vadd.f32 %v2823, %v2549
  %v2825 = vrot.slane %v2824, 4
  %v2826 = vadd.f32 %v2824, %v2825
  %v2827 = vrot.slane %v2826, 2
  %v2828 = vadd.f32 %v2826, %v2827
  %v2829 = vrot.slane %v2828, 1
  %v2830 = vadd.f32 %v2828, %v2829
  %v2831 = vadd.f32 %v2550, %v2551
  %v2832 = vadd.f32 %v2831, %v2552
  %v2833 = vadd.f32 %v2832, %v2553
  %v2834 = vadd.f32 %v2833, %v2554
  %v2835 = vadd.f32 %v2834, %v2555
  %v2836 = vadd.f32 %v2835, %v2556
  %v2837 = vadd.f32 %v2836, %v2557
  %v2838 = vadd.f32 %v2837, %v2558
  %v2839 = vadd.f32 %v2838, %v2559
  %v2840 = vadd.f32 %v2839, %v2560
  %v2841 = vadd.f32 %v2840, %v2561
  %v2842 = vadd.f32 %v2841, %v2562
  %v2843 = vadd.f32 %v2842, %v2563
  %v2844 = vadd.f32 %v2843, %v2564
  %v2845 = vadd.f32 %v2844, %v2565
  %v2846 = vadd.f32 %v2845, %v2566
  %v2847 = vadd.f32 %v2846, %v2567
  %v2848 = vadd.f32 %v2847, %v2568
  %v2849 = vadd.f32 %v2848, %v2569
  %v2850 = vadd.f32 %v2849, %v2570
  %v2851 = vadd.f32 %v2850, %v2571
  %v2852 = vadd.f32 %v2851, %v2572
  %v2853 = vadd.f32 %v2852, %v2573
  %v2854 = vadd.f32 %v2853, %v2574
  %v2855 = vadd.f32 %v2854, %v2575
  %v2856 = vadd.f32 %v2855, %v2576
  %v2857 = vadd.f32 %v2856, %v2577
  %v2858 = vadd.f32 %v2857, %v2578
  %v2859 = vadd.f32 %v2858, %v2579
  %v2860 = vadd.f32 %v2859, %v2580
  %v2861 = vadd.f32 %v2860, %v2581
  %v2862 = vrot.slane %v2861, 4
  %v2863 = vadd.f32 %v2861, %v2862
  %v2864 = vrot.slane %v2863, 2
  %v2865 = vadd.f32 %v2863, %v2864
  %v2866 = vrot.slane %v2865, 1
  %v2867 = vadd.f32 %v2865, %v2866
  %v2868 = vadd.f32 %v2582, %v2583
  %v2869 = vadd.f32 %v2868, %v2584
  %v2870 = vadd.f32 %v2869, %v2585
  %v2871 = vadd.f32 %v2870, %v2586
  %v2872 = vadd.f32 %v2871, %v2587
  %v2873 = vadd.f32 %v2872, %v2588
  %v2874 = vadd.f32 %v2873, %v2589
  %v2875 = vadd.f32 %v2874, %v2590
  %v2876 = vadd.f32 %v2875, %v2591
  %v2877 = vadd.f32 %v2876, %v2592
  %v2878 = vadd.f32 %v2877, %v2593
  %v2879 = vadd.f32 %v2878, %v2594
  %v2880 = vadd.f32 %v2879, %v2595
  %v2881 = vadd.f32 %v2880, %v2596
  %v2882 = vadd.f32 %v2881, %v2597
  %v2883 = vadd.f32 %v2882, %v2598
  %v2884 = vadd.f32 %v2883, %v2599
  %v2885 = vadd.f32 %v2884, %v2600
  %v2886 = vadd.f32 %v2885, %v2601
  %v2887 = vadd.f32 %v2886, %v2602
  %v2888 = vadd.f32 %v2887, %v2603
  %v2889 = vadd.f32 %v2888, %v2604
  %v2890 = vadd.f32 %v2889, %v2605
  %v2891 = vadd.f32 %v2890, %v2606
  %v2892 = vadd.f32 %v2891, %v2607
  %v2893 = vadd.f32 %v2892, %v2608
  %v2894 = vadd.f32 %v2893, %v2609
  %v2895 = vadd.f32 %v2894, %v2610
  %v2896 = vadd.f32 %v2895, %v2611
  %v2897 = vadd.f32 %v2896, %v2612
  %v2898 = vadd.f32 %v2897, %v2613
  %v2899 = vrot.slane %v2898, 4
  %v2900 = vadd.f32 %v2898, %v2899
  %v2901 = vrot.slane %v2900, 2
  %v2902 = vadd.f32 %v2900, %v2901
  %v2903 = vrot.slane %v2902, 1
  %v2904 = vadd.f32 %v2902, %v2903
  %v2905 = vadd.f32 %v2614, %v2615
  %v2906 = vadd.f32 %v2905, %v2616
  %v2907 = vadd.f32 %v2906, %v2617
  %v2908 = vadd.f32 %v2907, %v2618
  %v2909 = vadd.f32 %v2908, %v2619
  %v2910 = vadd.f32 %v2909, %v2620
  %v2911 = vadd.f32 %v2910, %v2621
  %v2912 = vadd.f32 %v2911, %v2622
  %v2913 = vadd.f32 %v2912, %v2623
  %v2914 = vadd.f32 %v2913, %v2624
  %v2915 = vadd.f32 %v2914, %v2625
  %v2916 = vadd.f32 %v2915, %v2626
  %v2917 = vadd.f32 %v2916, %v2627
  %v2918 = vadd.f32 %v2917, %v2628
  %v2919 = vadd.f32 %v2918, %v2629
  %v2920 = vadd.f32 %v2919, %v2630
  %v2921 = vadd.f32 %v2920, %v2631
  %v2922 = vadd.f32 %v2921, %v2632
  %v2923 = vadd.f32 %v2922, %v2633
  %v2924 = vadd.f32 %v2923, %v2634
  %v2925 = vadd.f32 %v2924, %v2635
  %v2926 = vadd.f32 %v2925, %v2636
  %v2927 = vadd.f32 %v2926, %v2637
  %v2928 = vadd.f32 %v2927, %v2638
  %v2929 = vadd.f32 %v2928, %v2639
  %v2930 = vadd.f32 %v2929, %v2640
  %v2931 = vadd.f32 %v2930, %v2641
  %v2932 = vadd.f32 %v2931, %v2642
  %v2933 = vadd.f32 %v2932, %v2643
  %v2934 = vadd.f32 %v2933, %v2644
  %v2935 = vadd.f32 %v2934, %v2645
  %v2936 = vrot.slane %v2935, 4
  %v2937 = vadd.f32 %v2935, %v2936
  %v2938 = vrot.slane %v2937, 2
  %v2939 = vadd.f32 %v2937, %v2938
  %v2940 = vrot.slane %v2939, 1
  %v2941 = vadd.f32 %v2939, %v2940
  %v2942 = vrcp.pop 256.0
  %v2943 = vmul.f32 %v2682, %v2942
  %v2944 = vmul.f32 %v2719, %v2942
  %v2945 = vmul.f32 %v2756, %v2942
  %v2946 = vmul.f32 %v2793, %v2942
  %v2947 = vmul.f32 %v2830, %v2942
  %v2948 = vmul.f32 %v2867, %v2942
  %v2949 = vmul.f32 %v2904, %v2942
  %v2950 = vmul.f32 %v2941, %v2942
  %v2951 = vpack.c.bf16 %v2943, %v2943
  %v2952 = vpack.c.bf16 %v2944, %v2944
  %v2953 = vpack.c.bf16 %v2945, %v2945
  %v2954 = vpack.c.bf16 %v2946, %v2946
  %v2955 = vpack.c.bf16 %v2947, %v2947
  %v2956 = vpack.c.bf16 %v2948, %v2948
  %v2957 = vpack.c.bf16 %v2949, %v2949
  %v2958 = vpack.c.bf16 %v2950, %v2950
  %v2959 = vld [vmem:[%s3] sm:$0xf]
  %v2960 = vld [vmem:[%s3 + $0x4] sm:$0xf]
  %v2961 = vld [vmem:[%s3 + $0x8] sm:$0xf]
  %v2962 = vld [vmem:[%s3 + $0xc] sm:$0xf]
  %v2963 = vld [vmem:[%s3 + $0x10] sm:$0xf]
  %v2964 = vld [vmem:[%s3 + $0x14] sm:$0xf]
  %v2965 = vld [vmem:[%s3 + $0x18] sm:$0xf]
  %v2966 = vld [vmem:[%s3 + $0x1c] sm:$0xf]
  %v2967 = vld [vmem:[%s3 + $0x20] sm:$0xf]
  %v2968 = vld [vmem:[%s3 + $0x24] sm:$0xf]
  %v2969 = vld [vmem:[%s3 + $0x28] sm:$0xf]
  %v2970 = vld [vmem:[%s3 + $0x2c] sm:$0xf]
  %v2971 = vld [vmem:[%s3 + $0x30] sm:$0xf]
  %v2972 = vld [vmem:[%s3 + $0x34] sm:$0xf]
  %v2973 = vld [vmem:[%s3 + $0x38] sm:$0xf]
  %v2974 = vld [vmem:[%s3 + $0x3c] sm:$0xf]
  %v2975 = vld [vmem:[%s4] sm:$0x1]
  %v2977 = vlaneseq
  %v2978 = vshrl.u32 %v2977, 7
  %v2979 = vsub.s32 0, %v2978
  %v2980 = vrot.slane %v2975, %v2979
  %v2990 = vunpack.c.l.b16 %v2951
  %v2991 = vunpack.c.l.b16 %v2952
  %v2992 = vunpack.c.l.b16 %v2953
  %v2993 = vunpack.c.l.b16 %v2954
  %v2994 = vunpack.c.l.b16 %v2955
  %v2995 = vunpack.c.l.b16 %v2956
  %v2996 = vunpack.c.l.b16 %v2957
  %v2997 = vunpack.c.l.b16 %v2958
  %vm2998 = vcmask 1041409
  %v2999 = vsel %vm2998, %v2991, %v2990
  %vm3000 = vcmask 1042434
  %v3001 = vsel %vm3000, %v2992, %v2999
  %vm3002 = vcmask 1043459
  %v3003 = vsel %vm3002, %v2993, %v3001
  %vm3004 = vcmask 1044484
  %v3005 = vsel %vm3004, %v2994, %v3003
  %vm3006 = vcmask 1045509
  %v3007 = vsel %vm3006, %v2995, %v3005
  %vm3008 = vcmask 1046534
  %v3009 = vsel %vm3008, %v2996, %v3007
  %vm3010 = vcmask 1047559
  %v3011 = vsel %vm3010, %v2997, %v3009
  %v3012 = vpack.c.b16 %v3011, %v3011
  %v3030 = vunpack.c.l.b16 %v2959
  %v3031 = vunpack.c.l.b16 %v2960
  %v3032 = vunpack.c.l.b16 %v2961
  %v3033 = vunpack.c.l.b16 %v2962
  %v3034 = vunpack.c.l.b16 %v2963
  %v3035 = vunpack.c.l.b16 %v2964
  %v3036 = vunpack.c.l.b16 %v2965
  %v3037 = vunpack.c.l.b16 %v2966
  %v3038 = vunpack.c.l.b16 %v2967
  %v3039 = vunpack.c.l.b16 %v2968
  %v3040 = vunpack.c.l.b16 %v2969
  %v3041 = vunpack.c.l.b16 %v2970
  %v3042 = vunpack.c.l.b16 %v2971
  %v3043 = vunpack.c.l.b16 %v2972
  %v3044 = vunpack.c.l.b16 %v2973
  %v3045 = vunpack.c.l.b16 %v2974
  %v3046 = vpack.c.b16 %v3031, %v3030
  %v3047 = vpack.c.b16 %v3033, %v3032
  %v3048 = vpack.c.b16 %v3035, %v3034
  %v3049 = vpack.c.b16 %v3037, %v3036
  %v3050 = vpack.c.b16 %v3039, %v3038
  %v3051 = vpack.c.b16 %v3041, %v3040
  %v3052 = vpack.c.b16 %v3043, %v3042
  %v3053 = vpack.c.b16 %v3045, %v3044
  %3062 = vmatprep.subr.bf16.mxu0 0
  %3063 = vmatpush1.bf16.msra.mxu0 %v3053
  %3064 = vmatprep.subr.bf16.mxu0 0
  %3065 = vmatpush1.bf16.msra.mxu0 %v3052
  %3066 = vmatprep.subr.bf16.mxu0 0
  %3067 = vmatpush1.bf16.msra.mxu0 %v3051
  %3068 = vmatprep.subr.bf16.mxu0 0
  %3069 = vmatpush1.bf16.msra.mxu0 %v3050
  %3070 = vmatprep.subr.bf16.mxu0 0
  %3071 = vmatpush1.bf16.msra.mxu0 %v3049
  %3072 = vmatprep.subr.bf16.mxu0 0
  %3073 = vmatpush1.bf16.msra.mxu0 %v3048
  %3074 = vmatprep.subr.bf16.mxu0 0
  %3075 = vmatpush1.bf16.msra.mxu0 %v3047
  %3076 = vmatprep.subr.bf16.mxu0 0
  %3077 = vmatpush1.bf16.msra.mxu0 %v3046
  %3078 = vmatprep.subr.bf16.mxu0 0
  %3079 = vmatpush2.bf16.msra.mxu0 0
  %3080 = vmatprep.subr.bf16.mxu0 0
  %3081 = vmatpush2.bf16.msra.mxu0 0
  %3082 = vmatprep.subr.bf16.mxu0 0
  %3083 = vmatpush2.bf16.msra.mxu0 0
  %3084 = vmatprep.subr.bf16.mxu0 0
  %3085 = vmatpush2.bf16.msra.mxu0 0
  %3086 = vmatprep.subr.bf16.mxu0 0
  %3087 = vmatpush2.bf16.msra.mxu0 0
  %3088 = vmatprep.subr.bf16.mxu0 0
  %3089 = vmatpush2.bf16.msra.mxu0 0
  %3090 = vmatprep.subr.bf16.mxu0 0
  %3091 = vmatpush2.bf16.msra.mxu0 0
  %3092 = vmatprep.subr.bf16.mxu0 0
  %3093 = vmatpush2.bf16.msra.mxu0 0
  %3094 = vmatprep.mubr.bf16.mxu0 0
  %3095 = vmatmul.mubr.bf16.gmra.mxu0 %v3012
  %v3096 = vpop.f32.mrf.mxu0
  %v3097 = vadd.f32 %v2980, %v3096
  %v3098 = vpop.f32.mrf.mxu0
  %v3099 = vpop.f32.mrf.mxu0
  %v3100 = vpop.f32.mrf.mxu0
  %3101 = vdwg.mxu0
  %3102 = vst [vmem:[%s5] sm:$0xff] %v3097
  // Predicated region
  $region22: #{tpgm_forward.3} parent=0 // pred_check
    _
  $region23: #{tpgm_forward.3} parent=0 // pred_check_branch
    %3104 = sbr.rel (0) target = $region25
  $region24: #{tpgm_forward.3} parent=0 // pred_region
    _
  $region25: #{tpgm_forward.3} parent=0 // pred_fallthru
    _
  // Predicated region
  $region26: #{tpgm_forward.3} parent=0 // pred_check
    _
  $region27: #{tpgm_forward.3} parent=0 // pred_check_branch
    %3106 = sbr.rel (0) target = $region29
  $region28: #{tpgm_forward.3} parent=0 // pred_region
    _
  $region29: #{tpgm_forward.3} parent=0 // pred_fallthru
    _

</llo_original>
